<compile_context>
chip_gen: v5e
topology: v5e:2x2
jax: 0.10.0
libtpu: 0.0.40
codegen_flags: <defaults>
</compile_context>

<pallas_src>
import functools
import math

import jax
import jax.numpy as jnp
from jax.experimental import pallas as pl
from jax.experimental.pallas import tpu as pltpu


# ----------------------------------------------------------------------------
# Pallas kernels (pure matmul + small epilogues; all heavy VALU work removed)
# ----------------------------------------------------------------------------

def _up_kernel(x_ref, w_ref, b_ref, o_ref):
    # ConvTranspose2d(k=2, s=2) as a single MXU matmul + bias.
    acc = jnp.dot(x_ref[...], w_ref[...], preferred_element_type=jnp.float32)
    y = acc + b_ref[...]
    o_ref[...] = y.reshape(o_ref.shape).astype(o_ref.dtype)


def _conv_bn_relu_kernel(p_ref, w_ref, b_ref, s_ref, t_ref, o_ref):
    # 3x3 conv over pre-activated patches (matmul) + bias, with the FOLLOWING
    # BN+ReLU fused as an epilogue on the narrow (tile, cout) output.
    acc = jnp.dot(p_ref[...], w_ref[...], preferred_element_type=jnp.float32)
    y = jnp.maximum((acc + b_ref[...]) * s_ref[...] + t_ref[...], 0.0)
    o_ref[...] = y.reshape(o_ref.shape).astype(o_ref.dtype)


def _conv_add_conv_kernel(p2_ref, ps_ref, w2_ref, ws_ref, b_ref, o_ref):
    # (second conv of double_conv) + (shortcut conv) + residual add, one pass
    # over both pre-activated patch streams.  b_ref holds the summed biases.
    acc = jnp.dot(p2_ref[...], w2_ref[...], preferred_element_type=jnp.float32)
    acc = acc + jnp.dot(ps_ref[...], ws_ref[...],
                        preferred_element_type=jnp.float32)
    y = acc + b_ref[...]
    o_ref[...] = y.reshape(o_ref.shape).astype(o_ref.dtype)


# ----------------------------------------------------------------------------
# Tiled pallas_call driver
# ----------------------------------------------------------------------------

def _round_up(a, b):
    return -(-a // b) * b


def _vmem_budget():
    """Generation-aware scoped-VMEM budget: ~3/4 of physical VMEM, capped at
    96 MiB (v5e/v6e have 128 MiB per TensorCore, v7x only 64 MiB)."""
    try:
        cap = int(pltpu.get_tpu_info().vmem_capacity_bytes)
    except Exception:
        cap = 64 * 2 ** 20           # safe on every generation
    return max(32 * 2 ** 20, min(cap * 3 // 4, 96 * 2 ** 20))


def _choose_tile(m, row_bytes, align, budget_bytes):
    """Largest row tile fitting the (double-buffered) streaming budget.
    Large M: aim for >=4 grid steps (>=2 per TensorCore on dual-core chips);
    small M: one big tile (don't split for a second core that may not exist
    and don't shrink tiles below ~512 rows just to make steps)."""
    cap = max(align, budget_bytes // row_bytes // align * align)
    steps = 4 if m >= 2048 else (2 if m >= 1024 else 1)
    tile = max(align, min(cap, _round_up(-(-m // steps), align)))
    return tile, _round_up(m, tile)


def _run_tiled(kernel, streams, residents, nout, out_dtype, *, tuned=True):
    """Row-tiled matmul-style pallas_call.  `streams` are (M, K_i) matrices
    tiled over rows (bf16); `residents` (weights / bias / BN rows) stay whole
    in VMEM (single-buffered when `tuned`).  The (M, nout) output is stored
    lane-dense as (M//fold, fold*nout) so narrow-cout stores stay unmasked."""
    m = int(streams[0].shape[0])
    fold = 128 // math.gcd(nout, 128) if tuned else 1
    align = 8 * fold
    out_isz = jnp.dtype(out_dtype).itemsize

    # VMEM accounting: double-buffered streams + residents + slack <= budget.
    budget = _vmem_budget()
    resident_bytes = sum(int(r.size) * r.dtype.itemsize for r in residents)
    row_bytes = (sum(2 * int(s.shape[1]) * s.dtype.itemsize for s in streams)
                 + 2 * nout * out_isz)
    stream_budget = max(2 * 2 ** 20, budget - 2 * resident_bytes - 2 * 2 ** 20)
    tile, m_pad = _choose_tile(m, row_bytes, align, stream_budget)
    if m_pad != m:
        streams = [jnp.pad(s, ((0, m_pad - m), (0, 0))) for s in streams]

    # Residents have a constant index_map; single-buffer them (saves VMEM,
    # matters most on v7x's 64 MiB).
    res_kwargs = dict(pipeline_mode=pl.Buffered(1)) if tuned else {}
    in_specs = [pl.BlockSpec((tile, int(s.shape[1])), lambda i: (i, 0))
                for s in streams]
    in_specs += [pl.BlockSpec(r.shape, lambda i: (0, 0), **res_kwargs)
                 for r in residents]
    out_specs = pl.BlockSpec((tile // fold, fold * nout), lambda i: (i, 0))

    k_total = sum(int(s.shape[1]) for s in streams)
    cost = pl.CostEstimate(
        flops=2 * m_pad * k_total * nout,
        bytes_accessed=(sum(m_pad * int(s.shape[1]) * s.dtype.itemsize
                            for s in streams)
                        + m_pad * nout * out_isz + resident_bytes),
        transcendentals=0)

    out = pl.pallas_call(
        kernel,
        out_shape=jax.ShapeDtypeStruct((m_pad // fold, fold * nout), out_dtype),
        grid_spec=pltpu.PrefetchScalarGridSpec(
            num_scalar_prefetch=0,
            grid=(m_pad // tile,),
            in_specs=in_specs,
            out_specs=out_specs),
        compiler_params=pltpu.CompilerParams(
            dimension_semantics=("parallel",),
            vmem_limit_bytes=budget),
        cost_estimate=cost,
    )(*streams, *residents)
    return out.reshape(m_pad, nout)[:m]


# ----------------------------------------------------------------------------
# Glue helpers (layout only; FLOP-heavy work is inside the kernels, elementwise
# BN+ReLU is fused by XLA into the patch-gather that consumes it)
# ----------------------------------------------------------------------------

def _bn_scale_shift(gamma, beta, mean, var, eps=1e-5):
    scale = gamma * jax.lax.rsqrt(var + eps)
    return scale, beta - mean * scale


def _act(x_nhwc, scale, shift):
    # relu(bn(x)) applied ONCE per activation element (f32), BEFORE padding.
    return jnp.maximum(x_nhwc * scale + shift, 0.0)


def _im2col3x3(x_nhwc, dtype):
    # Zero-pad H/W by 1 and extract 3x3 patches -> (N*H*W, 9*C), tap order
    # (dh, dw, c).  The preceding elementwise/pad/concat chain fuses into this
    # gather, so the activation is read once here.
    xp = jnp.pad(x_nhwc, ((0, 0), (1, 1), (1, 1), (0, 0)))
    n, hp, wp, c = xp.shape
    h, w = hp - 2, wp - 2
    taps = [xp[:, dh:dh + h, dw:dw + w, :]
            for dh in range(3) for dw in range(3)]
    return jnp.stack(taps, axis=3).reshape(n * h * w, 9 * c).astype(dtype)


# ----------------------------------------------------------------------------
# de_conv forward
# ----------------------------------------------------------------------------

def de_conv_forward(x1, x2, p, *, tuned=True):
    """Forward of `de_conv` (NCHW in / NCHW out), inference-mode BatchNorm.
    Streams / conv weights in bf16, accumulation and BN/bias math in f32."""
    sdt = jnp.bfloat16
    n, cin, h1, w1 = x1.shape
    _, c2, h2, w2 = x2.shape
    cup = p["up_w"].shape[1]                  # ConvTranspose output channels
    cout = p["conv1_w"].shape[0]
    cr = c2 + cup                             # == up_in_channels

    # ---- ConvTranspose2d(k=2, s=2) as one matmul --------------------------
    x_mat = jnp.transpose(x1, (0, 2, 3, 1)).reshape(n * h1 * w1, cin).astype(sdt)
    w_up = jnp.transpose(p["up_w"], (0, 2, 3, 1)).reshape(cin, 4 * cup).astype(sdt)
    b_up = jnp.tile(p["up_b"], 4).reshape(1, 4 * cup)
    y = _run_tiled(_up_kernel, [x_mat], [w_up, b_up], 4 * cup,
                   jnp.float32, tuned=tuned)
    # Pixel-shuffle + pad + concat: small relayouts over cup/cr channels; XLA
    # fuses the elementwise/pad parts into the patch gathers below.
    y = (y.reshape(n, h1, w1, 2, 2, cup)
          .transpose(0, 1, 3, 2, 4, 5)
          .reshape(n, 2 * h1, 2 * w1, cup))
    dy, dx = h2 - 2 * h1, w2 - 2 * w1
    y = jnp.pad(y, ((0, 0), (dy // 2, dy - dy // 2),
                    (dx // 2, dx - dx // 2), (0, 0)))
    cat = jnp.concatenate([jnp.transpose(x2, (0, 2, 3, 1)), y], axis=-1)

    # ---- BN params folded to per-channel affine (inference mode) ----------
    s1, t1 = _bn_scale_shift(*p["bn1"])
    s2, t2 = _bn_scale_shift(*p["bn2"])
    ss, ts = _bn_scale_shift(*p["bns"])

    # ---- pre-activate ONCE per element, then zero-pad + im2col (bf16) -----
    p1 = _im2col3x3(_act(cat, s1, t1), sdt)          # (M, 9*cr) main path
    ps = _im2col3x3(_act(cat, ss, ts), sdt)          # (M, 9*cr) shortcut path

    # ---- conv1 (+bias) with bn2+relu fused as epilogue -> a2 (bf16) --------
    w1m = jnp.transpose(p["conv1_w"], (2, 3, 1, 0)).reshape(9 * cr, cout).astype(sdt)
    a2 = _run_tiled(
        _conv_bn_relu_kernel, [p1],
        [w1m, p["conv1_b"].reshape(1, cout),
         s2.reshape(1, cout), t2.reshape(1, cout)],
        cout, sdt, tuned=tuned)
    a2 = a2.reshape(n, h2, w2, cout)                 # already bn2+relu'd

    # ---- conv2 + shortcut conv + residual add (single fused kernel) -------
    p2 = _im2col3x3(a2, sdt)                         # (M, 9*cout)
    w2m = jnp.transpose(p["conv2_w"], (2, 3, 1, 0)).reshape(9 * cout, cout).astype(sdt)
    wsm = jnp.transpose(p["convs_w"], (2, 3, 1, 0)).reshape(9 * cr, cout).astype(sdt)
    bsum = (p["conv2_b"] + p["convs_b"]).reshape(1, cout)
    out = _run_tiled(_conv_add_conv_kernel, [p2, ps], [w2m, wsm, bsum],
                     cout, jnp.float32, tuned=tuned)

    return out.reshape(n, h2, w2, cout).transpose(0, 3, 1, 2)    # NCHW


# ----------------------------------------------------------------------------
# Pure-JAX reference (f32 HIGHEST precision, for the correctness check)
# ----------------------------------------------------------------------------

def _ref_forward(x1, x2, p, eps=1e-5):
    hi = jax.lax.Precision.HIGHEST

    def bn(x, g, b, m, v):
        s = (g * jax.lax.rsqrt(v + eps))
        return x * s[None, :, None, None] + (b - m * s)[None, :, None, None]

    def conv3(x, w, b):
        y = jax.lax.conv_general_dilated(
            x, w, (1, 1), ((1, 1), (1, 1)),
            dimension_numbers=("NCHW", "OIHW", "NCHW"), precision=hi)
        return y + b[None, :, None, None]

    n, _, h1, w1 = x1.shape
    _, _, h2, w2 = x2.shape
    cup = p["up_w"].shape[1]
    t = jnp.einsum("nchw,cokl->nohkwl", x1, p["up_w"], precision=hi)
    up = t.reshape(n, cup, 2 * h1, 2 * w1) + p["up_b"][None, :, None, None]
    dy, dx = h2 - 2 * h1, w2 - 2 * w1
    up = jnp.pad(up, ((0, 0), (0, 0), (dy // 2, dy - dy // 2),
                      (dx // 2, dx - dx // 2)))
    cat = jnp.concatenate([x2, up], axis=1)

    a1 = jax.nn.relu(bn(cat, *p["bn1"]))
    y1 = conv3(a1, p["conv1_w"], p["conv1_b"])
    a2 = jax.nn.relu(bn(y1, *p["bn2"]))
    main = conv3(a2, p["conv2_w"], p["conv2_b"])
    sc = conv3(jax.nn.relu(bn(cat, *p["bns"])), p["convs_w"], p["convs_b"])
    return main + sc


# ----------------------------------------------------------------------------
# Demo / self-test
# ----------------------------------------------------------------------------

if __name__ == "__main__":
    keys = iter(jax.random.split(jax.random.PRNGKey(0), 22))

    n = 2
    in_ch = 8          # channels of x1 (ConvTranspose input)
    out_ch = 8         # out_channels
    c2 = 8             # channels of skip connection x2
    up_in = c2 + out_ch
    h1 = w1 = 8
    h2 = w2 = 16

    def uni(k, shape, fan_in):
        b = 1.0 / math.sqrt(fan_in)
        return jax.random.uniform(k, shape, jnp.float32, -b, b)

    def bn_params(c):
        return (jax.random.uniform(next(keys), (c,), jnp.float32, 0.5, 1.5),
                0.1 * jax.random.normal(next(keys), (c,), jnp.float32),
                0.1 * jax.random.normal(next(keys), (c,), jnp.float32),
                jax.random.uniform(next(keys), (c,), jnp.float32, 0.5, 1.5))

    x1 = jax.random.normal(next(keys), (n, in_ch, h1, w1), jnp.float32)
    x2 = jax.random.normal(next(keys), (n, c2, h2, w2), jnp.float32)

    params = {
        "up_w": uni(next(keys), (in_ch, out_ch, 2, 2), in_ch * 4),
        "up_b": uni(next(keys), (out_ch,), in_ch * 4),
        "bn1": bn_params(up_in),
        "conv1_w": uni(next(keys), (out_ch, up_in, 3, 3), up_in * 9),
        "conv1_b": uni(next(keys), (out_ch,), up_in * 9),
        "bn2": bn_params(out_ch),
        "conv2_w": uni(next(keys), (out_ch, out_ch, 3, 3), out_ch * 9),
        "conv2_b": uni(next(keys), (out_ch,), out_ch * 9),
        "bns": bn_params(up_in),
        "convs_w": uni(next(keys), (out_ch, up_in, 3, 3), up_in * 9),
        "convs_b": uni(next(keys), (out_ch,), up_in * 9),
    }

    out = None
    for tuned in (True, False):
        try:
            fwd = jax.jit(functools.partial(de_conv_forward, tuned=tuned))
            out = fwd(x1, x2, params)
            jax.block_until_ready(out)
            break
        except Exception:
            # Conservative fallback: plain (unfolded) stores and default
            # resident buffering if the tuned features are rejected.
            if not tuned:
                raise

    ref = _ref_forward(x1, x2, params)
    assert out.shape == (n, out_ch, h2, w2), out.shape
    err = float(jnp.max(jnp.abs(out - ref)))
    # bf16 streams/weights vs an f32-HIGHEST reference: expected max|err| is
    # O(1e-2) here (error std ~3e-3); 4e-2 keeps the check robust (>10 sigma).
    assert err < 4e-2, f"max abs err {err}"
    print("KERNEL_OK")
</pallas_src>

<mosaic_0001>
module attributes {stable_mosaic.version = 11 : i64} {
  func.func @_up_kernel(%arg0: i32, %arg1: memref<128x8xbf16, #tpu.memory_space<vmem>>, %arg2: memref<8x32xbf16, #tpu.memory_space<vmem>>, %arg3: memref<1x32xf32, #tpu.memory_space<vmem>>, %arg4: memref<32x128xf32, #tpu.memory_space<vmem>>) attributes {dimension_semantics = [#tpu.dimension_semantics<parallel>], iteration_bounds = array<i64: 1>, scalar_prefetch = 0 : i64, scratch_operands = 0 : i64, tpu.core_type = #tpu.core_type<tc>, window_params = [{transform_indices = @transform_0, window_bounds = array<i64: 128, 8>}, {pipeline_mode = #tpu.pipeline_mode<synchronous>, transform_indices = @transform_1, window_bounds = array<i64: 8, 32>}, {pipeline_mode = #tpu.pipeline_mode<synchronous>, transform_indices = @transform_2, window_bounds = array<i64: 1, 32>}, {transform_indices = @transform_3, window_bounds = array<i64: 32, 128>}]} {
    %c0 = arith.constant 0 : index
    %c0_0 = arith.constant 0 : index
    %0 = vector.load %arg1[%c0, %c0_0] : memref<128x8xbf16, #tpu.memory_space<vmem>>, vector<128x8xbf16>
    %c0_1 = arith.constant 0 : index
    %c0_2 = arith.constant 0 : index
    %1 = vector.load %arg2[%c0_1, %c0_2] : memref<8x32xbf16, #tpu.memory_space<vmem>>, vector<8x32xbf16>
    %cst = arith.constant dense<0.000000e+00> : vector<128x32xf32>
    %2 = tpu.matmul %0, %1, %cst {dimension_numbers = #tpu.dot_dimension_numbers<[1], [0], [0], [1], [0, 0, 1, 1], [], []>} : vector<128x8xbf16>, vector<8x32xbf16>, vector<128x32xf32> -> vector<128x32xf32>
    %c0_3 = arith.constant 0 : index
    %c0_4 = arith.constant 0 : index
    %3 = vector.load %arg3[%c0_3, %c0_4] : memref<1x32xf32, #tpu.memory_space<vmem>>, vector<1x32xf32>
    %4 = vector.broadcast %3 : vector<1x32xf32> to vector<128x32xf32>
    %5 = arith.addf %2, %4 : vector<128x32xf32>
    %6 = vector.shape_cast %5 : vector<128x32xf32> to vector<32x128xf32>
    %c0_5 = arith.constant 0 : index
    %c0_6 = arith.constant 0 : index
    %7 = vector.load %arg4[%c0_5, %c0_6] : memref<32x128xf32, #tpu.memory_space<vmem>>, vector<32x128xf32>
    tpu.vector_store %arg4[%c0_5, %c0_6], %6 {strides = array<i32>} : memref<32x128xf32, #tpu.memory_space<vmem>>, vector<32x128xf32>,
    return
  }
  func.func @transform_0(%arg0: i32) -> (i32, i32) {
    %c0_i32 = arith.constant 0 : i32
    %c0_i32_0 = arith.constant 0 : i32
    return %arg0, %c0_i32 : i32, i32
  }
  func.func @transform_1(%arg0: i32) -> (i32, i32) {
    %c0_i32 = arith.constant 0 : i32
    %c0_i32_0 = arith.constant 0 : i32
    %c0_i32_1 = arith.constant 0 : i32
    return %c0_i32, %c0_i32_0 : i32, i32
  }
  func.func @transform_2(%arg0: i32) -> (i32, i32) {
    %c0_i32 = arith.constant 0 : i32
    %c0_i32_0 = arith.constant 0 : i32
    %c0_i32_1 = arith.constant 0 : i32
    return %c0_i32, %c0_i32_0 : i32, i32
  }
  func.func @transform_3(%arg0: i32) -> (i32, i32) {
    %c0_i32 = arith.constant 0 : i32
    %c0_i32_0 = arith.constant 0 : i32
    return %arg0, %c0_i32 : i32, i32
  }
}

module attributes {stable_mosaic.version = 11 : i64} {
  func.func @_conv_bn_relu_kernel(%arg0: i32, %arg1: memref<512x144xbf16, #tpu.memory_space<vmem>>, %arg2: memref<144x8xbf16, #tpu.memory_space<vmem>>, %arg3: memref<1x8xf32, #tpu.memory_space<vmem>>, %arg4: memref<1x8xf32, #tpu.memory_space<vmem>>, %arg5: memref<1x8xf32, #tpu.memory_space<vmem>>, %arg6: memref<32x128xbf16, #tpu.memory_space<vmem>>) attributes {dimension_semantics = [#tpu.dimension_semantics<parallel>], iteration_bounds = array<i64: 1>, scalar_prefetch = 0 : i64, scratch_operands = 0 : i64, tpu.core_type = #tpu.core_type<tc>, window_params = [{transform_indices = @transform_0, window_bounds = array<i64: 512, 144>}, {pipeline_mode = #tpu.pipeline_mode<synchronous>, transform_indices = @transform_1, window_bounds = array<i64: 144, 8>}, {pipeline_mode = #tpu.pipeline_mode<synchronous>, transform_indices = @transform_2, window_bounds = array<i64: 1, 8>}, {pipeline_mode = #tpu.pipeline_mode<synchronous>, transform_indices = @transform_3, window_bounds = array<i64: 1, 8>}, {pipeline_mode = #tpu.pipeline_mode<synchronous>, transform_indices = @transform_4, window_bounds = array<i64: 1, 8>}, {transform_indices = @transform_5, window_bounds = array<i64: 32, 128>}]} {
    %c0 = arith.constant 0 : index
    %c0_0 = arith.constant 0 : index
    %0 = vector.load %arg1[%c0, %c0_0] : memref<512x144xbf16, #tpu.memory_space<vmem>>, vector<512x144xbf16>
    %c0_1 = arith.constant 0 : index
    %c0_2 = arith.constant 0 : index
    %1 = vector.load %arg2[%c0_1, %c0_2] : memref<144x8xbf16, #tpu.memory_space<vmem>>, vector<144x8xbf16>
    %cst = arith.constant dense<0.000000e+00> : vector<512x8xf32>
    %2 = tpu.matmul %0, %1, %cst {dimension_numbers = #tpu.dot_dimension_numbers<[1], [0], [0], [1], [0, 0, 1, 1], [], []>} : vector<512x144xbf16>, vector<144x8xbf16>, vector<512x8xf32> -> vector<512x8xf32>
    %c0_3 = arith.constant 0 : index
    %c0_4 = arith.constant 0 : index
    %3 = vector.load %arg3[%c0_3, %c0_4] : memref<1x8xf32, #tpu.memory_space<vmem>>, vector<1x8xf32>
    %4 = vector.broadcast %3 : vector<1x8xf32> to vector<512x8xf32>
    %5 = arith.addf %2, %4 : vector<512x8xf32>
    %c0_5 = arith.constant 0 : index
    %c0_6 = arith.constant 0 : index
    %6 = vector.load %arg4[%c0_5, %c0_6] : memref<1x8xf32, #tpu.memory_space<vmem>>, vector<1x8xf32>
    %7 = vector.broadcast %6 : vector<1x8xf32> to vector<512x8xf32>
    %8 = arith.mulf %5, %7 : vector<512x8xf32>
    %c0_7 = arith.constant 0 : index
    %c0_8 = arith.constant 0 : index
    %9 = vector.load %arg5[%c0_7, %c0_8] : memref<1x8xf32, #tpu.memory_space<vmem>>, vector<1x8xf32>
    %10 = vector.broadcast %9 : vector<1x8xf32> to vector<512x8xf32>
    %11 = arith.addf %8, %10 : vector<512x8xf32>
    %cst_9 = arith.constant 0.000000e+00 : f32
    %12 = vector.broadcast %cst_9 : f32 to vector<512x8xf32>
    %13 = arith.maximumf %11, %12 : vector<512x8xf32>
    %14 = vector.shape_cast %13 : vector<512x8xf32> to vector<32x128xf32>
    %15 = arith.truncf %14 : vector<32x128xf32> to vector<32x128xbf16>
    %c0_10 = arith.constant 0 : index
    %c0_11 = arith.constant 0 : index
    %16 = vector.load %arg6[%c0_10, %c0_11] : memref<32x128xbf16, #tpu.memory_space<vmem>>, vector<32x128xbf16>
    tpu.vector_store %arg6[%c0_10, %c0_11], %15 {strides = array<i32>} : memref<32x128xbf16, #tpu.memory_space<vmem>>, vector<32x128xbf16>,
    return
  }
  func.func @transform_0(%arg0: i32) -> (i32, i32) {
    %c0_i32 = arith.constant 0 : i32
    %c0_i32_0 = arith.constant 0 : i32
    return %arg0, %c0_i32 : i32, i32
  }
  func.func @transform_1(%arg0: i32) -> (i32, i32) {
    %c0_i32 = arith.constant 0 : i32
    %c0_i32_0 = arith.constant 0 : i32
    %c0_i32_1 = arith.constant 0 : i32
    return %c0_i32, %c0_i32_0 : i32, i32
  }
  func.func @transform_2(%arg0: i32) -> (i32, i32) {
    %c0_i32 = arith.constant 0 : i32
    %c0_i32_0 = arith.constant 0 : i32
    %c0_i32_1 = arith.constant 0 : i32
    return %c0_i32, %c0_i32_0 : i32, i32
  }
  func.func @transform_3(%arg0: i32) -> (i32, i32) {
    %c0_i32 = arith.constant 0 : i32
    %c0_i32_0 = arith.constant 0 : i32
    %c0_i32_1 = arith.constant 0 : i32
    return %c0_i32, %c0_i32_0 : i32, i32
  }
  func.func @transform_4(%arg0: i32) -> (i32, i32) {
    %c0_i32 = arith.constant 0 : i32
    %c0_i32_0 = arith.constant 0 : i32
    %c0_i32_1 = arith.constant 0 : i32
    return %c0_i32, %c0_i32_0 : i32, i32
  }
  func.func @transform_5(%arg0: i32) -> (i32, i32) {
    %c0_i32 = arith.constant 0 : i32
    %c0_i32_0 = arith.constant 0 : i32
    return %arg0, %c0_i32 : i32, i32
  }
}

module attributes {stable_mosaic.version = 11 : i64} {
  func.func @_conv_add_conv_kernel(%arg0: i32, %arg1: memref<512x72xbf16, #tpu.memory_space<vmem>>, %arg2: memref<512x144xbf16, #tpu.memory_space<vmem>>, %arg3: memref<72x8xbf16, #tpu.memory_space<vmem>>, %arg4: memref<144x8xbf16, #tpu.memory_space<vmem>>, %arg5: memref<1x8xf32, #tpu.memory_space<vmem>>, %arg6: memref<32x128xf32, #tpu.memory_space<vmem>>) attributes {dimension_semantics = [#tpu.dimension_semantics<parallel>], iteration_bounds = array<i64: 1>, scalar_prefetch = 0 : i64, scratch_operands = 0 : i64, tpu.core_type = #tpu.core_type<tc>, window_params = [{transform_indices = @transform_0, window_bounds = array<i64: 512, 72>}, {transform_indices = @transform_1, window_bounds = array<i64: 512, 144>}, {pipeline_mode = #tpu.pipeline_mode<synchronous>, transform_indices = @transform_2, window_bounds = array<i64: 72, 8>}, {pipeline_mode = #tpu.pipeline_mode<synchronous>, transform_indices = @transform_3, window_bounds = array<i64: 144, 8>}, {pipeline_mode = #tpu.pipeline_mode<synchronous>, transform_indices = @transform_4, window_bounds = array<i64: 1, 8>}, {transform_indices = @transform_5, window_bounds = array<i64: 32, 128>}]} {
    %c0 = arith.constant 0 : index
    %c0_0 = arith.constant 0 : index
    %0 = vector.load %arg1[%c0, %c0_0] : memref<512x72xbf16, #tpu.memory_space<vmem>>, vector<512x72xbf16>
    %c0_1 = arith.constant 0 : index
    %c0_2 = arith.constant 0 : index
    %1 = vector.load %arg3[%c0_1, %c0_2] : memref<72x8xbf16, #tpu.memory_space<vmem>>, vector<72x8xbf16>
    %cst = arith.constant dense<0.000000e+00> : vector<512x8xf32>
    %2 = tpu.matmul %0, %1, %cst {dimension_numbers = #tpu.dot_dimension_numbers<[1], [0], [0], [1], [0, 0, 1, 1], [], []>} : vector<512x72xbf16>, vector<72x8xbf16>, vector<512x8xf32> -> vector<512x8xf32>
    %c0_3 = arith.constant 0 : index
    %c0_4 = arith.constant 0 : index
    %3 = vector.load %arg2[%c0_3, %c0_4] : memref<512x144xbf16, #tpu.memory_space<vmem>>, vector<512x144xbf16>
    %c0_5 = arith.constant 0 : index
    %c0_6 = arith.constant 0 : index
    %4 = vector.load %arg4[%c0_5, %c0_6] : memref<144x8xbf16, #tpu.memory_space<vmem>>, vector<144x8xbf16>
    %cst_7 = arith.constant dense<0.000000e+00> : vector<512x8xf32>
    %5 = tpu.matmul %3, %4, %cst_7 {dimension_numbers = #tpu.dot_dimension_numbers<[1], [0], [0], [1], [0, 0, 1, 1], [], []>} : vector<512x144xbf16>, vector<144x8xbf16>, vector<512x8xf32> -> vector<512x8xf32>
    %6 = arith.addf %2, %5 : vector<512x8xf32>
    %c0_8 = arith.constant 0 : index
    %c0_9 = arith.constant 0 : index
    %7 = vector.load %arg5[%c0_8, %c0_9] : memref<1x8xf32, #tpu.memory_space<vmem>>, vector<1x8xf32>
    %8 = vector.broadcast %7 : vector<1x8xf32> to vector<512x8xf32>
    %9 = arith.addf %6, %8 : vector<512x8xf32>
    %10 = vector.shape_cast %9 : vector<512x8xf32> to vector<32x128xf32>
    %c0_10 = arith.constant 0 : index
    %c0_11 = arith.constant 0 : index
    %11 = vector.load %arg6[%c0_10, %c0_11] : memref<32x128xf32, #tpu.memory_space<vmem>>, vector<32x128xf32>
    tpu.vector_store %arg6[%c0_10, %c0_11], %10 {strides = array<i32>} : memref<32x128xf32, #tpu.memory_space<vmem>>, vector<32x128xf32>,
    return
  }
  func.func @transform_0(%arg0: i32) -> (i32, i32) {
    %c0_i32 = arith.constant 0 : i32
    %c0_i32_0 = arith.constant 0 : i32
    return %arg0, %c0_i32 : i32, i32
  }
  func.func @transform_1(%arg0: i32) -> (i32, i32) {
    %c0_i32 = arith.constant 0 : i32
    %c0_i32_0 = arith.constant 0 : i32
    return %arg0, %c0_i32 : i32, i32
  }
  func.func @transform_2(%arg0: i32) -> (i32, i32) {
    %c0_i32 = arith.constant 0 : i32
    %c0_i32_0 = arith.constant 0 : i32
    %c0_i32_1 = arith.constant 0 : i32
    return %c0_i32, %c0_i32_0 : i32, i32
  }
  func.func @transform_3(%arg0: i32) -> (i32, i32) {
    %c0_i32 = arith.constant 0 : i32
    %c0_i32_0 = arith.constant 0 : i32
    %c0_i32_1 = arith.constant 0 : i32
    return %c0_i32, %c0_i32_0 : i32, i32
  }
  func.func @transform_4(%arg0: i32) -> (i32, i32) {
    %c0_i32 = arith.constant 0 : i32
    %c0_i32_0 = arith.constant 0 : i32
    %c0_i32_1 = arith.constant 0 : i32
    return %c0_i32, %c0_i32_0 : i32, i32
  }
  func.func @transform_5(%arg0: i32) -> (i32, i32) {
    %c0_i32 = arith.constant 0 : i32
    %c0_i32_0 = arith.constant 0 : i32
    return %arg0, %c0_i32 : i32, i32
  }
}

module attributes {stable_mosaic.version = 11 : i64} {
  func.func @_up_kernel(%arg0: i32, %arg1: memref<128x8xbf16, #tpu.memory_space<vmem>>, %arg2: memref<8x32xbf16, #tpu.memory_space<vmem>>, %arg3: memref<1x32xf32, #tpu.memory_space<vmem>>, %arg4: memref<128x32xf32, #tpu.memory_space<vmem>>) attributes {dimension_semantics = [#tpu.dimension_semantics<parallel>], iteration_bounds = array<i64: 1>, scalar_prefetch = 0 : i64, scratch_operands = 0 : i64, tpu.core_type = #tpu.core_type<tc>, window_params = [{transform_indices = @transform_0, window_bounds = array<i64: 128, 8>}, {pipeline_mode = #tpu.pipeline_mode<synchronous>, transform_indices = @transform_1, window_bounds = array<i64: 8, 32>}, {pipeline_mode = #tpu.pipeline_mode<synchronous>, transform_indices = @transform_2, window_bounds = array<i64: 1, 32>}, {transform_indices = @transform_3, window_bounds = array<i64: 128, 32>}]} {
    %c0 = arith.constant 0 : index
    %c0_0 = arith.constant 0 : index
    %0 = vector.load %arg1[%c0, %c0_0] : memref<128x8xbf16, #tpu.memory_space<vmem>>, vector<128x8xbf16>
    %c0_1 = arith.constant 0 : index
    %c0_2 = arith.constant 0 : index
    %1 = vector.load %arg2[%c0_1, %c0_2] : memref<8x32xbf16, #tpu.memory_space<vmem>>, vector<8x32xbf16>
    %cst = arith.constant dense<0.000000e+00> : vector<128x32xf32>
    %2 = tpu.matmul %0, %1, %cst {dimension_numbers = #tpu.dot_dimension_numbers<[1], [0], [0], [1], [0, 0, 1, 1], [], []>} : vector<128x8xbf16>, vector<8x32xbf16>, vector<128x32xf32> -> vector<128x32xf32>
    %c0_3 = arith.constant 0 : index
    %c0_4 = arith.constant 0 : index
    %3 = vector.load %arg3[%c0_3, %c0_4] : memref<1x32xf32, #tpu.memory_space<vmem>>, vector<1x32xf32>
    %4 = vector.broadcast %3 : vector<1x32xf32> to vector<128x32xf32>
    %5 = arith.addf %2, %4 : vector<128x32xf32>
    %c0_5 = arith.constant 0 : index
    %c0_6 = arith.constant 0 : index
    %6 = vector.load %arg4[%c0_5, %c0_6] : memref<128x32xf32, #tpu.memory_space<vmem>>, vector<128x32xf32>
    tpu.vector_store %arg4[%c0_5, %c0_6], %5 {strides = array<i32>} : memref<128x32xf32, #tpu.memory_space<vmem>>, vector<128x32xf32>,
    return
  }
  func.func @transform_0(%arg0: i32) -> (i32, i32) {
    %c0_i32 = arith.constant 0 : i32
    %c0_i32_0 = arith.constant 0 : i32
    return %arg0, %c0_i32 : i32, i32
  }
  func.func @transform_1(%arg0: i32) -> (i32, i32) {
    %c0_i32 = arith.constant 0 : i32
    %c0_i32_0 = arith.constant 0 : i32
    %c0_i32_1 = arith.constant 0 : i32
    return %c0_i32, %c0_i32_0 : i32, i32
  }
  func.func @transform_2(%arg0: i32) -> (i32, i32) {
    %c0_i32 = arith.constant 0 : i32
    %c0_i32_0 = arith.constant 0 : i32
    %c0_i32_1 = arith.constant 0 : i32
    return %c0_i32, %c0_i32_0 : i32, i32
  }
  func.func @transform_3(%arg0: i32) -> (i32, i32) {
    %c0_i32 = arith.constant 0 : i32
    %c0_i32_0 = arith.constant 0 : i32
    return %arg0, %c0_i32 : i32, i32
  }
}

module attributes {stable_mosaic.version = 11 : i64} {
  func.func @_conv_bn_relu_kernel(%arg0: i32, %arg1: memref<512x144xbf16, #tpu.memory_space<vmem>>, %arg2: memref<144x8xbf16, #tpu.memory_space<vmem>>, %arg3: memref<1x8xf32, #tpu.memory_space<vmem>>, %arg4: memref<1x8xf32, #tpu.memory_space<vmem>>, %arg5: memref<1x8xf32, #tpu.memory_space<vmem>>, %arg6: memref<512x8xbf16, #tpu.memory_space<vmem>>) attributes {dimension_semantics = [#tpu.dimension_semantics<parallel>], iteration_bounds = array<i64: 1>, scalar_prefetch = 0 : i64, scratch_operands = 0 : i64, tpu.core_type = #tpu.core_type<tc>, window_params = [{transform_indices = @transform_0, window_bounds = array<i64: 512, 144>}, {pipeline_mode = #tpu.pipeline_mode<synchronous>, transform_indices = @transform_1, window_bounds = array<i64: 144, 8>}, {pipeline_mode = #tpu.pipeline_mode<synchronous>, transform_indices = @transform_2, window_bounds = array<i64: 1, 8>}, {pipeline_mode = #tpu.pipeline_mode<synchronous>, transform_indices = @transform_3, window_bounds = array<i64: 1, 8>}, {pipeline_mode = #tpu.pipeline_mode<synchronous>, transform_indices = @transform_4, window_bounds = array<i64: 1, 8>}, {transform_indices = @transform_5, window_bounds = array<i64: 512, 8>}]} {
    %c0 = arith.constant 0 : index
    %c0_0 = arith.constant 0 : index
    %0 = vector.load %arg1[%c0, %c0_0] : memref<512x144xbf16, #tpu.memory_space<vmem>>, vector<512x144xbf16>
    %c0_1 = arith.constant 0 : index
    %c0_2 = arith.constant 0 : index
    %1 = vector.load %arg2[%c0_1, %c0_2] : memref<144x8xbf16, #tpu.memory_space<vmem>>, vector<144x8xbf16>
    %cst = arith.constant dense<0.000000e+00> : vector<512x8xf32>
    %2 = tpu.matmul %0, %1, %cst {dimension_numbers = #tpu.dot_dimension_numbers<[1], [0], [0], [1], [0, 0, 1, 1], [], []>} : vector<512x144xbf16>, vector<144x8xbf16>, vector<512x8xf32> -> vector<512x8xf32>
    %c0_3 = arith.constant 0 : index
    %c0_4 = arith.constant 0 : index
    %3 = vector.load %arg3[%c0_3, %c0_4] : memref<1x8xf32, #tpu.memory_space<vmem>>, vector<1x8xf32>
    %4 = vector.broadcast %3 : vector<1x8xf32> to vector<512x8xf32>
    %5 = arith.addf %2, %4 : vector<512x8xf32>
    %c0_5 = arith.constant 0 : index
    %c0_6 = arith.constant 0 : index
    %6 = vector.load %arg4[%c0_5, %c0_6] : memref<1x8xf32, #tpu.memory_space<vmem>>, vector<1x8xf32>
    %7 = vector.broadcast %6 : vector<1x8xf32> to vector<512x8xf32>
    %8 = arith.mulf %5, %7 : vector<512x8xf32>
    %c0_7 = arith.constant 0 : index
    %c0_8 = arith.constant 0 : index
    %9 = vector.load %arg5[%c0_7, %c0_8] : memref<1x8xf32, #tpu.memory_space<vmem>>, vector<1x8xf32>
    %10 = vector.broadcast %9 : vector<1x8xf32> to vector<512x8xf32>
    %11 = arith.addf %8, %10 : vector<512x8xf32>
    %cst_9 = arith.constant 0.000000e+00 : f32
    %12 = vector.broadcast %cst_9 : f32 to vector<512x8xf32>
    %13 = arith.maximumf %11, %12 : vector<512x8xf32>
    %14 = arith.truncf %13 : vector<512x8xf32> to vector<512x8xbf16>
    %c0_10 = arith.constant 0 : index
    %c0_11 = arith.constant 0 : index
    %15 = vector.load %arg6[%c0_10, %c0_11] : memref<512x8xbf16, #tpu.memory_space<vmem>>, vector<512x8xbf16>
    tpu.vector_store %arg6[%c0_10, %c0_11], %14 {strides = array<i32>} : memref<512x8xbf16, #tpu.memory_space<vmem>>, vector<512x8xbf16>,
    return
  }
  func.func @transform_0(%arg0: i32) -> (i32, i32) {
    %c0_i32 = arith.constant 0 : i32
    %c0_i32_0 = arith.constant 0 : i32
    return %arg0, %c0_i32 : i32, i32
  }
  func.func @transform_1(%arg0: i32) -> (i32, i32) {
    %c0_i32 = arith.constant 0 : i32
    %c0_i32_0 = arith.constant 0 : i32
    %c0_i32_1 = arith.constant 0 : i32
    return %c0_i32, %c0_i32_0 : i32, i32
  }
  func.func @transform_2(%arg0: i32) -> (i32, i32) {
    %c0_i32 = arith.constant 0 : i32
    %c0_i32_0 = arith.constant 0 : i32
    %c0_i32_1 = arith.constant 0 : i32
    return %c0_i32, %c0_i32_0 : i32, i32
  }
  func.func @transform_3(%arg0: i32) -> (i32, i32) {
    %c0_i32 = arith.constant 0 : i32
    %c0_i32_0 = arith.constant 0 : i32
    %c0_i32_1 = arith.constant 0 : i32
    return %c0_i32, %c0_i32_0 : i32, i32
  }
  func.func @transform_4(%arg0: i32) -> (i32, i32) {
    %c0_i32 = arith.constant 0 : i32
    %c0_i32_0 = arith.constant 0 : i32
    %c0_i32_1 = arith.constant 0 : i32
    return %c0_i32, %c0_i32_0 : i32, i32
  }
  func.func @transform_5(%arg0: i32) -> (i32, i32) {
    %c0_i32 = arith.constant 0 : i32
    %c0_i32_0 = arith.constant 0 : i32
    return %arg0, %c0_i32 : i32, i32
  }
}

module attributes {stable_mosaic.version = 11 : i64} {
  func.func @_conv_add_conv_kernel(%arg0: i32, %arg1: memref<512x72xbf16, #tpu.memory_space<vmem>>, %arg2: memref<512x144xbf16, #tpu.memory_space<vmem>>, %arg3: memref<72x8xbf16, #tpu.memory_space<vmem>>, %arg4: memref<144x8xbf16, #tpu.memory_space<vmem>>, %arg5: memref<1x8xf32, #tpu.memory_space<vmem>>, %arg6: memref<512x8xf32, #tpu.memory_space<vmem>>) attributes {dimension_semantics = [#tpu.dimension_semantics<parallel>], iteration_bounds = array<i64: 1>, scalar_prefetch = 0 : i64, scratch_operands = 0 : i64, tpu.core_type = #tpu.core_type<tc>, window_params = [{transform_indices = @transform_0, window_bounds = array<i64: 512, 72>}, {transform_indices = @transform_1, window_bounds = array<i64: 512, 144>}, {pipeline_mode = #tpu.pipeline_mode<synchronous>, transform_indices = @transform_2, window_bounds = array<i64: 72, 8>}, {pipeline_mode = #tpu.pipeline_mode<synchronous>, transform_indices = @transform_3, window_bounds = array<i64: 144, 8>}, {pipeline_mode = #tpu.pipeline_mode<synchronous>, transform_indices = @transform_4, window_bounds = array<i64: 1, 8>}, {transform_indices = @transform_5, window_bounds = array<i64: 512, 8>}]} {
    %c0 = arith.constant 0 : index
    %c0_0 = arith.constant 0 : index
    %0 = vector.load %arg1[%c0, %c0_0] : memref<512x72xbf16, #tpu.memory_space<vmem>>, vector<512x72xbf16>
    %c0_1 = arith.constant 0 : index
    %c0_2 = arith.constant 0 : index
    %1 = vector.load %arg3[%c0_1, %c0_2] : memref<72x8xbf16, #tpu.memory_space<vmem>>, vector<72x8xbf16>
    %cst = arith.constant dense<0.000000e+00> : vector<512x8xf32>
    %2 = tpu.matmul %0, %1, %cst {dimension_numbers = #tpu.dot_dimension_numbers<[1], [0], [0], [1], [0, 0, 1, 1], [], []>} : vector<512x72xbf16>, vector<72x8xbf16>, vector<512x8xf32> -> vector<512x8xf32>
    %c0_3 = arith.constant 0 : index
    %c0_4 = arith.constant 0 : index
    %3 = vector.load %arg2[%c0_3, %c0_4] : memref<512x144xbf16, #tpu.memory_space<vmem>>, vector<512x144xbf16>
    %c0_5 = arith.constant 0 : index
    %c0_6 = arith.constant 0 : index
    %4 = vector.load %arg4[%c0_5, %c0_6] : memref<144x8xbf16, #tpu.memory_space<vmem>>, vector<144x8xbf16>
    %cst_7 = arith.constant dense<0.000000e+00> : vector<512x8xf32>
    %5 = tpu.matmul %3, %4, %cst_7 {dimension_numbers = #tpu.dot_dimension_numbers<[1], [0], [0], [1], [0, 0, 1, 1], [], []>} : vector<512x144xbf16>, vector<144x8xbf16>, vector<512x8xf32> -> vector<512x8xf32>
    %6 = arith.addf %2, %5 : vector<512x8xf32>
    %c0_8 = arith.constant 0 : index
    %c0_9 = arith.constant 0 : index
    %7 = vector.load %arg5[%c0_8, %c0_9] : memref<1x8xf32, #tpu.memory_space<vmem>>, vector<1x8xf32>
    %8 = vector.broadcast %7 : vector<1x8xf32> to vector<512x8xf32>
    %9 = arith.addf %6, %8 : vector<512x8xf32>
    %c0_10 = arith.constant 0 : index
    %c0_11 = arith.constant 0 : index
    %10 = vector.load %arg6[%c0_10, %c0_11] : memref<512x8xf32, #tpu.memory_space<vmem>>, vector<512x8xf32>
    tpu.vector_store %arg6[%c0_10, %c0_11], %9 {strides = array<i32>} : memref<512x8xf32, #tpu.memory_space<vmem>>, vector<512x8xf32>,
    return
  }
  func.func @transform_0(%arg0: i32) -> (i32, i32) {
    %c0_i32 = arith.constant 0 : i32
    %c0_i32_0 = arith.constant 0 : i32
    return %arg0, %c0_i32 : i32, i32
  }
  func.func @transform_1(%arg0: i32) -> (i32, i32) {
    %c0_i32 = arith.constant 0 : i32
    %c0_i32_0 = arith.constant 0 : i32
    return %arg0, %c0_i32 : i32, i32
  }
  func.func @transform_2(%arg0: i32) -> (i32, i32) {
    %c0_i32 = arith.constant 0 : i32
    %c0_i32_0 = arith.constant 0 : i32
    %c0_i32_1 = arith.constant 0 : i32
    return %c0_i32, %c0_i32_0 : i32, i32
  }
  func.func @transform_3(%arg0: i32) -> (i32, i32) {
    %c0_i32 = arith.constant 0 : i32
    %c0_i32_0 = arith.constant 0 : i32
    %c0_i32_1 = arith.constant 0 : i32
    return %c0_i32, %c0_i32_0 : i32, i32
  }
  func.func @transform_4(%arg0: i32) -> (i32, i32) {
    %c0_i32 = arith.constant 0 : i32
    %c0_i32_0 = arith.constant 0 : i32
    %c0_i32_1 = arith.constant 0 : i32
    return %c0_i32, %c0_i32_0 : i32, i32
  }
  func.func @transform_5(%arg0: i32) -> (i32, i32) {
    %c0_i32 = arith.constant 0 : i32
    %c0_i32_0 = arith.constant 0 : i32
    return %arg0, %c0_i32 : i32, i32
  }
}

</mosaic_0001>

<llo_original>
// kernel: tile.8
$region0: #{tile.8}
  #allocation2 [shape = 's32[1]{0}', space=sflag, size = 0x4, scoped, tag = 'scoped memory for tile.8']
  %s0 = inlined_call_operand.hbm [shape: f32[8], index: 0, kind: input, shape index: {}]
  %s1 = inlined_call_operand.vmem [shape: f32[4,8], index: 1, kind: output, shape index: {}]
  $region1: #{tile.8} parent=0
    #allocation0 [shape = 'u8[512]{0}', space=vmem, size = 0x400, scoped, tag = 'operand span for operand 0']
    #allocation1 [shape = 's32[1]{0}', space=sflag, size = 0x4, scoped, tag = 'scoped memory for tile.8']
    %2 = vsyncpa [#allocation1], 0
    // Predicated region
    $region2: #{tile.8} parent=1 // pred_check
      _
    $region3: #{tile.8} parent=1 // pred_check_branch
      %4 = sbr.rel (0) target = $region5
    $region4: #{tile.8} parent=1 // pred_region
      %6 = vsyncadd [#allocation1], 0
      %s8 = sshll.u32 %s0, 4
      %s9 = int_to_ptr.hbm [resolvable:$true] %s8
      %s10 = sshll.u32 [#allocation0], 4
      %s11 = int_to_ptr.vmem [resolvable:$true] %s10
      %13 = dma.hbm_to_vmem [thread:$0]  %s9, 16, %s11, [#allocation1]
    $region5: #{tile.8} parent=1 // pred_fallthru
      _
    // Predicated region
    $region6: #{tile.8} parent=1 // pred_check
      _
    $region7: #{tile.8} parent=1 // pred_check_branch
      %15 = sbr.rel (0) target = $region9
    $region8: #{tile.8} parent=1 // pred_region
      %17 = dma.done [#allocation1], 16
    $region9: #{tile.8} parent=1 // pred_fallthru
      _
    %v18 = vld [vmem:[#allocation0] ss:$0 sm:$0xff]
    %19 = vst [vmem:[%s1] sm:$0xf] %v18
    %20 = vsyncpa [#allocation1], 1

// kernel: tile.9
$region0: #{tile.9}
  %s0 = inlined_call_operand.vmem [shape: f32[4,8], index: 0, kind: input, shape index: {}]
  %s1 = inlined_call_operand.vmem [shape: f32[1,32], index: 1, kind: output, shape index: {}]
  $region1: #{tile.9} parent=0
    #allocation0 [shape = 'u8[4096]{0}', space=vmem, size = 0x1000, scoped, tag = 'scoped mem for output reshape']
    #allocation1 [shape = 'u8[4096]{0}', space=vmem, size = 0x1000, scoped, tag = 'scoped mem for input reshape']
    %s3 = ssub.s32 16, 1
    %v4 = vld [vmem:[%s0] sm:%s3]
    %5 = vst [vmem:[#allocation1] sm:%s3] %v4
    %v6 = vld [vmem:[#allocation1] sm:$0x1]
    %vm7 = vcmask 64512
    %8 = vst.msk [vmem:[#allocation0] sm:$0x1] %vm7, %v6
    %s9 = scalar_lea.vmem [#allocation1], 3
    %v10 = vld [vmem:[%s9] sm:$0x1]
    %11 = vrot.lane.b32.xlu0 %v10, 24
    %v12 = vpop.permute.xlu0 %11
    %vm13 = vcmask 261312
    %14 = vst.msk [vmem:[#allocation0] sm:$0x1] %vm13, %v12
    %s15 = scalar_lea.vmem [#allocation1], 2
    %v16 = vld [vmem:[%s15] sm:$0x1]
    %17 = vrot.lane.b32.xlu0 %v16, 16
    %v18 = vpop.permute.xlu0 %17
    %vm19 = vcmask 195712
    %20 = vst.msk [vmem:[#allocation0] sm:$0x1] %vm19, %v18
    %s21 = scalar_lea.vmem [#allocation1], 1
    %v22 = vld [vmem:[%s21] sm:$0x1]
    %23 = vrot.lane.b32.xlu0 %v22, 8
    %v24 = vpop.permute.xlu0 %23
    %vm25 = vcmask 130112
    %26 = vst.msk [vmem:[#allocation0] sm:$0x1] %vm25, %v24
    %s28 = ssub.s32 2, 1
    %v29 = vld [vmem:[#allocation0] sm:%s28]
    %s31 = ssub.s32 2, 1
    %32 = vst [vmem:[%s1] sm:%s31] %v29

// kernel: tile.8
$region0: #{tile.8}
  #allocation2 [shape = 's32[1]{0}', space=sflag, size = 0x4, scoped, tag = 'scoped memory for tile.8']
  %s0 = inlined_call_operand.hbm [shape: f32[8], index: 0, kind: input, shape index: {}]
  %s1 = inlined_call_operand.vmem [shape: f32[4,8], index: 1, kind: output, shape index: {}]
  $region1: #{tile.8} parent=0
    #allocation0 [shape = 'u8[512]{0}', space=vmem, size = 0x400, scoped, tag = 'operand span for operand 0']
    #allocation1 [shape = 's32[1]{0}', space=sflag, size = 0x4, scoped, tag = 'scoped memory for tile.8']
    %2 = vsyncpa [#allocation1], 0
    // Predicated region
    $region2: #{tile.8} parent=1 // pred_check
      _
    $region3: #{tile.8} parent=1 // pred_check_branch
      %4 = sbr.rel (0) target = $region5
    $region4: #{tile.8} parent=1 // pred_region
      %6 = vsyncadd [#allocation1], 0
      %s8 = sshll.u32 %s0, 4
      %s9 = int_to_ptr.hbm [resolvable:$true] %s8
      %s10 = sshll.u32 [#allocation0], 4
      %s11 = int_to_ptr.vmem [resolvable:$true] %s10
      %13 = dma.hbm_to_vmem [thread:$0]  %s9, 16, %s11, [#allocation1]
    $region5: #{tile.8} parent=1 // pred_fallthru
      _
    // Predicated region
    $region6: #{tile.8} parent=1 // pred_check
      _
    $region7: #{tile.8} parent=1 // pred_check_branch
      %15 = sbr.rel (0) target = $region9
    $region8: #{tile.8} parent=1 // pred_region
      %17 = dma.done [#allocation1], 16
    $region9: #{tile.8} parent=1 // pred_fallthru
      _
    %v18 = vld [vmem:[#allocation0] ss:$0 sm:$0xff]
    %19 = vst [vmem:[%s1] sm:$0xf] %v18
    %20 = vsyncpa [#allocation1], 1

// kernel: tile.9
$region0: #{tile.9}
  %s0 = inlined_call_operand.vmem [shape: f32[4,8], index: 0, kind: input, shape index: {}]
  %s1 = inlined_call_operand.vmem [shape: f32[1,32], index: 1, kind: output, shape index: {}]
  $region1: #{tile.9} parent=0
    #allocation0 [shape = 'u8[4096]{0}', space=vmem, size = 0x1000, scoped, tag = 'scoped mem for output reshape']
    #allocation1 [shape = 'u8[4096]{0}', space=vmem, size = 0x1000, scoped, tag = 'scoped mem for input reshape']
    %s3 = ssub.s32 16, 1
    %v4 = vld [vmem:[%s0] sm:%s3]
    %5 = vst [vmem:[#allocation1] sm:%s3] %v4
    %v6 = vld [vmem:[#allocation1] sm:$0x1]
    %vm7 = vcmask 64512
    %8 = vst.msk [vmem:[#allocation0] sm:$0x1] %vm7, %v6
    %s9 = scalar_lea.vmem [#allocation1], 3
    %v10 = vld [vmem:[%s9] sm:$0x1]
    %11 = vrot.lane.b32.xlu0 %v10, 24
    %v12 = vpop.permute.xlu0 %11
    %vm13 = vcmask 261312
    %14 = vst.msk [vmem:[#allocation0] sm:$0x1] %vm13, %v12
    %s15 = scalar_lea.vmem [#allocation1], 2
    %v16 = vld [vmem:[%s15] sm:$0x1]
    %17 = vrot.lane.b32.xlu0 %v16, 16
    %v18 = vpop.permute.xlu0 %17
    %vm19 = vcmask 195712
    %20 = vst.msk [vmem:[#allocation0] sm:$0x1] %vm19, %v18
    %s21 = scalar_lea.vmem [#allocation1], 1
    %v22 = vld [vmem:[%s21] sm:$0x1]
    %23 = vrot.lane.b32.xlu0 %v22, 8
    %v24 = vpop.permute.xlu0 %23
    %vm25 = vcmask 130112
    %26 = vst.msk [vmem:[#allocation0] sm:$0x1] %vm25, %v24
    %s28 = ssub.s32 2, 1
    %v29 = vld [vmem:[#allocation0] sm:%s28]
    %s31 = ssub.s32 2, 1
    %32 = vst [vmem:[%s1] sm:%s31] %v29

// kernel: de_conv_forward.3
$region0: #{de_conv_forward.3}
  #allocation0 [shape = 'u32[]', space=smem, size = 0x4, offset = 0x4, fixed_abs, tag = 'smem constant byte address 0x4 - core index']
  #allocation1 [shape = 'u32[72,128]{1,0:T(1,128)}', space=vmem, size = 0x9000, scoped, tag = 'internal scratch']
  %s0 = inlined_call_operand.vmem [shape: bf16[128,8], index: 0, kind: input, shape index: {}]
  %s1 = inlined_call_operand.vmem [shape: bf16[8,32], index: 1, kind: input, shape index: {}]
  %s2 = inlined_call_operand.vmem [shape: f32[1,32], index: 2, kind: input, shape index: {}]
  %s3 = inlined_call_operand.vmem [shape: f32[128,32], index: 3, kind: output, shape index: {}]
  %s4 = sld [smem:[#allocation0]]
  $region22: #{de_conv_forward.3} parent=0
    _
  %s6 = ssub.s32 1, %s4
  %s7 = scalar_select 0, %s6, %s4
  // Predicated region
  $region2: #{de_conv_forward.3} parent=0 // pred_check
    _
  $region3: #{de_conv_forward.3} parent=0 // pred_check_branch
    %9 = sbr.rel (0) target = $region5
  $region4: #{de_conv_forward.3} parent=0 // pred_region
    _
  $region5: #{de_conv_forward.3} parent=0 // pred_fallthru
    _
  // Predicated region
  $region6: #{de_conv_forward.3} parent=0 // pred_check
    _
  $region7: #{de_conv_forward.3} parent=0 // pred_check_branch
    %11 = sbr.rel (0) target = $region9
  $region8: #{de_conv_forward.3} parent=0 // pred_region
    _
  $region9: #{de_conv_forward.3} parent=0 // pred_fallthru
    _
  // Predicated region
  $region10: #{de_conv_forward.3} parent=0 // pred_check
    _
  $region11: #{de_conv_forward.3} parent=0 // pred_check_branch
    %13 = sbr.rel (0) target = $region13
  $region12: #{de_conv_forward.3} parent=0 // pred_region
    _
  $region13: #{de_conv_forward.3} parent=0 // pred_fallthru
    _
  %v15 = vld [vmem:[%s0] sm:$0xf]
  %v16 = vld [vmem:[%s0 + $0x4] sm:$0xf]
  %v17 = vld [vmem:[%s0 + $0x8] sm:$0xf]
  %v18 = vld [vmem:[%s0 + $0xc] sm:$0xf]
  %v19 = vld [vmem:[%s0 + $0x10] sm:$0xf]
  %v20 = vld [vmem:[%s0 + $0x14] sm:$0xf]
  %v21 = vld [vmem:[%s0 + $0x18] sm:$0xf]
  %v22 = vld [vmem:[%s0 + $0x1c] sm:$0xf]
  %v23 = vld [vmem:[%s0 + $0x20] sm:$0xf]
  %v24 = vld [vmem:[%s0 + $0x24] sm:$0xf]
  %v25 = vld [vmem:[%s0 + $0x28] sm:$0xf]
  %v26 = vld [vmem:[%s0 + $0x2c] sm:$0xf]
  %v27 = vld [vmem:[%s0 + $0x30] sm:$0xf]
  %v28 = vld [vmem:[%s0 + $0x34] sm:$0xf]
  %v29 = vld [vmem:[%s0 + $0x38] sm:$0xf]
  %v30 = vld [vmem:[%s0 + $0x3c] sm:$0xf]
  %v31 = vld [vmem:[%s1] sm:$0xf]
  %v32 = vld [vmem:[%s2] sm:$0x1]
  %v34 = vperm.slane %v32, 0
  %v52 = vunpack.c.l.b16 %v15
  %v53 = vunpack.c.l.b16 %v16
  %v54 = vunpack.c.l.b16 %v17
  %v55 = vunpack.c.l.b16 %v18
  %v56 = vunpack.c.l.b16 %v19
  %v57 = vunpack.c.l.b16 %v20
  %v58 = vunpack.c.l.b16 %v21
  %v59 = vunpack.c.l.b16 %v22
  %v60 = vunpack.c.l.b16 %v23
  %v61 = vunpack.c.l.b16 %v24
  %v62 = vunpack.c.l.b16 %v25
  %v63 = vunpack.c.l.b16 %v26
  %v64 = vunpack.c.l.b16 %v27
  %v65 = vunpack.c.l.b16 %v28
  %v66 = vunpack.c.l.b16 %v29
  %v67 = vunpack.c.l.b16 %v30
  %v68 = vpack.c.b16 %v53, %v52
  %v69 = vpack.c.b16 %v55, %v54
  %v70 = vpack.c.b16 %v57, %v56
  %v71 = vpack.c.b16 %v59, %v58
  %v72 = vpack.c.b16 %v61, %v60
  %v73 = vpack.c.b16 %v63, %v62
  %v74 = vpack.c.b16 %v65, %v64
  %v75 = vpack.c.b16 %v67, %v66
  %vm76 = vcmask 64512
  %v78 = vsel %vm76, %v68, 0
  %v81 = vsel %vm76, %v69, 0
  %v84 = vsel %vm76, %v70, 0
  %v87 = vsel %vm76, %v71, 0
  %v90 = vsel %vm76, %v72, 0
  %v93 = vsel %vm76, %v73, 0
  %v96 = vsel %vm76, %v74, 0
  %v99 = vsel %vm76, %v75, 0
  %vm101 = vcmask 1043456
  %v103 = vsel %vm101, %v31, 0
  %105 = vmatpush.bf16.msra.mxu0 0
  %106 = vmatpush.bf16.msra.mxu0 0
  %107 = vmatpush.bf16.msra.mxu0 0
  %108 = vmatpush.bf16.msra.mxu0 0
  %109 = vmatpush.bf16.msra.mxu0 0
  %110 = vmatpush.bf16.msra.mxu0 0
  %111 = vmatpush.bf16.msra.mxu0 0
  %112 = vmatpush.bf16.msra.mxu0 %v103
  %113 = vmatmul.bf16.gmra.mxu0 %v78
  %v114 = vpop.f32.mrf.mxu0
  %v115 = vadd.f32 %v34, %v114
  %v116 = vpop.f32.mrf.mxu0
  %v117 = vadd.f32 %v34, %v116
  %118 = vmatmul.bf16.gmra.mxu0 %v81
  %v119 = vpop.f32.mrf.mxu0
  %v120 = vadd.f32 %v34, %v119
  %v121 = vpop.f32.mrf.mxu0
  %v122 = vadd.f32 %v34, %v121
  %123 = vmatmul.bf16.gmra.mxu0 %v84
  %v124 = vpop.f32.mrf.mxu0
  %v125 = vadd.f32 %v34, %v124
  %v126 = vpop.f32.mrf.mxu0
  %v127 = vadd.f32 %v34, %v126
  %128 = vmatmul.bf16.gmra.mxu0 %v87
  %v129 = vpop.f32.mrf.mxu0
  %v130 = vadd.f32 %v34, %v129
  %v131 = vpop.f32.mrf.mxu0
  %v132 = vadd.f32 %v34, %v131
  %133 = vmatmul.bf16.gmra.mxu0 %v90
  %v134 = vpop.f32.mrf.mxu0
  %v135 = vadd.f32 %v34, %v134
  %v136 = vpop.f32.mrf.mxu0
  %v137 = vadd.f32 %v34, %v136
  %138 = vmatmul.bf16.gmra.mxu0 %v93
  %v139 = vpop.f32.mrf.mxu0
  %v140 = vadd.f32 %v34, %v139
  %v141 = vpop.f32.mrf.mxu0
  %v142 = vadd.f32 %v34, %v141
  %143 = vmatmul.bf16.gmra.mxu0 %v96
  %v144 = vpop.f32.mrf.mxu0
  %v145 = vadd.f32 %v34, %v144
  %v146 = vpop.f32.mrf.mxu0
  %v147 = vadd.f32 %v34, %v146
  %148 = vmatmul.bf16.gmra.mxu0 %v99
  %v149 = vpop.f32.mrf.mxu0
  %v150 = vadd.f32 %v34, %v149
  %v151 = vpop.f32.mrf.mxu0
  %v152 = vadd.f32 %v34, %v151
  %153 = vdwg.mxu0
  %vm154 = vcmask 261120
  %155 = vst.msk [vmem:[%s3] sm:$0xff] %vm154, %v115
  %156 = vst.msk [vmem:[%s3 + $0x8] sm:$0xff] %vm154, %v117
  %157 = vst.msk [vmem:[%s3 + $0x10] sm:$0xff] %vm154, %v120
  %158 = vst.msk [vmem:[%s3 + $0x18] sm:$0xff] %vm154, %v122
  %159 = vst.msk [vmem:[%s3 + $0x20] sm:$0xff] %vm154, %v125
  %160 = vst.msk [vmem:[%s3 + $0x28] sm:$0xff] %vm154, %v127
  %161 = vst.msk [vmem:[%s3 + $0x30] sm:$0xff] %vm154, %v130
  %162 = vst.msk [vmem:[%s3 + $0x38] sm:$0xff] %vm154, %v132
  %163 = vst.msk [vmem:[%s3 + $0x40] sm:$0xff] %vm154, %v135
  %164 = vst.msk [vmem:[%s3 + $0x48] sm:$0xff] %vm154, %v137
  %165 = vst.msk [vmem:[%s3 + $0x50] sm:$0xff] %vm154, %v140
  %166 = vst.msk [vmem:[%s3 + $0x58] sm:$0xff] %vm154, %v142
  %167 = vst.msk [vmem:[%s3 + $0x60] sm:$0xff] %vm154, %v145
  %168 = vst.msk [vmem:[%s3 + $0x68] sm:$0xff] %vm154, %v147
  %169 = vst.msk [vmem:[%s3 + $0x70] sm:$0xff] %vm154, %v150
  %170 = vst.msk [vmem:[%s3 + $0x78] sm:$0xff] %vm154, %v152
  // Predicated region
  $region14: #{de_conv_forward.3} parent=0 // pred_check
    _
  $region15: #{de_conv_forward.3} parent=0 // pred_check_branch
    %172 = sbr.rel (0) target = $region17
  $region16: #{de_conv_forward.3} parent=0 // pred_region
    _
  $region17: #{de_conv_forward.3} parent=0 // pred_fallthru
    _
  // Predicated region
  $region18: #{de_conv_forward.3} parent=0 // pred_check
    _
  $region19: #{de_conv_forward.3} parent=0 // pred_check_branch
    %174 = sbr.rel (0) target = $region21
  $region20: #{de_conv_forward.3} parent=0 // pred_region
    _
  $region21: #{de_conv_forward.3} parent=0 // pred_fallthru
    _

// kernel: de_conv_forward.4
$region0: #{de_conv_forward.4}
  #allocation0 [shape = 'u32[]', space=smem, size = 0x4, offset = 0x4, fixed_abs, tag = 'smem constant byte address 0x4 - core index']
  #allocation1 [shape = 'u32[72,128]{1,0:T(1,128)}', space=vmem, size = 0x9000, scoped, tag = 'internal scratch']
  %s0 = inlined_call_operand.vmem [shape: bf16[512,144], index: 0, kind: input, shape index: {}]
  %s1 = inlined_call_operand.vmem [shape: bf16[144,8], index: 1, kind: input, shape index: {}]
  %s2 = inlined_call_operand.vmem [shape: f32[1,8], index: 2, kind: input, shape index: {}]
  %s3 = inlined_call_operand.vmem [shape: f32[1,8], index: 3, kind: input, shape index: {}]
  %s4 = inlined_call_operand.vmem [shape: f32[1,8], index: 4, kind: input, shape index: {}]
  %s5 = inlined_call_operand.vmem [shape: bf16[512,8], index: 5, kind: output, shape index: {}]
  %s6 = sld [smem:[#allocation0]]
  $region30: #{de_conv_forward.4} parent=0
    _
  %s8 = ssub.s32 1, %s6
  %s9 = scalar_select 0, %s8, %s6
  // Predicated region
  $region2: #{de_conv_forward.4} parent=0 // pred_check
    _
  $region3: #{de_conv_forward.4} parent=0 // pred_check_branch
    %11 = sbr.rel (0) target = $region5
  $region4: #{de_conv_forward.4} parent=0 // pred_region
    _
  $region5: #{de_conv_forward.4} parent=0 // pred_fallthru
    _
  // Predicated region
  $region6: #{de_conv_forward.4} parent=0 // pred_check
    _
  $region7: #{de_conv_forward.4} parent=0 // pred_check_branch
    %13 = sbr.rel (0) target = $region9
  $region8: #{de_conv_forward.4} parent=0 // pred_region
    _
  $region9: #{de_conv_forward.4} parent=0 // pred_fallthru
    _
  // Predicated region
  $region10: #{de_conv_forward.4} parent=0 // pred_check
    _
  $region11: #{de_conv_forward.4} parent=0 // pred_check_branch
    %15 = sbr.rel (0) target = $region13
  $region12: #{de_conv_forward.4} parent=0 // pred_region
    _
  $region13: #{de_conv_forward.4} parent=0 // pred_fallthru
    _
  // Predicated region
  $region14: #{de_conv_forward.4} parent=0 // pred_check
    _
  $region15: #{de_conv_forward.4} parent=0 // pred_check_branch
    %17 = sbr.rel (0) target = $region17
  $region16: #{de_conv_forward.4} parent=0 // pred_region
    _
  $region17: #{de_conv_forward.4} parent=0 // pred_fallthru
    _
  // Predicated region
  $region18: #{de_conv_forward.4} parent=0 // pred_check
    _
  $region19: #{de_conv_forward.4} parent=0 // pred_check_branch
    %19 = sbr.rel (0) target = $region21
  $region20: #{de_conv_forward.4} parent=0 // pred_region
    _
  $region21: #{de_conv_forward.4} parent=0 // pred_fallthru
    _
  %v21 = vld [vmem:[%s0] sm:$0xff]
  %v22 = vld [vmem:[%s0 + $0x8] sm:$0xff]
  %v23 = vld [vmem:[%s0 + $0x10] sm:$0xff]
  %v24 = vld [vmem:[%s0 + $0x18] sm:$0xff]
  %v25 = vld [vmem:[%s0 + $0x20] sm:$0xff]
  %v26 = vld [vmem:[%s0 + $0x28] sm:$0xff]
  %v27 = vld [vmem:[%s0 + $0x30] sm:$0xff]
  %v28 = vld [vmem:[%s0 + $0x38] sm:$0xff]
  %v29 = vld [vmem:[%s0 + $0x40] sm:$0xff]
  %v30 = vld [vmem:[%s0 + $0x48] sm:$0xff]
  %v31 = vld [vmem:[%s0 + $0x50] sm:$0xff]
  %v32 = vld [vmem:[%s0 + $0x58] sm:$0xff]
  %v33 = vld [vmem:[%s0 + $0x60] sm:$0xff]
  %v34 = vld [vmem:[%s0 + $0x68] sm:$0xff]
  %v35 = vld [vmem:[%s0 + $0x70] sm:$0xff]
  %v36 = vld [vmem:[%s0 + $0x78] sm:$0xff]
  %v37 = vld [vmem:[%s0 + $0x80] sm:$0xff]
  %v38 = vld [vmem:[%s0 + $0x88] sm:$0xff]
  %v39 = vld [vmem:[%s0 + $0x90] sm:$0xff]
  %v40 = vld [vmem:[%s0 + $0x98] sm:$0xff]
  %v41 = vld [vmem:[%s0 + $0xa0] sm:$0xff]
  %v42 = vld [vmem:[%s0 + $0xa8] sm:$0xff]
  %v43 = vld [vmem:[%s0 + $0xb0] sm:$0xff]
  %v44 = vld [vmem:[%s0 + $0xb8] sm:$0xff]
  %v45 = vld [vmem:[%s0 + $0xc0] sm:$0xff]
  %v46 = vld [vmem:[%s0 + $0xc8] sm:$0xff]
  %v47 = vld [vmem:[%s0 + $0xd0] sm:$0xff]
  %v48 = vld [vmem:[%s0 + $0xd8] sm:$0xff]
  %v49 = vld [vmem:[%s0 + $0xe0] sm:$0xff]
  %v50 = vld [vmem:[%s0 + $0xe8] sm:$0xff]
  %v51 = vld [vmem:[%s0 + $0xf0] sm:$0xff]
  %v52 = vld [vmem:[%s0 + $0xf8] sm:$0xff]
  %v53 = vld [vmem:[%s0 + $0x100] sm:$0xff]
  %v54 = vld [vmem:[%s0 + $0x108] sm:$0xff]
  %v55 = vld [vmem:[%s0 + $0x110] sm:$0xff]
  %v56 = vld [vmem:[%s0 + $0x118] sm:$0xff]
  %v57 = vld [vmem:[%s0 + $0x120] sm:$0xff]
  %v58 = vld [vmem:[%s0 + $0x128] sm:$0xff]
  %v59 = vld [vmem:[%s0 + $0x130] sm:$0xff]
  %v60 = vld [vmem:[%s0 + $0x138] sm:$0xff]
  %v61 = vld [vmem:[%s0 + $0x140] sm:$0xff]
  %v62 = vld [vmem:[%s0 + $0x148] sm:$0xff]
  %v63 = vld [vmem:[%s0 + $0x150] sm:$0xff]
  %v64 = vld [vmem:[%s0 + $0x158] sm:$0xff]
  %v65 = vld [vmem:[%s0 + $0x160] sm:$0xff]
  %v66 = vld [vmem:[%s0 + $0x168] sm:$0xff]
  %v67 = vld [vmem:[%s0 + $0x170] sm:$0xff]
  %v68 = vld [vmem:[%s0 + $0x178] sm:$0xff]
  %v69 = vld [vmem:[%s0 + $0x180] sm:$0xff]
  %v70 = vld [vmem:[%s0 + $0x188] sm:$0xff]
  %v71 = vld [vmem:[%s0 + $0x190] sm:$0xff]
  %v72 = vld [vmem:[%s0 + $0x198] sm:$0xff]
  %v73 = vld [vmem:[%s0 + $0x1a0] sm:$0xff]
  %v74 = vld [vmem:[%s0 + $0x1a8] sm:$0xff]
  %v75 = vld [vmem:[%s0 + $0x1b0] sm:$0xff]
  %v76 = vld [vmem:[%s0 + $0x1b8] sm:$0xff]
  %v77 = vld [vmem:[%s0 + $0x1c0] sm:$0xff]
  %v78 = vld [vmem:[%s0 + $0x1c8] sm:$0xff]
  %v79 = vld [vmem:[%s0 + $0x1d0] sm:$0xff]
  %v80 = vld [vmem:[%s0 + $0x1d8] sm:$0xff]
  %v81 = vld [vmem:[%s0 + $0x1e0] sm:$0xff]
  %v82 = vld [vmem:[%s0 + $0x1e8] sm:$0xff]
  %v83 = vld [vmem:[%s0 + $0x1f0] sm:$0xff]
  %v84 = vld [vmem:[%s0 + $0x1f8] sm:$0xff]
  %v85 = vld [vmem:[%s1] sm:$0xf]
  %v86 = vld [vmem:[%s1 + $0x4] sm:$0xf]
  %v87 = vld [vmem:[%s1 + $0x8] sm:$0xf]
  %v88 = vld [vmem:[%s1 + $0xc] sm:$0xf]
  %v89 = vld [vmem:[%s1 + $0x10] sm:$0xf]
  %v90 = vld [vmem:[%s1 + $0x14] sm:$0xf]
  %v91 = vld [vmem:[%s1 + $0x18] sm:$0xf]
  %v92 = vld [vmem:[%s1 + $0x1c] sm:$0xf]
  %v93 = vld [vmem:[%s1 + $0x20] sm:$0xf]
  %v94 = vld [vmem:[%s1 + $0x24] sm:$0xf]
  %v95 = vld [vmem:[%s1 + $0x28] sm:$0xf]
  %v96 = vld [vmem:[%s1 + $0x2c] sm:$0xf]
  %v97 = vld [vmem:[%s1 + $0x30] sm:$0xf]
  %v98 = vld [vmem:[%s1 + $0x34] sm:$0xf]
  %v99 = vld [vmem:[%s1 + $0x38] sm:$0xf]
  %v100 = vld [vmem:[%s1 + $0x3c] sm:$0xf]
  %v101 = vld [vmem:[%s1 + $0x40] sm:$0xf]
  %v102 = vld [vmem:[%s1 + $0x44] sm:$0xf]
  %v103 = vld [vmem:[%s2] sm:$0x1]
  %v105 = vperm.slane %v103, 0
  %v171 = vunpack.c.l.b16 %v21
  %v172 = vunpack.c.h.b16 %v21
  %v173 = vunpack.c.l.b16 %v22
  %v174 = vunpack.c.h.b16 %v22
  %v175 = vunpack.c.l.b16 %v23
  %v176 = vunpack.c.h.b16 %v23
  %v177 = vunpack.c.l.b16 %v24
  %v178 = vunpack.c.h.b16 %v24
  %v179 = vunpack.c.l.b16 %v25
  %v180 = vunpack.c.h.b16 %v25
  %v181 = vunpack.c.l.b16 %v26
  %v182 = vunpack.c.h.b16 %v26
  %v183 = vunpack.c.l.b16 %v27
  %v184 = vunpack.c.h.b16 %v27
  %v185 = vunpack.c.l.b16 %v28
  %v186 = vunpack.c.h.b16 %v28
  %v187 = vunpack.c.l.b16 %v29
  %v188 = vunpack.c.h.b16 %v29
  %v189 = vunpack.c.l.b16 %v30
  %v190 = vunpack.c.h.b16 %v30
  %v191 = vunpack.c.l.b16 %v31
  %v192 = vunpack.c.h.b16 %v31
  %v193 = vunpack.c.l.b16 %v32
  %v194 = vunpack.c.h.b16 %v32
  %v195 = vunpack.c.l.b16 %v33
  %v196 = vunpack.c.h.b16 %v33
  %v197 = vunpack.c.l.b16 %v34
  %v198 = vunpack.c.h.b16 %v34
  %v199 = vunpack.c.l.b16 %v35
  %v200 = vunpack.c.h.b16 %v35
  %v201 = vunpack.c.l.b16 %v36
  %v202 = vunpack.c.h.b16 %v36
  %v203 = vunpack.c.l.b16 %v37
  %v204 = vunpack.c.h.b16 %v37
  %v205 = vunpack.c.l.b16 %v38
  %v206 = vunpack.c.h.b16 %v38
  %v207 = vunpack.c.l.b16 %v39
  %v208 = vunpack.c.h.b16 %v39
  %v209 = vunpack.c.l.b16 %v40
  %v210 = vunpack.c.h.b16 %v40
  %v211 = vunpack.c.l.b16 %v41
  %v212 = vunpack.c.h.b16 %v41
  %v213 = vunpack.c.l.b16 %v42
  %v214 = vunpack.c.h.b16 %v42
  %v215 = vunpack.c.l.b16 %v43
  %v216 = vunpack.c.h.b16 %v43
  %v217 = vunpack.c.l.b16 %v44
  %v218 = vunpack.c.h.b16 %v44
  %v219 = vunpack.c.l.b16 %v45
  %v220 = vunpack.c.h.b16 %v45
  %v221 = vunpack.c.l.b16 %v46
  %v222 = vunpack.c.h.b16 %v46
  %v223 = vunpack.c.l.b16 %v47
  %v224 = vunpack.c.h.b16 %v47
  %v225 = vunpack.c.l.b16 %v48
  %v226 = vunpack.c.h.b16 %v48
  %v227 = vunpack.c.l.b16 %v49
  %v228 = vunpack.c.h.b16 %v49
  %v229 = vunpack.c.l.b16 %v50
  %v230 = vunpack.c.h.b16 %v50
  %v231 = vunpack.c.l.b16 %v51
  %v232 = vunpack.c.h.b16 %v51
  %v233 = vunpack.c.l.b16 %v52
  %v234 = vunpack.c.h.b16 %v52
  %v235 = vunpack.c.l.b16 %v53
  %v236 = vunpack.c.h.b16 %v53
  %v237 = vunpack.c.l.b16 %v54
  %v238 = vunpack.c.h.b16 %v54
  %v239 = vunpack.c.l.b16 %v55
  %v240 = vunpack.c.h.b16 %v55
  %v241 = vunpack.c.l.b16 %v56
  %v242 = vunpack.c.h.b16 %v56
  %v243 = vunpack.c.l.b16 %v57
  %v244 = vunpack.c.h.b16 %v57
  %v245 = vunpack.c.l.b16 %v58
  %v246 = vunpack.c.h.b16 %v58
  %v247 = vunpack.c.l.b16 %v59
  %v248 = vunpack.c.h.b16 %v59
  %v249 = vunpack.c.l.b16 %v60
  %v250 = vunpack.c.h.b16 %v60
  %v251 = vunpack.c.l.b16 %v61
  %v252 = vunpack.c.h.b16 %v61
  %v253 = vunpack.c.l.b16 %v62
  %v254 = vunpack.c.h.b16 %v62
  %v255 = vunpack.c.l.b16 %v63
  %v256 = vunpack.c.h.b16 %v63
  %v257 = vunpack.c.l.b16 %v64
  %v258 = vunpack.c.h.b16 %v64
  %v259 = vunpack.c.l.b16 %v65
  %v260 = vunpack.c.h.b16 %v65
  %v261 = vunpack.c.l.b16 %v66
  %v262 = vunpack.c.h.b16 %v66
  %v263 = vunpack.c.l.b16 %v67
  %v264 = vunpack.c.h.b16 %v67
  %v265 = vunpack.c.l.b16 %v68
  %v266 = vunpack.c.h.b16 %v68
  %v267 = vunpack.c.l.b16 %v69
  %v268 = vunpack.c.h.b16 %v69
  %v269 = vunpack.c.l.b16 %v70
  %v270 = vunpack.c.h.b16 %v70
  %v271 = vunpack.c.l.b16 %v71
  %v272 = vunpack.c.h.b16 %v71
  %v273 = vunpack.c.l.b16 %v72
  %v274 = vunpack.c.h.b16 %v72
  %v275 = vunpack.c.l.b16 %v73
  %v276 = vunpack.c.h.b16 %v73
  %v277 = vunpack.c.l.b16 %v74
  %v278 = vunpack.c.h.b16 %v74
  %v279 = vunpack.c.l.b16 %v75
  %v280 = vunpack.c.h.b16 %v75
  %v281 = vunpack.c.l.b16 %v76
  %v282 = vunpack.c.h.b16 %v76
  %v283 = vunpack.c.l.b16 %v77
  %v284 = vunpack.c.h.b16 %v77
  %v285 = vunpack.c.l.b16 %v78
  %v286 = vunpack.c.h.b16 %v78
  %v287 = vunpack.c.l.b16 %v79
  %v288 = vunpack.c.h.b16 %v79
  %v289 = vunpack.c.l.b16 %v80
  %v290 = vunpack.c.h.b16 %v80
  %v291 = vunpack.c.l.b16 %v81
  %v292 = vunpack.c.h.b16 %v81
  %v293 = vunpack.c.l.b16 %v82
  %v294 = vunpack.c.h.b16 %v82
  %v295 = vunpack.c.l.b16 %v83
  %v296 = vunpack.c.h.b16 %v83
  %v297 = vunpack.c.l.b16 %v84
  %v298 = vunpack.c.h.b16 %v84
  %v299 = vpack.c.b16 %v173, %v171
  %v300 = vpack.c.b16 %v174, %v172
  %v301 = vpack.c.b16 %v177, %v175
  %v302 = vpack.c.b16 %v178, %v176
  %v303 = vpack.c.b16 %v181, %v179
  %v304 = vpack.c.b16 %v182, %v180
  %v305 = vpack.c.b16 %v185, %v183
  %v306 = vpack.c.b16 %v186, %v184
  %v307 = vpack.c.b16 %v189, %v187
  %v308 = vpack.c.b16 %v190, %v188
  %v309 = vpack.c.b16 %v193, %v191
  %v310 = vpack.c.b16 %v194, %v192
  %v311 = vpack.c.b16 %v197, %v195
  %v312 = vpack.c.b16 %v198, %v196
  %v313 = vpack.c.b16 %v201, %v199
  %v314 = vpack.c.b16 %v202, %v200
  %v315 = vpack.c.b16 %v205, %v203
  %v316 = vpack.c.b16 %v206, %v204
  %v317 = vpack.c.b16 %v209, %v207
  %v318 = vpack.c.b16 %v210, %v208
  %v319 = vpack.c.b16 %v213, %v211
  %v320 = vpack.c.b16 %v214, %v212
  %v321 = vpack.c.b16 %v217, %v215
  %v322 = vpack.c.b16 %v218, %v216
  %v323 = vpack.c.b16 %v221, %v219
  %v324 = vpack.c.b16 %v222, %v220
  %v325 = vpack.c.b16 %v225, %v223
  %v326 = vpack.c.b16 %v226, %v224
  %v327 = vpack.c.b16 %v229, %v227
  %v328 = vpack.c.b16 %v230, %v228
  %v329 = vpack.c.b16 %v233, %v231
  %v330 = vpack.c.b16 %v234, %v232
  %v331 = vpack.c.b16 %v237, %v235
  %v332 = vpack.c.b16 %v238, %v236
  %v333 = vpack.c.b16 %v241, %v239
  %v334 = vpack.c.b16 %v242, %v240
  %v335 = vpack.c.b16 %v245, %v243
  %v336 = vpack.c.b16 %v246, %v244
  %v337 = vpack.c.b16 %v249, %v247
  %v338 = vpack.c.b16 %v250, %v248
  %v339 = vpack.c.b16 %v253, %v251
  %v340 = vpack.c.b16 %v254, %v252
  %v341 = vpack.c.b16 %v257, %v255
  %v342 = vpack.c.b16 %v258, %v256
  %v343 = vpack.c.b16 %v261, %v259
  %v344 = vpack.c.b16 %v262, %v260
  %v345 = vpack.c.b16 %v265, %v263
  %v346 = vpack.c.b16 %v266, %v264
  %v347 = vpack.c.b16 %v269, %v267
  %v348 = vpack.c.b16 %v270, %v268
  %v349 = vpack.c.b16 %v273, %v271
  %v350 = vpack.c.b16 %v274, %v272
  %v351 = vpack.c.b16 %v277, %v275
  %v352 = vpack.c.b16 %v278, %v276
  %v353 = vpack.c.b16 %v281, %v279
  %v354 = vpack.c.b16 %v282, %v280
  %v355 = vpack.c.b16 %v285, %v283
  %v356 = vpack.c.b16 %v286, %v284
  %v357 = vpack.c.b16 %v289, %v287
  %v358 = vpack.c.b16 %v290, %v288
  %v359 = vpack.c.b16 %v293, %v291
  %v360 = vpack.c.b16 %v294, %v292
  %v361 = vpack.c.b16 %v297, %v295
  %v362 = vpack.c.b16 %v298, %v296
  %v413 = vunpack.c.l.b16 %v85
  %v414 = vunpack.c.l.b16 %v86
  %v415 = vunpack.c.l.b16 %v87
  %v416 = vunpack.c.l.b16 %v88
  %v417 = vunpack.c.l.b16 %v89
  %v418 = vunpack.c.l.b16 %v90
  %v419 = vunpack.c.l.b16 %v91
  %v420 = vunpack.c.l.b16 %v92
  %v421 = vunpack.c.l.b16 %v93
  %v422 = vunpack.c.l.b16 %v94
  %v423 = vunpack.c.l.b16 %v95
  %v424 = vunpack.c.l.b16 %v96
  %v425 = vunpack.c.l.b16 %v97
  %v426 = vunpack.c.l.b16 %v98
  %v427 = vunpack.c.l.b16 %v99
  %v428 = vunpack.c.l.b16 %v100
  %v429 = vunpack.c.l.b16 %v101
  %v430 = vunpack.c.l.b16 %v102
  %v431 = vpack.c.b16 %v414, %v413
  %v432 = vpack.c.b16 %v416, %v415
  %v433 = vpack.c.b16 %v418, %v417
  %v434 = vpack.c.b16 %v420, %v419
  %v435 = vpack.c.b16 %v422, %v421
  %v436 = vpack.c.b16 %v424, %v423
  %v437 = vpack.c.b16 %v426, %v425
  %v438 = vpack.c.b16 %v428, %v427
  %v439 = vpack.c.b16 %v430, %v429
  %vm449 = vcmask 130048
  %v451 = vsel %vm449, %v300, 0
  %v454 = vsel %vm449, %v302, 0
  %v457 = vsel %vm449, %v304, 0
  %v460 = vsel %vm449, %v306, 0
  %v463 = vsel %vm449, %v308, 0
  %v466 = vsel %vm449, %v310, 0
  %v469 = vsel %vm449, %v312, 0
  %v472 = vsel %vm449, %v314, 0
  %v475 = vsel %vm449, %v316, 0
  %v478 = vsel %vm449, %v318, 0
  %v481 = vsel %vm449, %v320, 0
  %v484 = vsel %vm449, %v322, 0
  %v487 = vsel %vm449, %v324, 0
  %v490 = vsel %vm449, %v326, 0
  %v493 = vsel %vm449, %v328, 0
  %v496 = vsel %vm449, %v330, 0
  %v499 = vsel %vm449, %v332, 0
  %v502 = vsel %vm449, %v334, 0
  %v505 = vsel %vm449, %v336, 0
  %v508 = vsel %vm449, %v338, 0
  %v511 = vsel %vm449, %v340, 0
  %v514 = vsel %vm449, %v342, 0
  %v517 = vsel %vm449, %v344, 0
  %v520 = vsel %vm449, %v346, 0
  %v523 = vsel %vm449, %v348, 0
  %v526 = vsel %vm449, %v350, 0
  %v529 = vsel %vm449, %v352, 0
  %v532 = vsel %vm449, %v354, 0
  %v535 = vsel %vm449, %v356, 0
  %v538 = vsel %vm449, %v358, 0
  %v541 = vsel %vm449, %v360, 0
  %v544 = vsel %vm449, %v362, 0
  %546 = vmatpush.bf16.msra.mxu0 %v438
  %547 = vmatpush.bf16.msra.mxu0 %v437
  %548 = vmatpush.bf16.msra.mxu0 %v436
  %549 = vmatpush.bf16.msra.mxu0 %v435
  %550 = vmatpush.bf16.msra.mxu0 %v434
  %551 = vmatpush.bf16.msra.mxu0 %v433
  %552 = vmatpush.bf16.msra.mxu0 %v432
  %553 = vmatpush.bf16.msra.mxu0 %v431
  %554 = vmatmul.bf16.gmra.mxu0 %v299
  %v555 = vpop.f32.mrf.mxu0
  %v556 = vadd.f32 %v105, %v555
  %v557 = vpop.f32.mrf.mxu0
  %v558 = vadd.f32 %v105, %v557
  %559 = vmatmul.bf16.gmra.mxu0 %v301
  %v560 = vpop.f32.mrf.mxu0
  %v561 = vadd.f32 %v105, %v560
  %v562 = vpop.f32.mrf.mxu0
  %v563 = vadd.f32 %v105, %v562
  %564 = vmatmul.bf16.gmra.mxu0 %v303
  %v565 = vpop.f32.mrf.mxu0
  %v566 = vadd.f32 %v105, %v565
  %v567 = vpop.f32.mrf.mxu0
  %v568 = vadd.f32 %v105, %v567
  %569 = vmatmul.bf16.gmra.mxu0 %v305
  %v570 = vpop.f32.mrf.mxu0
  %v571 = vadd.f32 %v105, %v570
  %v572 = vpop.f32.mrf.mxu0
  %v573 = vadd.f32 %v105, %v572
  %574 = vmatmul.bf16.gmra.mxu0 %v307
  %v575 = vpop.f32.mrf.mxu0
  %v576 = vadd.f32 %v105, %v575
  %v577 = vpop.f32.mrf.mxu0
  %v578 = vadd.f32 %v105, %v577
  %579 = vmatmul.bf16.gmra.mxu0 %v309
  %v580 = vpop.f32.mrf.mxu0
  %v581 = vadd.f32 %v105, %v580
  %v582 = vpop.f32.mrf.mxu0
  %v583 = vadd.f32 %v105, %v582
  %584 = vmatmul.bf16.gmra.mxu0 %v311
  %v585 = vpop.f32.mrf.mxu0
  %v586 = vadd.f32 %v105, %v585
  %v587 = vpop.f32.mrf.mxu0
  %v588 = vadd.f32 %v105, %v587
  %589 = vmatmul.bf16.gmra.mxu0 %v313
  %v590 = vpop.f32.mrf.mxu0
  %v591 = vadd.f32 %v105, %v590
  %v592 = vpop.f32.mrf.mxu0
  %v593 = vadd.f32 %v105, %v592
  %594 = vmatmul.bf16.gmra.mxu0 %v315
  %v595 = vpop.f32.mrf.mxu0
  %v596 = vadd.f32 %v105, %v595
  %v597 = vpop.f32.mrf.mxu0
  %v598 = vadd.f32 %v105, %v597
  %599 = vmatmul.bf16.gmra.mxu0 %v317
  %v600 = vpop.f32.mrf.mxu0
  %v601 = vadd.f32 %v105, %v600
  %v602 = vpop.f32.mrf.mxu0
  %v603 = vadd.f32 %v105, %v602
  %604 = vmatmul.bf16.gmra.mxu0 %v319
  %v605 = vpop.f32.mrf.mxu0
  %v606 = vadd.f32 %v105, %v605
  %v607 = vpop.f32.mrf.mxu0
  %v608 = vadd.f32 %v105, %v607
  %609 = vmatmul.bf16.gmra.mxu0 %v321
  %v610 = vpop.f32.mrf.mxu0
  %v611 = vadd.f32 %v105, %v610
  %v612 = vpop.f32.mrf.mxu0
  %v613 = vadd.f32 %v105, %v612
  %614 = vmatmul.bf16.gmra.mxu0 %v323
  %v615 = vpop.f32.mrf.mxu0
  %v616 = vadd.f32 %v105, %v615
  %v617 = vpop.f32.mrf.mxu0
  %v618 = vadd.f32 %v105, %v617
  %619 = vmatmul.bf16.gmra.mxu0 %v325
  %v620 = vpop.f32.mrf.mxu0
  %v621 = vadd.f32 %v105, %v620
  %v622 = vpop.f32.mrf.mxu0
  %v623 = vadd.f32 %v105, %v622
  %624 = vmatmul.bf16.gmra.mxu0 %v327
  %v625 = vpop.f32.mrf.mxu0
  %v626 = vadd.f32 %v105, %v625
  %v627 = vpop.f32.mrf.mxu0
  %v628 = vadd.f32 %v105, %v627
  %629 = vmatmul.bf16.gmra.mxu0 %v329
  %v630 = vpop.f32.mrf.mxu0
  %v631 = vadd.f32 %v105, %v630
  %v632 = vpop.f32.mrf.mxu0
  %v633 = vadd.f32 %v105, %v632
  %634 = vmatmul.bf16.gmra.mxu0 %v331
  %v635 = vpop.f32.mrf.mxu0
  %v636 = vadd.f32 %v105, %v635
  %v637 = vpop.f32.mrf.mxu0
  %v638 = vadd.f32 %v105, %v637
  %639 = vmatmul.bf16.gmra.mxu0 %v333
  %v640 = vpop.f32.mrf.mxu0
  %v641 = vadd.f32 %v105, %v640
  %v642 = vpop.f32.mrf.mxu0
  %v643 = vadd.f32 %v105, %v642
  %644 = vmatmul.bf16.gmra.mxu0 %v335
  %v645 = vpop.f32.mrf.mxu0
  %v646 = vadd.f32 %v105, %v645
  %v647 = vpop.f32.mrf.mxu0
  %v648 = vadd.f32 %v105, %v647
  %649 = vmatmul.bf16.gmra.mxu0 %v337
  %v650 = vpop.f32.mrf.mxu0
  %v651 = vadd.f32 %v105, %v650
  %v652 = vpop.f32.mrf.mxu0
  %v653 = vadd.f32 %v105, %v652
  %654 = vmatmul.bf16.gmra.mxu0 %v339
  %v655 = vpop.f32.mrf.mxu0
  %v656 = vadd.f32 %v105, %v655
  %v657 = vpop.f32.mrf.mxu0
  %v658 = vadd.f32 %v105, %v657
  %659 = vmatmul.bf16.gmra.mxu0 %v341
  %v660 = vpop.f32.mrf.mxu0
  %v661 = vadd.f32 %v105, %v660
  %v662 = vpop.f32.mrf.mxu0
  %v663 = vadd.f32 %v105, %v662
  %664 = vmatmul.bf16.gmra.mxu0 %v343
  %v665 = vpop.f32.mrf.mxu0
  %v666 = vadd.f32 %v105, %v665
  %v667 = vpop.f32.mrf.mxu0
  %v668 = vadd.f32 %v105, %v667
  %669 = vmatmul.bf16.gmra.mxu0 %v345
  %v670 = vpop.f32.mrf.mxu0
  %v671 = vadd.f32 %v105, %v670
  %v672 = vpop.f32.mrf.mxu0
  %v673 = vadd.f32 %v105, %v672
  %674 = vmatmul.bf16.gmra.mxu0 %v347
  %v675 = vpop.f32.mrf.mxu0
  %v676 = vadd.f32 %v105, %v675
  %v677 = vpop.f32.mrf.mxu0
  %v678 = vadd.f32 %v105, %v677
  %679 = vmatmul.bf16.gmra.mxu0 %v349
  %v680 = vpop.f32.mrf.mxu0
  %v681 = vadd.f32 %v105, %v680
  %v682 = vpop.f32.mrf.mxu0
  %v683 = vadd.f32 %v105, %v682
  %684 = vmatmul.bf16.gmra.mxu0 %v351
  %v685 = vpop.f32.mrf.mxu0
  %v686 = vadd.f32 %v105, %v685
  %v687 = vpop.f32.mrf.mxu0
  %v688 = vadd.f32 %v105, %v687
  %689 = vmatmul.bf16.gmra.mxu0 %v353
  %v690 = vpop.f32.mrf.mxu0
  %v691 = vadd.f32 %v105, %v690
  %v692 = vpop.f32.mrf.mxu0
  %v693 = vadd.f32 %v105, %v692
  %694 = vmatmul.bf16.gmra.mxu0 %v355
  %v695 = vpop.f32.mrf.mxu0
  %v696 = vadd.f32 %v105, %v695
  %v697 = vpop.f32.mrf.mxu0
  %v698 = vadd.f32 %v105, %v697
  %699 = vmatmul.bf16.gmra.mxu0 %v357
  %v700 = vpop.f32.mrf.mxu0
  %v701 = vadd.f32 %v105, %v700
  %v702 = vpop.f32.mrf.mxu0
  %v703 = vadd.f32 %v105, %v702
  %704 = vmatmul.bf16.gmra.mxu0 %v359
  %v705 = vpop.f32.mrf.mxu0
  %v706 = vadd.f32 %v105, %v705
  %v707 = vpop.f32.mrf.mxu0
  %v708 = vadd.f32 %v105, %v707
  %709 = vmatmul.bf16.gmra.mxu0 %v361
  %v710 = vpop.f32.mrf.mxu0
  %v711 = vadd.f32 %v105, %v710
  %v712 = vpop.f32.mrf.mxu0
  %v713 = vadd.f32 %v105, %v712
  %714 = vdwg.mxu0
  %715 = vmatpush.bf16.msra.mxu0 0
  %716 = vmatpush.bf16.msra.mxu0 0
  %717 = vmatpush.bf16.msra.mxu0 0
  %718 = vmatpush.bf16.msra.mxu0 0
  %719 = vmatpush.bf16.msra.mxu0 0
  %720 = vmatpush.bf16.msra.mxu0 0
  %721 = vmatpush.bf16.msra.mxu0 0
  %722 = vmatpush.bf16.msra.mxu0 %v439
  %723 = vmatmul.bf16.gmra.mxu0 %v451
  %v724 = vpop.f32.mrf.mxu0
  %v725 = vadd.f32 %v556, %v724
  %v726 = vpop.f32.mrf.mxu0
  %v727 = vadd.f32 %v558, %v726
  %728 = vmatmul.bf16.gmra.mxu0 %v454
  %v729 = vpop.f32.mrf.mxu0
  %v730 = vadd.f32 %v561, %v729
  %v731 = vpop.f32.mrf.mxu0
  %v732 = vadd.f32 %v563, %v731
  %733 = vmatmul.bf16.gmra.mxu0 %v457
  %v734 = vpop.f32.mrf.mxu0
  %v735 = vadd.f32 %v566, %v734
  %v736 = vpop.f32.mrf.mxu0
  %v737 = vadd.f32 %v568, %v736
  %738 = vmatmul.bf16.gmra.mxu0 %v460
  %v739 = vpop.f32.mrf.mxu0
  %v740 = vadd.f32 %v571, %v739
  %v741 = vpop.f32.mrf.mxu0
  %v742 = vadd.f32 %v573, %v741
  %743 = vmatmul.bf16.gmra.mxu0 %v463
  %v744 = vpop.f32.mrf.mxu0
  %v745 = vadd.f32 %v576, %v744
  %v746 = vpop.f32.mrf.mxu0
  %v747 = vadd.f32 %v578, %v746
  %748 = vmatmul.bf16.gmra.mxu0 %v466
  %v749 = vpop.f32.mrf.mxu0
  %v750 = vadd.f32 %v581, %v749
  %v751 = vpop.f32.mrf.mxu0
  %v752 = vadd.f32 %v583, %v751
  %753 = vmatmul.bf16.gmra.mxu0 %v469
  %v754 = vpop.f32.mrf.mxu0
  %v755 = vadd.f32 %v586, %v754
  %v756 = vpop.f32.mrf.mxu0
  %v757 = vadd.f32 %v588, %v756
  %758 = vmatmul.bf16.gmra.mxu0 %v472
  %v759 = vpop.f32.mrf.mxu0
  %v760 = vadd.f32 %v591, %v759
  %v761 = vpop.f32.mrf.mxu0
  %v762 = vadd.f32 %v593, %v761
  %763 = vmatmul.bf16.gmra.mxu0 %v475
  %v764 = vpop.f32.mrf.mxu0
  %v765 = vadd.f32 %v596, %v764
  %v766 = vpop.f32.mrf.mxu0
  %v767 = vadd.f32 %v598, %v766
  %768 = vmatmul.bf16.gmra.mxu0 %v478
  %v769 = vpop.f32.mrf.mxu0
  %v770 = vadd.f32 %v601, %v769
  %v771 = vpop.f32.mrf.mxu0
  %v772 = vadd.f32 %v603, %v771
  %773 = vmatmul.bf16.gmra.mxu0 %v481
  %v774 = vpop.f32.mrf.mxu0
  %v775 = vadd.f32 %v606, %v774
  %v776 = vpop.f32.mrf.mxu0
  %v777 = vadd.f32 %v608, %v776
  %778 = vmatmul.bf16.gmra.mxu0 %v484
  %v779 = vpop.f32.mrf.mxu0
  %v780 = vadd.f32 %v611, %v779
  %v781 = vpop.f32.mrf.mxu0
  %v782 = vadd.f32 %v613, %v781
  %783 = vmatmul.bf16.gmra.mxu0 %v487
  %v784 = vpop.f32.mrf.mxu0
  %v785 = vadd.f32 %v616, %v784
  %v786 = vpop.f32.mrf.mxu0
  %v787 = vadd.f32 %v618, %v786
  %788 = vmatmul.bf16.gmra.mxu0 %v490
  %v789 = vpop.f32.mrf.mxu0
  %v790 = vadd.f32 %v621, %v789
  %v791 = vpop.f32.mrf.mxu0
  %v792 = vadd.f32 %v623, %v791
  %793 = vmatmul.bf16.gmra.mxu0 %v493
  %v794 = vpop.f32.mrf.mxu0
  %v795 = vadd.f32 %v626, %v794
  %v796 = vpop.f32.mrf.mxu0
  %v797 = vadd.f32 %v628, %v796
  %798 = vmatmul.bf16.gmra.mxu0 %v496
  %v799 = vpop.f32.mrf.mxu0
  %v800 = vadd.f32 %v631, %v799
  %v801 = vpop.f32.mrf.mxu0
  %v802 = vadd.f32 %v633, %v801
  %803 = vmatmul.bf16.gmra.mxu0 %v499
  %v804 = vpop.f32.mrf.mxu0
  %v805 = vadd.f32 %v636, %v804
  %v806 = vpop.f32.mrf.mxu0
  %v807 = vadd.f32 %v638, %v806
  %808 = vmatmul.bf16.gmra.mxu0 %v502
  %v809 = vpop.f32.mrf.mxu0
  %v810 = vadd.f32 %v641, %v809
  %v811 = vpop.f32.mrf.mxu0
  %v812 = vadd.f32 %v643, %v811
  %813 = vmatmul.bf16.gmra.mxu0 %v505
  %v814 = vpop.f32.mrf.mxu0
  %v815 = vadd.f32 %v646, %v814
  %v816 = vpop.f32.mrf.mxu0
  %v817 = vadd.f32 %v648, %v816
  %818 = vmatmul.bf16.gmra.mxu0 %v508
  %v819 = vpop.f32.mrf.mxu0
  %v820 = vadd.f32 %v651, %v819
  %v821 = vpop.f32.mrf.mxu0
  %v822 = vadd.f32 %v653, %v821
  %823 = vmatmul.bf16.gmra.mxu0 %v511
  %v824 = vpop.f32.mrf.mxu0
  %v825 = vadd.f32 %v656, %v824
  %v826 = vpop.f32.mrf.mxu0
  %v827 = vadd.f32 %v658, %v826
  %828 = vmatmul.bf16.gmra.mxu0 %v514
  %v829 = vpop.f32.mrf.mxu0
  %v830 = vadd.f32 %v661, %v829
  %v831 = vpop.f32.mrf.mxu0
  %v832 = vadd.f32 %v663, %v831
  %833 = vmatmul.bf16.gmra.mxu0 %v517
  %v834 = vpop.f32.mrf.mxu0
  %v835 = vadd.f32 %v666, %v834
  %v836 = vpop.f32.mrf.mxu0
  %v837 = vadd.f32 %v668, %v836
  %838 = vmatmul.bf16.gmra.mxu0 %v520
  %v839 = vpop.f32.mrf.mxu0
  %v840 = vadd.f32 %v671, %v839
  %v841 = vpop.f32.mrf.mxu0
  %v842 = vadd.f32 %v673, %v841
  %843 = vmatmul.bf16.gmra.mxu0 %v523
  %v844 = vpop.f32.mrf.mxu0
  %v845 = vadd.f32 %v676, %v844
  %v846 = vpop.f32.mrf.mxu0
  %v847 = vadd.f32 %v678, %v846
  %848 = vmatmul.bf16.gmra.mxu0 %v526
  %v849 = vpop.f32.mrf.mxu0
  %v850 = vadd.f32 %v681, %v849
  %v851 = vpop.f32.mrf.mxu0
  %v852 = vadd.f32 %v683, %v851
  %853 = vmatmul.bf16.gmra.mxu0 %v529
  %v854 = vpop.f32.mrf.mxu0
  %v855 = vadd.f32 %v686, %v854
  %v856 = vpop.f32.mrf.mxu0
  %v857 = vadd.f32 %v688, %v856
  %858 = vmatmul.bf16.gmra.mxu0 %v532
  %v859 = vpop.f32.mrf.mxu0
  %v860 = vadd.f32 %v691, %v859
  %v861 = vpop.f32.mrf.mxu0
  %v862 = vadd.f32 %v693, %v861
  %863 = vmatmul.bf16.gmra.mxu0 %v535
  %v864 = vpop.f32.mrf.mxu0
  %v865 = vadd.f32 %v696, %v864
  %v866 = vpop.f32.mrf.mxu0
  %v867 = vadd.f32 %v698, %v866
  %868 = vmatmul.bf16.gmra.mxu0 %v538
  %v869 = vpop.f32.mrf.mxu0
  %v870 = vadd.f32 %v701, %v869
  %v871 = vpop.f32.mrf.mxu0
  %v872 = vadd.f32 %v703, %v871
  %873 = vmatmul.bf16.gmra.mxu0 %v541
  %v874 = vpop.f32.mrf.mxu0
  %v875 = vadd.f32 %v706, %v874
  %v876 = vpop.f32.mrf.mxu0
  %v877 = vadd.f32 %v708, %v876
  %878 = vmatmul.bf16.gmra.mxu0 %v544
  %v879 = vpop.f32.mrf.mxu0
  %v880 = vadd.f32 %v711, %v879
  %v881 = vpop.f32.mrf.mxu0
  %v882 = vadd.f32 %v713, %v881
  %883 = vdwg.mxu0
  %v884 = vld [vmem:[%s3] sm:$0x1]
  %v886 = vperm.slane %v884, 0
  %v888 = vmul.f32 %v725, %v886
  %v889 = vmul.f32 %v727, %v886
  %v890 = vmul.f32 %v730, %v886
  %v891 = vmul.f32 %v732, %v886
  %v892 = vmul.f32 %v735, %v886
  %v893 = vmul.f32 %v737, %v886
  %v894 = vmul.f32 %v740, %v886
  %v895 = vmul.f32 %v742, %v886
  %v896 = vmul.f32 %v745, %v886
  %v897 = vmul.f32 %v747, %v886
  %v898 = vmul.f32 %v750, %v886
  %v899 = vmul.f32 %v752, %v886
  %v900 = vmul.f32 %v755, %v886
  %v901 = vmul.f32 %v757, %v886
  %v902 = vmul.f32 %v760, %v886
  %v903 = vmul.f32 %v762, %v886
  %v904 = vmul.f32 %v765, %v886
  %v905 = vmul.f32 %v767, %v886
  %v906 = vmul.f32 %v770, %v886
  %v907 = vmul.f32 %v772, %v886
  %v908 = vmul.f32 %v775, %v886
  %v909 = vmul.f32 %v777, %v886
  %v910 = vmul.f32 %v780, %v886
  %v911 = vmul.f32 %v782, %v886
  %v912 = vmul.f32 %v785, %v886
  %v913 = vmul.f32 %v787, %v886
  %v914 = vmul.f32 %v790, %v886
  %v915 = vmul.f32 %v792, %v886
  %v916 = vmul.f32 %v795, %v886
  %v917 = vmul.f32 %v797, %v886
  %v918 = vmul.f32 %v800, %v886
  %v919 = vmul.f32 %v802, %v886
  %v920 = vmul.f32 %v805, %v886
  %v921 = vmul.f32 %v807, %v886
  %v922 = vmul.f32 %v810, %v886
  %v923 = vmul.f32 %v812, %v886
  %v924 = vmul.f32 %v815, %v886
  %v925 = vmul.f32 %v817, %v886
  %v926 = vmul.f32 %v820, %v886
  %v927 = vmul.f32 %v822, %v886
  %v928 = vmul.f32 %v825, %v886
  %v929 = vmul.f32 %v827, %v886
  %v930 = vmul.f32 %v830, %v886
  %v931 = vmul.f32 %v832, %v886
  %v932 = vmul.f32 %v835, %v886
  %v933 = vmul.f32 %v837, %v886
  %v934 = vmul.f32 %v840, %v886
  %v935 = vmul.f32 %v842, %v886
  %v936 = vmul.f32 %v845, %v886
  %v937 = vmul.f32 %v847, %v886
  %v938 = vmul.f32 %v850, %v886
  %v939 = vmul.f32 %v852, %v886
  %v940 = vmul.f32 %v855, %v886
  %v941 = vmul.f32 %v857, %v886
  %v942 = vmul.f32 %v860, %v886
  %v943 = vmul.f32 %v862, %v886
  %v944 = vmul.f32 %v865, %v886
  %v945 = vmul.f32 %v867, %v886
  %v946 = vmul.f32 %v870, %v886
  %v947 = vmul.f32 %v872, %v886
  %v948 = vmul.f32 %v875, %v886
  %v949 = vmul.f32 %v877, %v886
  %v950 = vmul.f32 %v880, %v886
  %v951 = vmul.f32 %v882, %v886
  %v952 = vld [vmem:[%s4] sm:$0x1]
  %v954 = vperm.slane %v952, 0
  %v956 = vadd.f32 %v888, %v954
  %v957 = vadd.f32 %v889, %v954
  %v958 = vadd.f32 %v890, %v954
  %v959 = vadd.f32 %v891, %v954
  %v960 = vadd.f32 %v892, %v954
  %v961 = vadd.f32 %v893, %v954
  %v962 = vadd.f32 %v894, %v954
  %v963 = vadd.f32 %v895, %v954
  %v964 = vadd.f32 %v896, %v954
  %v965 = vadd.f32 %v897, %v954
  %v966 = vadd.f32 %v898, %v954
  %v967 = vadd.f32 %v899, %v954
  %v968 = vadd.f32 %v900, %v954
  %v969 = vadd.f32 %v901, %v954
  %v970 = vadd.f32 %v902, %v954
  %v971 = vadd.f32 %v903, %v954
  %v972 = vadd.f32 %v904, %v954
  %v973 = vadd.f32 %v905, %v954
  %v974 = vadd.f32 %v906, %v954
  %v975 = vadd.f32 %v907, %v954
  %v976 = vadd.f32 %v908, %v954
  %v977 = vadd.f32 %v909, %v954
  %v978 = vadd.f32 %v910, %v954
  %v979 = vadd.f32 %v911, %v954
  %v980 = vadd.f32 %v912, %v954
  %v981 = vadd.f32 %v913, %v954
  %v982 = vadd.f32 %v914, %v954
  %v983 = vadd.f32 %v915, %v954
  %v984 = vadd.f32 %v916, %v954
  %v985 = vadd.f32 %v917, %v954
  %v986 = vadd.f32 %v918, %v954
  %v987 = vadd.f32 %v919, %v954
  %v988 = vadd.f32 %v920, %v954
  %v989 = vadd.f32 %v921, %v954
  %v990 = vadd.f32 %v922, %v954
  %v991 = vadd.f32 %v923, %v954
  %v992 = vadd.f32 %v924, %v954
  %v993 = vadd.f32 %v925, %v954
  %v994 = vadd.f32 %v926, %v954
  %v995 = vadd.f32 %v927, %v954
  %v996 = vadd.f32 %v928, %v954
  %v997 = vadd.f32 %v929, %v954
  %v998 = vadd.f32 %v930, %v954
  %v999 = vadd.f32 %v931, %v954
  %v1000 = vadd.f32 %v932, %v954
  %v1001 = vadd.f32 %v933, %v954
  %v1002 = vadd.f32 %v934, %v954
  %v1003 = vadd.f32 %v935, %v954
  %v1004 = vadd.f32 %v936, %v954
  %v1005 = vadd.f32 %v937, %v954
  %v1006 = vadd.f32 %v938, %v954
  %v1007 = vadd.f32 %v939, %v954
  %v1008 = vadd.f32 %v940, %v954
  %v1009 = vadd.f32 %v941, %v954
  %v1010 = vadd.f32 %v942, %v954
  %v1011 = vadd.f32 %v943, %v954
  %v1012 = vadd.f32 %v944, %v954
  %v1013 = vadd.f32 %v945, %v954
  %v1014 = vadd.f32 %v946, %v954
  %v1015 = vadd.f32 %v947, %v954
  %v1016 = vadd.f32 %v948, %v954
  %v1017 = vadd.f32 %v949, %v954
  %v1018 = vadd.f32 %v950, %v954
  %v1019 = vadd.f32 %v951, %v954
  %v1020 = vmax.f32 %v956, 0.0
  %v1021 = vmax.f32 %v957, 0.0
  %v1022 = vmax.f32 %v958, 0.0
  %v1023 = vmax.f32 %v959, 0.0
  %v1024 = vmax.f32 %v960, 0.0
  %v1025 = vmax.f32 %v961, 0.0
  %v1026 = vmax.f32 %v962, 0.0
  %v1027 = vmax.f32 %v963, 0.0
  %v1028 = vmax.f32 %v964, 0.0
  %v1029 = vmax.f32 %v965, 0.0
  %v1030 = vmax.f32 %v966, 0.0
  %v1031 = vmax.f32 %v967, 0.0
  %v1032 = vmax.f32 %v968, 0.0
  %v1033 = vmax.f32 %v969, 0.0
  %v1034 = vmax.f32 %v970, 0.0
  %v1035 = vmax.f32 %v971, 0.0
  %v1036 = vmax.f32 %v972, 0.0
  %v1037 = vmax.f32 %v973, 0.0
  %v1038 = vmax.f32 %v974, 0.0
  %v1039 = vmax.f32 %v975, 0.0
  %v1040 = vmax.f32 %v976, 0.0
  %v1041 = vmax.f32 %v977, 0.0
  %v1042 = vmax.f32 %v978, 0.0
  %v1043 = vmax.f32 %v979, 0.0
  %v1044 = vmax.f32 %v980, 0.0
  %v1045 = vmax.f32 %v981, 0.0
  %v1046 = vmax.f32 %v982, 0.0
  %v1047 = vmax.f32 %v983, 0.0
  %v1048 = vmax.f32 %v984, 0.0
  %v1049 = vmax.f32 %v985, 0.0
  %v1050 = vmax.f32 %v986, 0.0
  %v1051 = vmax.f32 %v987, 0.0
  %v1052 = vmax.f32 %v988, 0.0
  %v1053 = vmax.f32 %v989, 0.0
  %v1054 = vmax.f32 %v990, 0.0
  %v1055 = vmax.f32 %v991, 0.0
  %v1056 = vmax.f32 %v992, 0.0
  %v1057 = vmax.f32 %v993, 0.0
  %v1058 = vmax.f32 %v994, 0.0
  %v1059 = vmax.f32 %v995, 0.0
  %v1060 = vmax.f32 %v996, 0.0
  %v1061 = vmax.f32 %v997, 0.0
  %v1062 = vmax.f32 %v998, 0.0
  %v1063 = vmax.f32 %v999, 0.0
  %v1064 = vmax.f32 %v1000, 0.0
  %v1065 = vmax.f32 %v1001, 0.0
  %v1066 = vmax.f32 %v1002, 0.0
  %v1067 = vmax.f32 %v1003, 0.0
  %v1068 = vmax.f32 %v1004, 0.0
  %v1069 = vmax.f32 %v1005, 0.0
  %v1070 = vmax.f32 %v1006, 0.0
  %v1071 = vmax.f32 %v1007, 0.0
  %v1072 = vmax.f32 %v1008, 0.0
  %v1073 = vmax.f32 %v1009, 0.0
  %v1074 = vmax.f32 %v1010, 0.0
  %v1075 = vmax.f32 %v1011, 0.0
  %v1076 = vmax.f32 %v1012, 0.0
  %v1077 = vmax.f32 %v1013, 0.0
  %v1078 = vmax.f32 %v1014, 0.0
  %v1079 = vmax.f32 %v1015, 0.0
  %v1080 = vmax.f32 %v1016, 0.0
  %v1081 = vmax.f32 %v1017, 0.0
  %v1082 = vmax.f32 %v1018, 0.0
  %v1083 = vmax.f32 %v1019, 0.0
  %v1084 = vpack.c.bf16 %v1020, %v1020
  %v1085 = vpack.c.bf16 %v1021, %v1021
  %v1086 = vpack.c.bf16 %v1022, %v1022
  %v1087 = vpack.c.bf16 %v1023, %v1023
  %v1088 = vpack.c.bf16 %v1024, %v1024
  %v1089 = vpack.c.bf16 %v1025, %v1025
  %v1090 = vpack.c.bf16 %v1026, %v1026
  %v1091 = vpack.c.bf16 %v1027, %v1027
  %v1092 = vpack.c.bf16 %v1028, %v1028
  %v1093 = vpack.c.bf16 %v1029, %v1029
  %v1094 = vpack.c.bf16 %v1030, %v1030
  %v1095 = vpack.c.bf16 %v1031, %v1031
  %v1096 = vpack.c.bf16 %v1032, %v1032
  %v1097 = vpack.c.bf16 %v1033, %v1033
  %v1098 = vpack.c.bf16 %v1034, %v1034
  %v1099 = vpack.c.bf16 %v1035, %v1035
  %v1100 = vpack.c.bf16 %v1036, %v1036
  %v1101 = vpack.c.bf16 %v1037, %v1037
  %v1102 = vpack.c.bf16 %v1038, %v1038
  %v1103 = vpack.c.bf16 %v1039, %v1039
  %v1104 = vpack.c.bf16 %v1040, %v1040
  %v1105 = vpack.c.bf16 %v1041, %v1041
  %v1106 = vpack.c.bf16 %v1042, %v1042
  %v1107 = vpack.c.bf16 %v1043, %v1043
  %v1108 = vpack.c.bf16 %v1044, %v1044
  %v1109 = vpack.c.bf16 %v1045, %v1045
  %v1110 = vpack.c.bf16 %v1046, %v1046
  %v1111 = vpack.c.bf16 %v1047, %v1047
  %v1112 = vpack.c.bf16 %v1048, %v1048
  %v1113 = vpack.c.bf16 %v1049, %v1049
  %v1114 = vpack.c.bf16 %v1050, %v1050
  %v1115 = vpack.c.bf16 %v1051, %v1051
  %v1116 = vpack.c.bf16 %v1052, %v1052
  %v1117 = vpack.c.bf16 %v1053, %v1053
  %v1118 = vpack.c.bf16 %v1054, %v1054
  %v1119 = vpack.c.bf16 %v1055, %v1055
  %v1120 = vpack.c.bf16 %v1056, %v1056
  %v1121 = vpack.c.bf16 %v1057, %v1057
  %v1122 = vpack.c.bf16 %v1058, %v1058
  %v1123 = vpack.c.bf16 %v1059, %v1059
  %v1124 = vpack.c.bf16 %v1060, %v1060
  %v1125 = vpack.c.bf16 %v1061, %v1061
  %v1126 = vpack.c.bf16 %v1062, %v1062
  %v1127 = vpack.c.bf16 %v1063, %v1063
  %v1128 = vpack.c.bf16 %v1064, %v1064
  %v1129 = vpack.c.bf16 %v1065, %v1065
  %v1130 = vpack.c.bf16 %v1066, %v1066
  %v1131 = vpack.c.bf16 %v1067, %v1067
  %v1132 = vpack.c.bf16 %v1068, %v1068
  %v1133 = vpack.c.bf16 %v1069, %v1069
  %v1134 = vpack.c.bf16 %v1070, %v1070
  %v1135 = vpack.c.bf16 %v1071, %v1071
  %v1136 = vpack.c.bf16 %v1072, %v1072
  %v1137 = vpack.c.bf16 %v1073, %v1073
  %v1138 = vpack.c.bf16 %v1074, %v1074
  %v1139 = vpack.c.bf16 %v1075, %v1075
  %v1140 = vpack.c.bf16 %v1076, %v1076
  %v1141 = vpack.c.bf16 %v1077, %v1077
  %v1142 = vpack.c.bf16 %v1078, %v1078
  %v1143 = vpack.c.bf16 %v1079, %v1079
  %v1144 = vpack.c.bf16 %v1080, %v1080
  %v1145 = vpack.c.bf16 %v1081, %v1081
  %v1146 = vpack.c.bf16 %v1082, %v1082
  %v1147 = vpack.c.bf16 %v1083, %v1083
  %vm1148 = vcmask 60416
  %1149 = vst.msk [vmem:[%s5] sm:$0xf] %vm1148, %v1084
  %1150 = vst.msk [vmem:[%s5 + $0x4] sm:$0xf] %vm1148, %v1085
  %1151 = vst.msk [vmem:[%s5 + $0x8] sm:$0xf] %vm1148, %v1086
  %1152 = vst.msk [vmem:[%s5 + $0xc] sm:$0xf] %vm1148, %v1087
  %1153 = vst.msk [vmem:[%s5 + $0x10] sm:$0xf] %vm1148, %v1088
  %1154 = vst.msk [vmem:[%s5 + $0x14] sm:$0xf] %vm1148, %v1089
  %1155 = vst.msk [vmem:[%s5 + $0x18] sm:$0xf] %vm1148, %v1090
  %1156 = vst.msk [vmem:[%s5 + $0x1c] sm:$0xf] %vm1148, %v1091
  %1157 = vst.msk [vmem:[%s5 + $0x20] sm:$0xf] %vm1148, %v1092
  %1158 = vst.msk [vmem:[%s5 + $0x24] sm:$0xf] %vm1148, %v1093
  %1159 = vst.msk [vmem:[%s5 + $0x28] sm:$0xf] %vm1148, %v1094
  %1160 = vst.msk [vmem:[%s5 + $0x2c] sm:$0xf] %vm1148, %v1095
  %1161 = vst.msk [vmem:[%s5 + $0x30] sm:$0xf] %vm1148, %v1096
  %1162 = vst.msk [vmem:[%s5 + $0x34] sm:$0xf] %vm1148, %v1097
  %1163 = vst.msk [vmem:[%s5 + $0x38] sm:$0xf] %vm1148, %v1098
  %1164 = vst.msk [vmem:[%s5 + $0x3c] sm:$0xf] %vm1148, %v1099
  %1165 = vst.msk [vmem:[%s5 + $0x40] sm:$0xf] %vm1148, %v1100
  %1166 = vst.msk [vmem:[%s5 + $0x44] sm:$0xf] %vm1148, %v1101
  %1167 = vst.msk [vmem:[%s5 + $0x48] sm:$0xf] %vm1148, %v1102
  %1168 = vst.msk [vmem:[%s5 + $0x4c] sm:$0xf] %vm1148, %v1103
  %1169 = vst.msk [vmem:[%s5 + $0x50] sm:$0xf] %vm1148, %v1104
  %1170 = vst.msk [vmem:[%s5 + $0x54] sm:$0xf] %vm1148, %v1105
  %1171 = vst.msk [vmem:[%s5 + $0x58] sm:$0xf] %vm1148, %v1106
  %1172 = vst.msk [vmem:[%s5 + $0x5c] sm:$0xf] %vm1148, %v1107
  %1173 = vst.msk [vmem:[%s5 + $0x60] sm:$0xf] %vm1148, %v1108
  %1174 = vst.msk [vmem:[%s5 + $0x64] sm:$0xf] %vm1148, %v1109
  %1175 = vst.msk [vmem:[%s5 + $0x68] sm:$0xf] %vm1148, %v1110
  %1176 = vst.msk [vmem:[%s5 + $0x6c] sm:$0xf] %vm1148, %v1111
  %1177 = vst.msk [vmem:[%s5 + $0x70] sm:$0xf] %vm1148, %v1112
  %1178 = vst.msk [vmem:[%s5 + $0x74] sm:$0xf] %vm1148, %v1113
  %1179 = vst.msk [vmem:[%s5 + $0x78] sm:$0xf] %vm1148, %v1114
  %1180 = vst.msk [vmem:[%s5 + $0x7c] sm:$0xf] %vm1148, %v1115
  %1181 = vst.msk [vmem:[%s5 + $0x80] sm:$0xf] %vm1148, %v1116
  %1182 = vst.msk [vmem:[%s5 + $0x84] sm:$0xf] %vm1148, %v1117
  %1183 = vst.msk [vmem:[%s5 + $0x88] sm:$0xf] %vm1148, %v1118
  %1184 = vst.msk [vmem:[%s5 + $0x8c] sm:$0xf] %vm1148, %v1119
  %1185 = vst.msk [vmem:[%s5 + $0x90] sm:$0xf] %vm1148, %v1120
  %1186 = vst.msk [vmem:[%s5 + $0x94] sm:$0xf] %vm1148, %v1121
  %1187 = vst.msk [vmem:[%s5 + $0x98] sm:$0xf] %vm1148, %v1122
  %1188 = vst.msk [vmem:[%s5 + $0x9c] sm:$0xf] %vm1148, %v1123
  %1189 = vst.msk [vmem:[%s5 + $0xa0] sm:$0xf] %vm1148, %v1124
  %1190 = vst.msk [vmem:[%s5 + $0xa4] sm:$0xf] %vm1148, %v1125
  %1191 = vst.msk [vmem:[%s5 + $0xa8] sm:$0xf] %vm1148, %v1126
  %1192 = vst.msk [vmem:[%s5 + $0xac] sm:$0xf] %vm1148, %v1127
  %1193 = vst.msk [vmem:[%s5 + $0xb0] sm:$0xf] %vm1148, %v1128
  %1194 = vst.msk [vmem:[%s5 + $0xb4] sm:$0xf] %vm1148, %v1129
  %1195 = vst.msk [vmem:[%s5 + $0xb8] sm:$0xf] %vm1148, %v1130
  %1196 = vst.msk [vmem:[%s5 + $0xbc] sm:$0xf] %vm1148, %v1131
  %1197 = vst.msk [vmem:[%s5 + $0xc0] sm:$0xf] %vm1148, %v1132
  %1198 = vst.msk [vmem:[%s5 + $0xc4] sm:$0xf] %vm1148, %v1133
  %1199 = vst.msk [vmem:[%s5 + $0xc8] sm:$0xf] %vm1148, %v1134
  %1200 = vst.msk [vmem:[%s5 + $0xcc] sm:$0xf] %vm1148, %v1135
  %1201 = vst.msk [vmem:[%s5 + $0xd0] sm:$0xf] %vm1148, %v1136
  %1202 = vst.msk [vmem:[%s5 + $0xd4] sm:$0xf] %vm1148, %v1137
  %1203 = vst.msk [vmem:[%s5 + $0xd8] sm:$0xf] %vm1148, %v1138
  %1204 = vst.msk [vmem:[%s5 + $0xdc] sm:$0xf] %vm1148, %v1139
  %1205 = vst.msk [vmem:[%s5 + $0xe0] sm:$0xf] %vm1148, %v1140
  %1206 = vst.msk [vmem:[%s5 + $0xe4] sm:$0xf] %vm1148, %v1141
  %1207 = vst.msk [vmem:[%s5 + $0xe8] sm:$0xf] %vm1148, %v1142
  %1208 = vst.msk [vmem:[%s5 + $0xec] sm:$0xf] %vm1148, %v1143
  %1209 = vst.msk [vmem:[%s5 + $0xf0] sm:$0xf] %vm1148, %v1144
  %1210 = vst.msk [vmem:[%s5 + $0xf4] sm:$0xf] %vm1148, %v1145
  %1211 = vst.msk [vmem:[%s5 + $0xf8] sm:$0xf] %vm1148, %v1146
  %1212 = vst.msk [vmem:[%s5 + $0xfc] sm:$0xf] %vm1148, %v1147
  // Predicated region
  $region22: #{de_conv_forward.4} parent=0 // pred_check
    _
  $region23: #{de_conv_forward.4} parent=0 // pred_check_branch
    %1214 = sbr.rel (0) target = $region25
  $region24: #{de_conv_forward.4} parent=0 // pred_region
    _
  $region25: #{de_conv_forward.4} parent=0 // pred_fallthru
    _
  // Predicated region
  $region26: #{de_conv_forward.4} parent=0 // pred_check
    _
  $region27: #{de_conv_forward.4} parent=0 // pred_check_branch
    %1216 = sbr.rel (0) target = $region29
  $region28: #{de_conv_forward.4} parent=0 // pred_region
    _
  $region29: #{de_conv_forward.4} parent=0 // pred_fallthru
    _

// kernel: de_conv_forward.5
$region0: #{de_conv_forward.5}
  #allocation0 [shape = 'u32[]', space=smem, size = 0x4, offset = 0x4, fixed_abs, tag = 'smem constant byte address 0x4 - core index']
  #allocation1 [shape = 'u32[72,128]{1,0:T(1,128)}', space=vmem, size = 0x9000, scoped, tag = 'internal scratch']
  %s0 = inlined_call_operand.vmem [shape: bf16[512,72], index: 0, kind: input, shape index: {}]
  %s1 = inlined_call_operand.vmem [shape: bf16[512,144], index: 1, kind: input, shape index: {}]
  %s2 = inlined_call_operand.vmem [shape: bf16[72,8], index: 2, kind: input, shape index: {}]
  %s3 = inlined_call_operand.vmem [shape: bf16[144,8], index: 3, kind: input, shape index: {}]
  %s4 = inlined_call_operand.vmem [shape: f32[1,8], index: 4, kind: input, shape index: {}]
  %s5 = inlined_call_operand.vmem [shape: f32[512,8], index: 5, kind: output, shape index: {}]
  %s6 = sld [smem:[#allocation0]]
  $region30: #{de_conv_forward.5} parent=0
    _
  %s8 = ssub.s32 1, %s6
  %s9 = scalar_select 0, %s8, %s6
  // Predicated region
  $region2: #{de_conv_forward.5} parent=0 // pred_check
    _
  $region3: #{de_conv_forward.5} parent=0 // pred_check_branch
    %11 = sbr.rel (0) target = $region5
  $region4: #{de_conv_forward.5} parent=0 // pred_region
    _
  $region5: #{de_conv_forward.5} parent=0 // pred_fallthru
    _
  // Predicated region
  $region6: #{de_conv_forward.5} parent=0 // pred_check
    _
  $region7: #{de_conv_forward.5} parent=0 // pred_check_branch
    %13 = sbr.rel (0) target = $region9
  $region8: #{de_conv_forward.5} parent=0 // pred_region
    _
  $region9: #{de_conv_forward.5} parent=0 // pred_fallthru
    _
  // Predicated region
  $region10: #{de_conv_forward.5} parent=0 // pred_check
    _
  $region11: #{de_conv_forward.5} parent=0 // pred_check_branch
    %15 = sbr.rel (0) target = $region13
  $region12: #{de_conv_forward.5} parent=0 // pred_region
    _
  $region13: #{de_conv_forward.5} parent=0 // pred_fallthru
    _
  // Predicated region
  $region14: #{de_conv_forward.5} parent=0 // pred_check
    _
  $region15: #{de_conv_forward.5} parent=0 // pred_check_branch
    %17 = sbr.rel (0) target = $region17
  $region16: #{de_conv_forward.5} parent=0 // pred_region
    _
  $region17: #{de_conv_forward.5} parent=0 // pred_fallthru
    _
  // Predicated region
  $region18: #{de_conv_forward.5} parent=0 // pred_check
    _
  $region19: #{de_conv_forward.5} parent=0 // pred_check_branch
    %19 = sbr.rel (0) target = $region21
  $region20: #{de_conv_forward.5} parent=0 // pred_region
    _
  $region21: #{de_conv_forward.5} parent=0 // pred_fallthru
    _
  %v21 = vld [vmem:[%s0] sm:$0xf]
  %v22 = vld [vmem:[%s0 + $0x4] sm:$0xf]
  %v23 = vld [vmem:[%s0 + $0x8] sm:$0xf]
  %v24 = vld [vmem:[%s0 + $0xc] sm:$0xf]
  %v25 = vld [vmem:[%s0 + $0x10] sm:$0xf]
  %v26 = vld [vmem:[%s0 + $0x14] sm:$0xf]
  %v27 = vld [vmem:[%s0 + $0x18] sm:$0xf]
  %v28 = vld [vmem:[%s0 + $0x1c] sm:$0xf]
  %v29 = vld [vmem:[%s0 + $0x20] sm:$0xf]
  %v30 = vld [vmem:[%s0 + $0x24] sm:$0xf]
  %v31 = vld [vmem:[%s0 + $0x28] sm:$0xf]
  %v32 = vld [vmem:[%s0 + $0x2c] sm:$0xf]
  %v33 = vld [vmem:[%s0 + $0x30] sm:$0xf]
  %v34 = vld [vmem:[%s0 + $0x34] sm:$0xf]
  %v35 = vld [vmem:[%s0 + $0x38] sm:$0xf]
  %v36 = vld [vmem:[%s0 + $0x3c] sm:$0xf]
  %v37 = vld [vmem:[%s0 + $0x40] sm:$0xf]
  %v38 = vld [vmem:[%s0 + $0x44] sm:$0xf]
  %v39 = vld [vmem:[%s0 + $0x48] sm:$0xf]
  %v40 = vld [vmem:[%s0 + $0x4c] sm:$0xf]
  %v41 = vld [vmem:[%s0 + $0x50] sm:$0xf]
  %v42 = vld [vmem:[%s0 + $0x54] sm:$0xf]
  %v43 = vld [vmem:[%s0 + $0x58] sm:$0xf]
  %v44 = vld [vmem:[%s0 + $0x5c] sm:$0xf]
  %v45 = vld [vmem:[%s0 + $0x60] sm:$0xf]
  %v46 = vld [vmem:[%s0 + $0x64] sm:$0xf]
  %v47 = vld [vmem:[%s0 + $0x68] sm:$0xf]
  %v48 = vld [vmem:[%s0 + $0x6c] sm:$0xf]
  %v49 = vld [vmem:[%s0 + $0x70] sm:$0xf]
  %v50 = vld [vmem:[%s0 + $0x74] sm:$0xf]
  %v51 = vld [vmem:[%s0 + $0x78] sm:$0xf]
  %v52 = vld [vmem:[%s0 + $0x7c] sm:$0xf]
  %v53 = vld [vmem:[%s0 + $0x80] sm:$0xf]
  %v54 = vld [vmem:[%s0 + $0x84] sm:$0xf]
  %v55 = vld [vmem:[%s0 + $0x88] sm:$0xf]
  %v56 = vld [vmem:[%s0 + $0x8c] sm:$0xf]
  %v57 = vld [vmem:[%s0 + $0x90] sm:$0xf]
  %v58 = vld [vmem:[%s0 + $0x94] sm:$0xf]
  %v59 = vld [vmem:[%s0 + $0x98] sm:$0xf]
  %v60 = vld [vmem:[%s0 + $0x9c] sm:$0xf]
  %v61 = vld [vmem:[%s0 + $0xa0] sm:$0xf]
  %v62 = vld [vmem:[%s0 + $0xa4] sm:$0xf]
  %v63 = vld [vmem:[%s0 + $0xa8] sm:$0xf]
  %v64 = vld [vmem:[%s0 + $0xac] sm:$0xf]
  %v65 = vld [vmem:[%s0 + $0xb0] sm:$0xf]
  %v66 = vld [vmem:[%s0 + $0xb4] sm:$0xf]
  %v67 = vld [vmem:[%s0 + $0xb8] sm:$0xf]
  %v68 = vld [vmem:[%s0 + $0xbc] sm:$0xf]
  %v69 = vld [vmem:[%s0 + $0xc0] sm:$0xf]
  %v70 = vld [vmem:[%s0 + $0xc4] sm:$0xf]
  %v71 = vld [vmem:[%s0 + $0xc8] sm:$0xf]
  %v72 = vld [vmem:[%s0 + $0xcc] sm:$0xf]
  %v73 = vld [vmem:[%s0 + $0xd0] sm:$0xf]
  %v74 = vld [vmem:[%s0 + $0xd4] sm:$0xf]
  %v75 = vld [vmem:[%s0 + $0xd8] sm:$0xf]
  %v76 = vld [vmem:[%s0 + $0xdc] sm:$0xf]
  %v77 = vld [vmem:[%s0 + $0xe0] sm:$0xf]
  %v78 = vld [vmem:[%s0 + $0xe4] sm:$0xf]
  %v79 = vld [vmem:[%s0 + $0xe8] sm:$0xf]
  %v80 = vld [vmem:[%s0 + $0xec] sm:$0xf]
  %v81 = vld [vmem:[%s0 + $0xf0] sm:$0xf]
  %v82 = vld [vmem:[%s0 + $0xf4] sm:$0xf]
  %v83 = vld [vmem:[%s0 + $0xf8] sm:$0xf]
  %v84 = vld [vmem:[%s0 + $0xfc] sm:$0xf]
  %v85 = vld [vmem:[%s2] sm:$0xf]
  %v86 = vld [vmem:[%s2 + $0x4] sm:$0xf]
  %v87 = vld [vmem:[%s2 + $0x8] sm:$0xf]
  %v88 = vld [vmem:[%s2 + $0xc] sm:$0xf]
  %v89 = vld [vmem:[%s2 + $0x10] sm:$0xf]
  %v90 = vld [vmem:[%s2 + $0x14] sm:$0xf]
  %v91 = vld [vmem:[%s2 + $0x18] sm:$0xf]
  %v92 = vld [vmem:[%s2 + $0x1c] sm:$0xf]
  %v93 = vld [vmem:[%s2 + $0x20] sm:$0xf]
  %v94 = vld [vmem:[%s1] sm:$0xff]
  %v95 = vld [vmem:[%s1 + $0x8] sm:$0xff]
  %v96 = vld [vmem:[%s1 + $0x10] sm:$0xff]
  %v97 = vld [vmem:[%s1 + $0x18] sm:$0xff]
  %v98 = vld [vmem:[%s1 + $0x20] sm:$0xff]
  %v99 = vld [vmem:[%s1 + $0x28] sm:$0xff]
  %v100 = vld [vmem:[%s1 + $0x30] sm:$0xff]
  %v101 = vld [vmem:[%s1 + $0x38] sm:$0xff]
  %v102 = vld [vmem:[%s1 + $0x40] sm:$0xff]
  %v103 = vld [vmem:[%s1 + $0x48] sm:$0xff]
  %v104 = vld [vmem:[%s1 + $0x50] sm:$0xff]
  %v105 = vld [vmem:[%s1 + $0x58] sm:$0xff]
  %v106 = vld [vmem:[%s1 + $0x60] sm:$0xff]
  %v107 = vld [vmem:[%s1 + $0x68] sm:$0xff]
  %v108 = vld [vmem:[%s1 + $0x70] sm:$0xff]
  %v109 = vld [vmem:[%s1 + $0x78] sm:$0xff]
  %v110 = vld [vmem:[%s1 + $0x80] sm:$0xff]
  %v111 = vld [vmem:[%s1 + $0x88] sm:$0xff]
  %v112 = vld [vmem:[%s1 + $0x90] sm:$0xff]
  %v113 = vld [vmem:[%s1 + $0x98] sm:$0xff]
  %v114 = vld [vmem:[%s1 + $0xa0] sm:$0xff]
  %v115 = vld [vmem:[%s1 + $0xa8] sm:$0xff]
  %v116 = vld [vmem:[%s1 + $0xb0] sm:$0xff]
  %v117 = vld [vmem:[%s1 + $0xb8] sm:$0xff]
  %v118 = vld [vmem:[%s1 + $0xc0] sm:$0xff]
  %v119 = vld [vmem:[%s1 + $0xc8] sm:$0xff]
  %v120 = vld [vmem:[%s1 + $0xd0] sm:$0xff]
  %v121 = vld [vmem:[%s1 + $0xd8] sm:$0xff]
  %v122 = vld [vmem:[%s1 + $0xe0] sm:$0xff]
  %v123 = vld [vmem:[%s1 + $0xe8] sm:$0xff]
  %v124 = vld [vmem:[%s1 + $0xf0] sm:$0xff]
  %v125 = vld [vmem:[%s1 + $0xf8] sm:$0xff]
  %v126 = vld [vmem:[%s1 + $0x100] sm:$0xff]
  %v127 = vld [vmem:[%s1 + $0x108] sm:$0xff]
  %v128 = vld [vmem:[%s1 + $0x110] sm:$0xff]
  %v129 = vld [vmem:[%s1 + $0x118] sm:$0xff]
  %v130 = vld [vmem:[%s1 + $0x120] sm:$0xff]
  %v131 = vld [vmem:[%s1 + $0x128] sm:$0xff]
  %v132 = vld [vmem:[%s1 + $0x130] sm:$0xff]
  %v133 = vld [vmem:[%s1 + $0x138] sm:$0xff]
  %v134 = vld [vmem:[%s1 + $0x140] sm:$0xff]
  %v135 = vld [vmem:[%s1 + $0x148] sm:$0xff]
  %v136 = vld [vmem:[%s1 + $0x150] sm:$0xff]
  %v137 = vld [vmem:[%s1 + $0x158] sm:$0xff]
  %v138 = vld [vmem:[%s1 + $0x160] sm:$0xff]
  %v139 = vld [vmem:[%s1 + $0x168] sm:$0xff]
  %v140 = vld [vmem:[%s1 + $0x170] sm:$0xff]
  %v141 = vld [vmem:[%s1 + $0x178] sm:$0xff]
  %v142 = vld [vmem:[%s1 + $0x180] sm:$0xff]
  %v143 = vld [vmem:[%s1 + $0x188] sm:$0xff]
  %v144 = vld [vmem:[%s1 + $0x190] sm:$0xff]
  %v145 = vld [vmem:[%s1 + $0x198] sm:$0xff]
  %v146 = vld [vmem:[%s1 + $0x1a0] sm:$0xff]
  %v147 = vld [vmem:[%s1 + $0x1a8] sm:$0xff]
  %v148 = vld [vmem:[%s1 + $0x1b0] sm:$0xff]
  %v149 = vld [vmem:[%s1 + $0x1b8] sm:$0xff]
  %v150 = vld [vmem:[%s1 + $0x1c0] sm:$0xff]
  %v151 = vld [vmem:[%s1 + $0x1c8] sm:$0xff]
  %v152 = vld [vmem:[%s1 + $0x1d0] sm:$0xff]
  %v153 = vld [vmem:[%s1 + $0x1d8] sm:$0xff]
  %v154 = vld [vmem:[%s1 + $0x1e0] sm:$0xff]
  %v155 = vld [vmem:[%s1 + $0x1e8] sm:$0xff]
  %v156 = vld [vmem:[%s1 + $0x1f0] sm:$0xff]
  %v157 = vld [vmem:[%s1 + $0x1f8] sm:$0xff]
  %v158 = vld [vmem:[%s3] sm:$0xf]
  %v159 = vld [vmem:[%s3 + $0x4] sm:$0xf]
  %v160 = vld [vmem:[%s3 + $0x8] sm:$0xf]
  %v161 = vld [vmem:[%s3 + $0xc] sm:$0xf]
  %v162 = vld [vmem:[%s3 + $0x10] sm:$0xf]
  %v163 = vld [vmem:[%s3 + $0x14] sm:$0xf]
  %v164 = vld [vmem:[%s3 + $0x18] sm:$0xf]
  %v165 = vld [vmem:[%s3 + $0x1c] sm:$0xf]
  %v166 = vld [vmem:[%s3 + $0x20] sm:$0xf]
  %v167 = vld [vmem:[%s3 + $0x24] sm:$0xf]
  %v168 = vld [vmem:[%s3 + $0x28] sm:$0xf]
  %v169 = vld [vmem:[%s3 + $0x2c] sm:$0xf]
  %v170 = vld [vmem:[%s3 + $0x30] sm:$0xf]
  %v171 = vld [vmem:[%s3 + $0x34] sm:$0xf]
  %v172 = vld [vmem:[%s3 + $0x38] sm:$0xf]
  %v173 = vld [vmem:[%s3 + $0x3c] sm:$0xf]
  %v174 = vld [vmem:[%s3 + $0x40] sm:$0xf]
  %v175 = vld [vmem:[%s3 + $0x44] sm:$0xf]
  %v240 = vunpack.c.l.b16 %v94
  %v241 = vunpack.c.h.b16 %v94
  %v242 = vunpack.c.l.b16 %v95
  %v243 = vunpack.c.h.b16 %v95
  %v244 = vunpack.c.l.b16 %v96
  %v245 = vunpack.c.h.b16 %v96
  %v246 = vunpack.c.l.b16 %v97
  %v247 = vunpack.c.h.b16 %v97
  %v248 = vunpack.c.l.b16 %v98
  %v249 = vunpack.c.h.b16 %v98
  %v250 = vunpack.c.l.b16 %v99
  %v251 = vunpack.c.h.b16 %v99
  %v252 = vunpack.c.l.b16 %v100
  %v253 = vunpack.c.h.b16 %v100
  %v254 = vunpack.c.l.b16 %v101
  %v255 = vunpack.c.h.b16 %v101
  %v256 = vunpack.c.l.b16 %v102
  %v257 = vunpack.c.h.b16 %v102
  %v258 = vunpack.c.l.b16 %v103
  %v259 = vunpack.c.h.b16 %v103
  %v260 = vunpack.c.l.b16 %v104
  %v261 = vunpack.c.h.b16 %v104
  %v262 = vunpack.c.l.b16 %v105
  %v263 = vunpack.c.h.b16 %v105
  %v264 = vunpack.c.l.b16 %v106
  %v265 = vunpack.c.h.b16 %v106
  %v266 = vunpack.c.l.b16 %v107
  %v267 = vunpack.c.h.b16 %v107
  %v268 = vunpack.c.l.b16 %v108
  %v269 = vunpack.c.h.b16 %v108
  %v270 = vunpack.c.l.b16 %v109
  %v271 = vunpack.c.h.b16 %v109
  %v272 = vunpack.c.l.b16 %v110
  %v273 = vunpack.c.h.b16 %v110
  %v274 = vunpack.c.l.b16 %v111
  %v275 = vunpack.c.h.b16 %v111
  %v276 = vunpack.c.l.b16 %v112
  %v277 = vunpack.c.h.b16 %v112
  %v278 = vunpack.c.l.b16 %v113
  %v279 = vunpack.c.h.b16 %v113
  %v280 = vunpack.c.l.b16 %v114
  %v281 = vunpack.c.h.b16 %v114
  %v282 = vunpack.c.l.b16 %v115
  %v283 = vunpack.c.h.b16 %v115
  %v284 = vunpack.c.l.b16 %v116
  %v285 = vunpack.c.h.b16 %v116
  %v286 = vunpack.c.l.b16 %v117
  %v287 = vunpack.c.h.b16 %v117
  %v288 = vunpack.c.l.b16 %v118
  %v289 = vunpack.c.h.b16 %v118
  %v290 = vunpack.c.l.b16 %v119
  %v291 = vunpack.c.h.b16 %v119
  %v292 = vunpack.c.l.b16 %v120
  %v293 = vunpack.c.h.b16 %v120
  %v294 = vunpack.c.l.b16 %v121
  %v295 = vunpack.c.h.b16 %v121
  %v296 = vunpack.c.l.b16 %v122
  %v297 = vunpack.c.h.b16 %v122
  %v298 = vunpack.c.l.b16 %v123
  %v299 = vunpack.c.h.b16 %v123
  %v300 = vunpack.c.l.b16 %v124
  %v301 = vunpack.c.h.b16 %v124
  %v302 = vunpack.c.l.b16 %v125
  %v303 = vunpack.c.h.b16 %v125
  %v304 = vunpack.c.l.b16 %v126
  %v305 = vunpack.c.h.b16 %v126
  %v306 = vunpack.c.l.b16 %v127
  %v307 = vunpack.c.h.b16 %v127
  %v308 = vunpack.c.l.b16 %v128
  %v309 = vunpack.c.h.b16 %v128
  %v310 = vunpack.c.l.b16 %v129
  %v311 = vunpack.c.h.b16 %v129
  %v312 = vunpack.c.l.b16 %v130
  %v313 = vunpack.c.h.b16 %v130
  %v314 = vunpack.c.l.b16 %v131
  %v315 = vunpack.c.h.b16 %v131
  %v316 = vunpack.c.l.b16 %v132
  %v317 = vunpack.c.h.b16 %v132
  %v318 = vunpack.c.l.b16 %v133
  %v319 = vunpack.c.h.b16 %v133
  %v320 = vunpack.c.l.b16 %v134
  %v321 = vunpack.c.h.b16 %v134
  %v322 = vunpack.c.l.b16 %v135
  %v323 = vunpack.c.h.b16 %v135
  %v324 = vunpack.c.l.b16 %v136
  %v325 = vunpack.c.h.b16 %v136
  %v326 = vunpack.c.l.b16 %v137
  %v327 = vunpack.c.h.b16 %v137
  %v328 = vunpack.c.l.b16 %v138
  %v329 = vunpack.c.h.b16 %v138
  %v330 = vunpack.c.l.b16 %v139
  %v331 = vunpack.c.h.b16 %v139
  %v332 = vunpack.c.l.b16 %v140
  %v333 = vunpack.c.h.b16 %v140
  %v334 = vunpack.c.l.b16 %v141
  %v335 = vunpack.c.h.b16 %v141
  %v336 = vunpack.c.l.b16 %v142
  %v337 = vunpack.c.h.b16 %v142
  %v338 = vunpack.c.l.b16 %v143
  %v339 = vunpack.c.h.b16 %v143
  %v340 = vunpack.c.l.b16 %v144
  %v341 = vunpack.c.h.b16 %v144
  %v342 = vunpack.c.l.b16 %v145
  %v343 = vunpack.c.h.b16 %v145
  %v344 = vunpack.c.l.b16 %v146
  %v345 = vunpack.c.h.b16 %v146
  %v346 = vunpack.c.l.b16 %v147
  %v347 = vunpack.c.h.b16 %v147
  %v348 = vunpack.c.l.b16 %v148
  %v349 = vunpack.c.h.b16 %v148
  %v350 = vunpack.c.l.b16 %v149
  %v351 = vunpack.c.h.b16 %v149
  %v352 = vunpack.c.l.b16 %v150
  %v353 = vunpack.c.h.b16 %v150
  %v354 = vunpack.c.l.b16 %v151
  %v355 = vunpack.c.h.b16 %v151
  %v356 = vunpack.c.l.b16 %v152
  %v357 = vunpack.c.h.b16 %v152
  %v358 = vunpack.c.l.b16 %v153
  %v359 = vunpack.c.h.b16 %v153
  %v360 = vunpack.c.l.b16 %v154
  %v361 = vunpack.c.h.b16 %v154
  %v362 = vunpack.c.l.b16 %v155
  %v363 = vunpack.c.h.b16 %v155
  %v364 = vunpack.c.l.b16 %v156
  %v365 = vunpack.c.h.b16 %v156
  %v366 = vunpack.c.l.b16 %v157
  %v367 = vunpack.c.h.b16 %v157
  %v368 = vpack.c.b16 %v242, %v240
  %v369 = vpack.c.b16 %v243, %v241
  %v370 = vpack.c.b16 %v246, %v244
  %v371 = vpack.c.b16 %v247, %v245
  %v372 = vpack.c.b16 %v250, %v248
  %v373 = vpack.c.b16 %v251, %v249
  %v374 = vpack.c.b16 %v254, %v252
  %v375 = vpack.c.b16 %v255, %v253
  %v376 = vpack.c.b16 %v258, %v256
  %v377 = vpack.c.b16 %v259, %v257
  %v378 = vpack.c.b16 %v262, %v260
  %v379 = vpack.c.b16 %v263, %v261
  %v380 = vpack.c.b16 %v266, %v264
  %v381 = vpack.c.b16 %v267, %v265
  %v382 = vpack.c.b16 %v270, %v268
  %v383 = vpack.c.b16 %v271, %v269
  %v384 = vpack.c.b16 %v274, %v272
  %v385 = vpack.c.b16 %v275, %v273
  %v386 = vpack.c.b16 %v278, %v276
  %v387 = vpack.c.b16 %v279, %v277
  %v388 = vpack.c.b16 %v282, %v280
  %v389 = vpack.c.b16 %v283, %v281
  %v390 = vpack.c.b16 %v286, %v284
  %v391 = vpack.c.b16 %v287, %v285
  %v392 = vpack.c.b16 %v290, %v288
  %v393 = vpack.c.b16 %v291, %v289
  %v394 = vpack.c.b16 %v294, %v292
  %v395 = vpack.c.b16 %v295, %v293
  %v396 = vpack.c.b16 %v298, %v296
  %v397 = vpack.c.b16 %v299, %v297
  %v398 = vpack.c.b16 %v302, %v300
  %v399 = vpack.c.b16 %v303, %v301
  %v400 = vpack.c.b16 %v306, %v304
  %v401 = vpack.c.b16 %v307, %v305
  %v402 = vpack.c.b16 %v310, %v308
  %v403 = vpack.c.b16 %v311, %v309
  %v404 = vpack.c.b16 %v314, %v312
  %v405 = vpack.c.b16 %v315, %v313
  %v406 = vpack.c.b16 %v318, %v316
  %v407 = vpack.c.b16 %v319, %v317
  %v408 = vpack.c.b16 %v322, %v320
  %v409 = vpack.c.b16 %v323, %v321
  %v410 = vpack.c.b16 %v326, %v324
  %v411 = vpack.c.b16 %v327, %v325
  %v412 = vpack.c.b16 %v330, %v328
  %v413 = vpack.c.b16 %v331, %v329
  %v414 = vpack.c.b16 %v334, %v332
  %v415 = vpack.c.b16 %v335, %v333
  %v416 = vpack.c.b16 %v338, %v336
  %v417 = vpack.c.b16 %v339, %v337
  %v418 = vpack.c.b16 %v342, %v340
  %v419 = vpack.c.b16 %v343, %v341
  %v420 = vpack.c.b16 %v346, %v344
  %v421 = vpack.c.b16 %v347, %v345
  %v422 = vpack.c.b16 %v350, %v348
  %v423 = vpack.c.b16 %v351, %v349
  %v424 = vpack.c.b16 %v354, %v352
  %v425 = vpack.c.b16 %v355, %v353
  %v426 = vpack.c.b16 %v358, %v356
  %v427 = vpack.c.b16 %v359, %v357
  %v428 = vpack.c.b16 %v362, %v360
  %v429 = vpack.c.b16 %v363, %v361
  %v430 = vpack.c.b16 %v366, %v364
  %v431 = vpack.c.b16 %v367, %v365
  %v482 = vunpack.c.l.b16 %v158
  %v483 = vunpack.c.l.b16 %v159
  %v484 = vunpack.c.l.b16 %v160
  %v485 = vunpack.c.l.b16 %v161
  %v486 = vunpack.c.l.b16 %v162
  %v487 = vunpack.c.l.b16 %v163
  %v488 = vunpack.c.l.b16 %v164
  %v489 = vunpack.c.l.b16 %v165
  %v490 = vunpack.c.l.b16 %v166
  %v491 = vunpack.c.l.b16 %v167
  %v492 = vunpack.c.l.b16 %v168
  %v493 = vunpack.c.l.b16 %v169
  %v494 = vunpack.c.l.b16 %v170
  %v495 = vunpack.c.l.b16 %v171
  %v496 = vunpack.c.l.b16 %v172
  %v497 = vunpack.c.l.b16 %v173
  %v498 = vunpack.c.l.b16 %v174
  %v499 = vunpack.c.l.b16 %v175
  %v500 = vpack.c.b16 %v483, %v482
  %v501 = vpack.c.b16 %v485, %v484
  %v502 = vpack.c.b16 %v487, %v486
  %v503 = vpack.c.b16 %v489, %v488
  %v504 = vpack.c.b16 %v491, %v490
  %v505 = vpack.c.b16 %v493, %v492
  %v506 = vpack.c.b16 %v495, %v494
  %v507 = vpack.c.b16 %v497, %v496
  %v508 = vpack.c.b16 %v499, %v498
  %vm518 = vcmask 130048
  %v520 = vsel %vm518, %v369, 0
  %v523 = vsel %vm518, %v371, 0
  %v526 = vsel %vm518, %v373, 0
  %v529 = vsel %vm518, %v375, 0
  %v532 = vsel %vm518, %v377, 0
  %v535 = vsel %vm518, %v379, 0
  %v538 = vsel %vm518, %v381, 0
  %v541 = vsel %vm518, %v383, 0
  %v544 = vsel %vm518, %v385, 0
  %v547 = vsel %vm518, %v387, 0
  %v550 = vsel %vm518, %v389, 0
  %v553 = vsel %vm518, %v391, 0
  %v556 = vsel %vm518, %v393, 0
  %v559 = vsel %vm518, %v395, 0
  %v562 = vsel %vm518, %v397, 0
  %v565 = vsel %vm518, %v399, 0
  %v568 = vsel %vm518, %v401, 0
  %v571 = vsel %vm518, %v403, 0
  %v574 = vsel %vm518, %v405, 0
  %v577 = vsel %vm518, %v407, 0
  %v580 = vsel %vm518, %v409, 0
  %v583 = vsel %vm518, %v411, 0
  %v586 = vsel %vm518, %v413, 0
  %v589 = vsel %vm518, %v415, 0
  %v592 = vsel %vm518, %v417, 0
  %v595 = vsel %vm518, %v419, 0
  %v598 = vsel %vm518, %v421, 0
  %v601 = vsel %vm518, %v423, 0
  %v604 = vsel %vm518, %v425, 0
  %v607 = vsel %vm518, %v427, 0
  %v610 = vsel %vm518, %v429, 0
  %v613 = vsel %vm518, %v431, 0
  %615 = vmatpush.bf16.msra.mxu0 %v507
  %616 = vmatpush.bf16.msra.mxu0 %v506
  %617 = vmatpush.bf16.msra.mxu0 %v505
  %618 = vmatpush.bf16.msra.mxu0 %v504
  %619 = vmatpush.bf16.msra.mxu0 %v503
  %620 = vmatpush.bf16.msra.mxu0 %v502
  %621 = vmatpush.bf16.msra.mxu0 %v501
  %622 = vmatpush.bf16.msra.mxu0 %v500
  %623 = vmatmul.bf16.gmra.mxu0 %v368
  %v624 = vpop.f32.mrf.mxu0
  %v625 = vadd.f32 0.0, %v624
  %v626 = vpop.f32.mrf.mxu0
  %v627 = vadd.f32 0.0, %v626
  %628 = vmatmul.bf16.gmra.mxu0 %v370
  %v629 = vpop.f32.mrf.mxu0
  %v630 = vadd.f32 0.0, %v629
  %v631 = vpop.f32.mrf.mxu0
  %v632 = vadd.f32 0.0, %v631
  %633 = vmatmul.bf16.gmra.mxu0 %v372
  %v634 = vpop.f32.mrf.mxu0
  %v635 = vadd.f32 0.0, %v634
  %v636 = vpop.f32.mrf.mxu0
  %v637 = vadd.f32 0.0, %v636
  %638 = vmatmul.bf16.gmra.mxu0 %v374
  %v639 = vpop.f32.mrf.mxu0
  %v640 = vadd.f32 0.0, %v639
  %v641 = vpop.f32.mrf.mxu0
  %v642 = vadd.f32 0.0, %v641
  %643 = vmatmul.bf16.gmra.mxu0 %v376
  %v644 = vpop.f32.mrf.mxu0
  %v645 = vadd.f32 0.0, %v644
  %v646 = vpop.f32.mrf.mxu0
  %v647 = vadd.f32 0.0, %v646
  %648 = vmatmul.bf16.gmra.mxu0 %v378
  %v649 = vpop.f32.mrf.mxu0
  %v650 = vadd.f32 0.0, %v649
  %v651 = vpop.f32.mrf.mxu0
  %v652 = vadd.f32 0.0, %v651
  %653 = vmatmul.bf16.gmra.mxu0 %v380
  %v654 = vpop.f32.mrf.mxu0
  %v655 = vadd.f32 0.0, %v654
  %v656 = vpop.f32.mrf.mxu0
  %v657 = vadd.f32 0.0, %v656
  %658 = vmatmul.bf16.gmra.mxu0 %v382
  %v659 = vpop.f32.mrf.mxu0
  %v660 = vadd.f32 0.0, %v659
  %v661 = vpop.f32.mrf.mxu0
  %v662 = vadd.f32 0.0, %v661
  %663 = vmatmul.bf16.gmra.mxu0 %v384
  %v664 = vpop.f32.mrf.mxu0
  %v665 = vadd.f32 0.0, %v664
  %v666 = vpop.f32.mrf.mxu0
  %v667 = vadd.f32 0.0, %v666
  %668 = vmatmul.bf16.gmra.mxu0 %v386
  %v669 = vpop.f32.mrf.mxu0
  %v670 = vadd.f32 0.0, %v669
  %v671 = vpop.f32.mrf.mxu0
  %v672 = vadd.f32 0.0, %v671
  %673 = vmatmul.bf16.gmra.mxu0 %v388
  %v674 = vpop.f32.mrf.mxu0
  %v675 = vadd.f32 0.0, %v674
  %v676 = vpop.f32.mrf.mxu0
  %v677 = vadd.f32 0.0, %v676
  %678 = vmatmul.bf16.gmra.mxu0 %v390
  %v679 = vpop.f32.mrf.mxu0
  %v680 = vadd.f32 0.0, %v679
  %v681 = vpop.f32.mrf.mxu0
  %v682 = vadd.f32 0.0, %v681
  %683 = vmatmul.bf16.gmra.mxu0 %v392
  %v684 = vpop.f32.mrf.mxu0
  %v685 = vadd.f32 0.0, %v684
  %v686 = vpop.f32.mrf.mxu0
  %v687 = vadd.f32 0.0, %v686
  %688 = vmatmul.bf16.gmra.mxu0 %v394
  %v689 = vpop.f32.mrf.mxu0
  %v690 = vadd.f32 0.0, %v689
  %v691 = vpop.f32.mrf.mxu0
  %v692 = vadd.f32 0.0, %v691
  %693 = vmatmul.bf16.gmra.mxu0 %v396
  %v694 = vpop.f32.mrf.mxu0
  %v695 = vadd.f32 0.0, %v694
  %v696 = vpop.f32.mrf.mxu0
  %v697 = vadd.f32 0.0, %v696
  %698 = vmatmul.bf16.gmra.mxu0 %v398
  %v699 = vpop.f32.mrf.mxu0
  %v700 = vadd.f32 0.0, %v699
  %v701 = vpop.f32.mrf.mxu0
  %v702 = vadd.f32 0.0, %v701
  %703 = vmatmul.bf16.gmra.mxu0 %v400
  %v704 = vpop.f32.mrf.mxu0
  %v705 = vadd.f32 0.0, %v704
  %v706 = vpop.f32.mrf.mxu0
  %v707 = vadd.f32 0.0, %v706
  %708 = vmatmul.bf16.gmra.mxu0 %v402
  %v709 = vpop.f32.mrf.mxu0
  %v710 = vadd.f32 0.0, %v709
  %v711 = vpop.f32.mrf.mxu0
  %v712 = vadd.f32 0.0, %v711
  %713 = vmatmul.bf16.gmra.mxu0 %v404
  %v714 = vpop.f32.mrf.mxu0
  %v715 = vadd.f32 0.0, %v714
  %v716 = vpop.f32.mrf.mxu0
  %v717 = vadd.f32 0.0, %v716
  %718 = vmatmul.bf16.gmra.mxu0 %v406
  %v719 = vpop.f32.mrf.mxu0
  %v720 = vadd.f32 0.0, %v719
  %v721 = vpop.f32.mrf.mxu0
  %v722 = vadd.f32 0.0, %v721
  %723 = vmatmul.bf16.gmra.mxu0 %v408
  %v724 = vpop.f32.mrf.mxu0
  %v725 = vadd.f32 0.0, %v724
  %v726 = vpop.f32.mrf.mxu0
  %v727 = vadd.f32 0.0, %v726
  %728 = vmatmul.bf16.gmra.mxu0 %v410
  %v729 = vpop.f32.mrf.mxu0
  %v730 = vadd.f32 0.0, %v729
  %v731 = vpop.f32.mrf.mxu0
  %v732 = vadd.f32 0.0, %v731
  %733 = vmatmul.bf16.gmra.mxu0 %v412
  %v734 = vpop.f32.mrf.mxu0
  %v735 = vadd.f32 0.0, %v734
  %v736 = vpop.f32.mrf.mxu0
  %v737 = vadd.f32 0.0, %v736
  %738 = vmatmul.bf16.gmra.mxu0 %v414
  %v739 = vpop.f32.mrf.mxu0
  %v740 = vadd.f32 0.0, %v739
  %v741 = vpop.f32.mrf.mxu0
  %v742 = vadd.f32 0.0, %v741
  %743 = vmatmul.bf16.gmra.mxu0 %v416
  %v744 = vpop.f32.mrf.mxu0
  %v745 = vadd.f32 0.0, %v744
  %v746 = vpop.f32.mrf.mxu0
  %v747 = vadd.f32 0.0, %v746
  %748 = vmatmul.bf16.gmra.mxu0 %v418
  %v749 = vpop.f32.mrf.mxu0
  %v750 = vadd.f32 0.0, %v749
  %v751 = vpop.f32.mrf.mxu0
  %v752 = vadd.f32 0.0, %v751
  %753 = vmatmul.bf16.gmra.mxu0 %v420
  %v754 = vpop.f32.mrf.mxu0
  %v755 = vadd.f32 0.0, %v754
  %v756 = vpop.f32.mrf.mxu0
  %v757 = vadd.f32 0.0, %v756
  %758 = vmatmul.bf16.gmra.mxu0 %v422
  %v759 = vpop.f32.mrf.mxu0
  %v760 = vadd.f32 0.0, %v759
  %v761 = vpop.f32.mrf.mxu0
  %v762 = vadd.f32 0.0, %v761
  %763 = vmatmul.bf16.gmra.mxu0 %v424
  %v764 = vpop.f32.mrf.mxu0
  %v765 = vadd.f32 0.0, %v764
  %v766 = vpop.f32.mrf.mxu0
  %v767 = vadd.f32 0.0, %v766
  %768 = vmatmul.bf16.gmra.mxu0 %v426
  %v769 = vpop.f32.mrf.mxu0
  %v770 = vadd.f32 0.0, %v769
  %v771 = vpop.f32.mrf.mxu0
  %v772 = vadd.f32 0.0, %v771
  %773 = vmatmul.bf16.gmra.mxu0 %v428
  %v774 = vpop.f32.mrf.mxu0
  %v775 = vadd.f32 0.0, %v774
  %v776 = vpop.f32.mrf.mxu0
  %v777 = vadd.f32 0.0, %v776
  %778 = vmatmul.bf16.gmra.mxu0 %v430
  %v779 = vpop.f32.mrf.mxu0
  %v780 = vadd.f32 0.0, %v779
  %v781 = vpop.f32.mrf.mxu0
  %v782 = vadd.f32 0.0, %v781
  %783 = vdwg.mxu0
  %784 = vmatpush.bf16.msra.mxu0 0
  %785 = vmatpush.bf16.msra.mxu0 0
  %786 = vmatpush.bf16.msra.mxu0 0
  %787 = vmatpush.bf16.msra.mxu0 0
  %788 = vmatpush.bf16.msra.mxu0 0
  %789 = vmatpush.bf16.msra.mxu0 0
  %790 = vmatpush.bf16.msra.mxu0 0
  %791 = vmatpush.bf16.msra.mxu0 %v508
  %792 = vmatmul.bf16.gmra.mxu0 %v520
  %v793 = vpop.f32.mrf.mxu0
  %v794 = vadd.f32 %v625, %v793
  %v795 = vpop.f32.mrf.mxu0
  %v796 = vadd.f32 %v627, %v795
  %797 = vmatmul.bf16.gmra.mxu0 %v523
  %v798 = vpop.f32.mrf.mxu0
  %v799 = vadd.f32 %v630, %v798
  %v800 = vpop.f32.mrf.mxu0
  %v801 = vadd.f32 %v632, %v800
  %802 = vmatmul.bf16.gmra.mxu0 %v526
  %v803 = vpop.f32.mrf.mxu0
  %v804 = vadd.f32 %v635, %v803
  %v805 = vpop.f32.mrf.mxu0
  %v806 = vadd.f32 %v637, %v805
  %807 = vmatmul.bf16.gmra.mxu0 %v529
  %v808 = vpop.f32.mrf.mxu0
  %v809 = vadd.f32 %v640, %v808
  %v810 = vpop.f32.mrf.mxu0
  %v811 = vadd.f32 %v642, %v810
  %812 = vmatmul.bf16.gmra.mxu0 %v532
  %v813 = vpop.f32.mrf.mxu0
  %v814 = vadd.f32 %v645, %v813
  %v815 = vpop.f32.mrf.mxu0
  %v816 = vadd.f32 %v647, %v815
  %817 = vmatmul.bf16.gmra.mxu0 %v535
  %v818 = vpop.f32.mrf.mxu0
  %v819 = vadd.f32 %v650, %v818
  %v820 = vpop.f32.mrf.mxu0
  %v821 = vadd.f32 %v652, %v820
  %822 = vmatmul.bf16.gmra.mxu0 %v538
  %v823 = vpop.f32.mrf.mxu0
  %v824 = vadd.f32 %v655, %v823
  %v825 = vpop.f32.mrf.mxu0
  %v826 = vadd.f32 %v657, %v825
  %827 = vmatmul.bf16.gmra.mxu0 %v541
  %v828 = vpop.f32.mrf.mxu0
  %v829 = vadd.f32 %v660, %v828
  %v830 = vpop.f32.mrf.mxu0
  %v831 = vadd.f32 %v662, %v830
  %832 = vmatmul.bf16.gmra.mxu0 %v544
  %v833 = vpop.f32.mrf.mxu0
  %v834 = vadd.f32 %v665, %v833
  %v835 = vpop.f32.mrf.mxu0
  %v836 = vadd.f32 %v667, %v835
  %837 = vmatmul.bf16.gmra.mxu0 %v547
  %v838 = vpop.f32.mrf.mxu0
  %v839 = vadd.f32 %v670, %v838
  %v840 = vpop.f32.mrf.mxu0
  %v841 = vadd.f32 %v672, %v840
  %842 = vmatmul.bf16.gmra.mxu0 %v550
  %v843 = vpop.f32.mrf.mxu0
  %v844 = vadd.f32 %v675, %v843
  %v845 = vpop.f32.mrf.mxu0
  %v846 = vadd.f32 %v677, %v845
  %847 = vmatmul.bf16.gmra.mxu0 %v553
  %v848 = vpop.f32.mrf.mxu0
  %v849 = vadd.f32 %v680, %v848
  %v850 = vpop.f32.mrf.mxu0
  %v851 = vadd.f32 %v682, %v850
  %852 = vmatmul.bf16.gmra.mxu0 %v556
  %v853 = vpop.f32.mrf.mxu0
  %v854 = vadd.f32 %v685, %v853
  %v855 = vpop.f32.mrf.mxu0
  %v856 = vadd.f32 %v687, %v855
  %857 = vmatmul.bf16.gmra.mxu0 %v559
  %v858 = vpop.f32.mrf.mxu0
  %v859 = vadd.f32 %v690, %v858
  %v860 = vpop.f32.mrf.mxu0
  %v861 = vadd.f32 %v692, %v860
  %862 = vmatmul.bf16.gmra.mxu0 %v562
  %v863 = vpop.f32.mrf.mxu0
  %v864 = vadd.f32 %v695, %v863
  %v865 = vpop.f32.mrf.mxu0
  %v866 = vadd.f32 %v697, %v865
  %867 = vmatmul.bf16.gmra.mxu0 %v565
  %v868 = vpop.f32.mrf.mxu0
  %v869 = vadd.f32 %v700, %v868
  %v870 = vpop.f32.mrf.mxu0
  %v871 = vadd.f32 %v702, %v870
  %872 = vmatmul.bf16.gmra.mxu0 %v568
  %v873 = vpop.f32.mrf.mxu0
  %v874 = vadd.f32 %v705, %v873
  %v875 = vpop.f32.mrf.mxu0
  %v876 = vadd.f32 %v707, %v875
  %877 = vmatmul.bf16.gmra.mxu0 %v571
  %v878 = vpop.f32.mrf.mxu0
  %v879 = vadd.f32 %v710, %v878
  %v880 = vpop.f32.mrf.mxu0
  %v881 = vadd.f32 %v712, %v880
  %882 = vmatmul.bf16.gmra.mxu0 %v574
  %v883 = vpop.f32.mrf.mxu0
  %v884 = vadd.f32 %v715, %v883
  %v885 = vpop.f32.mrf.mxu0
  %v886 = vadd.f32 %v717, %v885
  %887 = vmatmul.bf16.gmra.mxu0 %v577
  %v888 = vpop.f32.mrf.mxu0
  %v889 = vadd.f32 %v720, %v888
  %v890 = vpop.f32.mrf.mxu0
  %v891 = vadd.f32 %v722, %v890
  %892 = vmatmul.bf16.gmra.mxu0 %v580
  %v893 = vpop.f32.mrf.mxu0
  %v894 = vadd.f32 %v725, %v893
  %v895 = vpop.f32.mrf.mxu0
  %v896 = vadd.f32 %v727, %v895
  %897 = vmatmul.bf16.gmra.mxu0 %v583
  %v898 = vpop.f32.mrf.mxu0
  %v899 = vadd.f32 %v730, %v898
  %v900 = vpop.f32.mrf.mxu0
  %v901 = vadd.f32 %v732, %v900
  %902 = vmatmul.bf16.gmra.mxu0 %v586
  %v903 = vpop.f32.mrf.mxu0
  %v904 = vadd.f32 %v735, %v903
  %v905 = vpop.f32.mrf.mxu0
  %v906 = vadd.f32 %v737, %v905
  %907 = vmatmul.bf16.gmra.mxu0 %v589
  %v908 = vpop.f32.mrf.mxu0
  %v909 = vadd.f32 %v740, %v908
  %v910 = vpop.f32.mrf.mxu0
  %v911 = vadd.f32 %v742, %v910
  %912 = vmatmul.bf16.gmra.mxu0 %v592
  %v913 = vpop.f32.mrf.mxu0
  %v914 = vadd.f32 %v745, %v913
  %v915 = vpop.f32.mrf.mxu0
  %v916 = vadd.f32 %v747, %v915
  %917 = vmatmul.bf16.gmra.mxu0 %v595
  %v918 = vpop.f32.mrf.mxu0
  %v919 = vadd.f32 %v750, %v918
  %v920 = vpop.f32.mrf.mxu0
  %v921 = vadd.f32 %v752, %v920
  %922 = vmatmul.bf16.gmra.mxu0 %v598
  %v923 = vpop.f32.mrf.mxu0
  %v924 = vadd.f32 %v755, %v923
  %v925 = vpop.f32.mrf.mxu0
  %v926 = vadd.f32 %v757, %v925
  %927 = vmatmul.bf16.gmra.mxu0 %v601
  %v928 = vpop.f32.mrf.mxu0
  %v929 = vadd.f32 %v760, %v928
  %v930 = vpop.f32.mrf.mxu0
  %v931 = vadd.f32 %v762, %v930
  %932 = vmatmul.bf16.gmra.mxu0 %v604
  %v933 = vpop.f32.mrf.mxu0
  %v934 = vadd.f32 %v765, %v933
  %v935 = vpop.f32.mrf.mxu0
  %v936 = vadd.f32 %v767, %v935
  %937 = vmatmul.bf16.gmra.mxu0 %v607
  %v938 = vpop.f32.mrf.mxu0
  %v939 = vadd.f32 %v770, %v938
  %v940 = vpop.f32.mrf.mxu0
  %v941 = vadd.f32 %v772, %v940
  %942 = vmatmul.bf16.gmra.mxu0 %v610
  %v943 = vpop.f32.mrf.mxu0
  %v944 = vadd.f32 %v775, %v943
  %v945 = vpop.f32.mrf.mxu0
  %v946 = vadd.f32 %v777, %v945
  %947 = vmatmul.bf16.gmra.mxu0 %v613
  %v948 = vpop.f32.mrf.mxu0
  %v949 = vadd.f32 %v780, %v948
  %v950 = vpop.f32.mrf.mxu0
  %v951 = vadd.f32 %v782, %v950
  %952 = vdwg.mxu0
  %v1017 = vunpack.c.l.b16 %v21
  %v1018 = vunpack.c.l.b16 %v22
  %v1019 = vunpack.c.l.b16 %v23
  %v1020 = vunpack.c.l.b16 %v24
  %v1021 = vunpack.c.l.b16 %v25
  %v1022 = vunpack.c.l.b16 %v26
  %v1023 = vunpack.c.l.b16 %v27
  %v1024 = vunpack.c.l.b16 %v28
  %v1025 = vunpack.c.l.b16 %v29
  %v1026 = vunpack.c.l.b16 %v30
  %v1027 = vunpack.c.l.b16 %v31
  %v1028 = vunpack.c.l.b16 %v32
  %v1029 = vunpack.c.l.b16 %v33
  %v1030 = vunpack.c.l.b16 %v34
  %v1031 = vunpack.c.l.b16 %v35
  %v1032 = vunpack.c.l.b16 %v36
  %v1033 = vunpack.c.l.b16 %v37
  %v1034 = vunpack.c.l.b16 %v38
  %v1035 = vunpack.c.l.b16 %v39
  %v1036 = vunpack.c.l.b16 %v40
  %v1037 = vunpack.c.l.b16 %v41
  %v1038 = vunpack.c.l.b16 %v42
  %v1039 = vunpack.c.l.b16 %v43
  %v1040 = vunpack.c.l.b16 %v44
  %v1041 = vunpack.c.l.b16 %v45
  %v1042 = vunpack.c.l.b16 %v46
  %v1043 = vunpack.c.l.b16 %v47
  %v1044 = vunpack.c.l.b16 %v48
  %v1045 = vunpack.c.l.b16 %v49
  %v1046 = vunpack.c.l.b16 %v50
  %v1047 = vunpack.c.l.b16 %v51
  %v1048 = vunpack.c.l.b16 %v52
  %v1049 = vunpack.c.l.b16 %v53
  %v1050 = vunpack.c.l.b16 %v54
  %v1051 = vunpack.c.l.b16 %v55
  %v1052 = vunpack.c.l.b16 %v56
  %v1053 = vunpack.c.l.b16 %v57
  %v1054 = vunpack.c.l.b16 %v58
  %v1055 = vunpack.c.l.b16 %v59
  %v1056 = vunpack.c.l.b16 %v60
  %v1057 = vunpack.c.l.b16 %v61
  %v1058 = vunpack.c.l.b16 %v62
  %v1059 = vunpack.c.l.b16 %v63
  %v1060 = vunpack.c.l.b16 %v64
  %v1061 = vunpack.c.l.b16 %v65
  %v1062 = vunpack.c.l.b16 %v66
  %v1063 = vunpack.c.l.b16 %v67
  %v1064 = vunpack.c.l.b16 %v68
  %v1065 = vunpack.c.l.b16 %v69
  %v1066 = vunpack.c.l.b16 %v70
  %v1067 = vunpack.c.l.b16 %v71
  %v1068 = vunpack.c.l.b16 %v72
  %v1069 = vunpack.c.l.b16 %v73
  %v1070 = vunpack.c.l.b16 %v74
  %v1071 = vunpack.c.l.b16 %v75
  %v1072 = vunpack.c.l.b16 %v76
  %v1073 = vunpack.c.l.b16 %v77
  %v1074 = vunpack.c.l.b16 %v78
  %v1075 = vunpack.c.l.b16 %v79
  %v1076 = vunpack.c.l.b16 %v80
  %v1077 = vunpack.c.l.b16 %v81
  %v1078 = vunpack.c.l.b16 %v82
  %v1079 = vunpack.c.l.b16 %v83
  %v1080 = vunpack.c.l.b16 %v84
  %v1081 = vpack.c.b16 %v1018, %v1017
  %v1082 = vpack.c.b16 %v1020, %v1019
  %v1083 = vpack.c.b16 %v1022, %v1021
  %v1084 = vpack.c.b16 %v1024, %v1023
  %v1085 = vpack.c.b16 %v1026, %v1025
  %v1086 = vpack.c.b16 %v1028, %v1027
  %v1087 = vpack.c.b16 %v1030, %v1029
  %v1088 = vpack.c.b16 %v1032, %v1031
  %v1089 = vpack.c.b16 %v1034, %v1033
  %v1090 = vpack.c.b16 %v1036, %v1035
  %v1091 = vpack.c.b16 %v1038, %v1037
  %v1092 = vpack.c.b16 %v1040, %v1039
  %v1093 = vpack.c.b16 %v1042, %v1041
  %v1094 = vpack.c.b16 %v1044, %v1043
  %v1095 = vpack.c.b16 %v1046, %v1045
  %v1096 = vpack.c.b16 %v1048, %v1047
  %v1097 = vpack.c.b16 %v1050, %v1049
  %v1098 = vpack.c.b16 %v1052, %v1051
  %v1099 = vpack.c.b16 %v1054, %v1053
  %v1100 = vpack.c.b16 %v1056, %v1055
  %v1101 = vpack.c.b16 %v1058, %v1057
  %v1102 = vpack.c.b16 %v1060, %v1059
  %v1103 = vpack.c.b16 %v1062, %v1061
  %v1104 = vpack.c.b16 %v1064, %v1063
  %v1105 = vpack.c.b16 %v1066, %v1065
  %v1106 = vpack.c.b16 %v1068, %v1067
  %v1107 = vpack.c.b16 %v1070, %v1069
  %v1108 = vpack.c.b16 %v1072, %v1071
  %v1109 = vpack.c.b16 %v1074, %v1073
  %v1110 = vpack.c.b16 %v1076, %v1075
  %v1111 = vpack.c.b16 %v1078, %v1077
  %v1112 = vpack.c.b16 %v1080, %v1079
  %v1122 = vunpack.c.l.b16 %v85
  %v1123 = vunpack.c.l.b16 %v86
  %v1124 = vunpack.c.l.b16 %v87
  %v1125 = vunpack.c.l.b16 %v88
  %v1126 = vunpack.c.l.b16 %v89
  %v1127 = vunpack.c.l.b16 %v90
  %v1128 = vunpack.c.l.b16 %v91
  %v1129 = vunpack.c.l.b16 %v92
  %v1130 = vunpack.c.l.b16 %v93
  %v1131 = vpack.c.b16 %v1123, %v1122
  %v1132 = vpack.c.b16 %v1125, %v1124
  %v1133 = vpack.c.b16 %v1127, %v1126
  %v1134 = vpack.c.b16 %v1129, %v1128
  %v1135 = vpack.c.b16 %v1130, %v1130
  %vm1140 = vcmask 588800
  %v1142 = vsel %vm1140, %v1081, 0
  %v1145 = vsel %vm1140, %v1082, 0
  %v1148 = vsel %vm1140, %v1083, 0
  %v1151 = vsel %vm1140, %v1084, 0
  %v1154 = vsel %vm1140, %v1085, 0
  %v1157 = vsel %vm1140, %v1086, 0
  %v1160 = vsel %vm1140, %v1087, 0
  %v1163 = vsel %vm1140, %v1088, 0
  %v1166 = vsel %vm1140, %v1089, 0
  %v1169 = vsel %vm1140, %v1090, 0
  %v1172 = vsel %vm1140, %v1091, 0
  %v1175 = vsel %vm1140, %v1092, 0
  %v1178 = vsel %vm1140, %v1093, 0
  %v1181 = vsel %vm1140, %v1094, 0
  %v1184 = vsel %vm1140, %v1095, 0
  %v1187 = vsel %vm1140, %v1096, 0
  %v1190 = vsel %vm1140, %v1097, 0
  %v1193 = vsel %vm1140, %v1098, 0
  %v1196 = vsel %vm1140, %v1099, 0
  %v1199 = vsel %vm1140, %v1100, 0
  %v1202 = vsel %vm1140, %v1101, 0
  %v1205 = vsel %vm1140, %v1102, 0
  %v1208 = vsel %vm1140, %v1103, 0
  %v1211 = vsel %vm1140, %v1104, 0
  %v1214 = vsel %vm1140, %v1105, 0
  %v1217 = vsel %vm1140, %v1106, 0
  %v1220 = vsel %vm1140, %v1107, 0
  %v1223 = vsel %vm1140, %v1108, 0
  %v1226 = vsel %vm1140, %v1109, 0
  %v1229 = vsel %vm1140, %v1110, 0
  %v1232 = vsel %vm1140, %v1111, 0
  %v1235 = vsel %vm1140, %v1112, 0
  %vm1237 = vcmask 1043456
  %v1239 = vsel %vm1237, %v1135, 0
  %1241 = vmatpush.bf16.msra.mxu0 0
  %1242 = vmatpush.bf16.msra.mxu0 0
  %1243 = vmatpush.bf16.msra.mxu0 0
  %1244 = vmatpush.bf16.msra.mxu0 %v1239
  %1245 = vmatpush.bf16.msra.mxu0 %v1134
  %1246 = vmatpush.bf16.msra.mxu0 %v1133
  %1247 = vmatpush.bf16.msra.mxu0 %v1132
  %1248 = vmatpush.bf16.msra.mxu0 %v1131
  %1249 = vmatmul.bf16.gmra.mxu0 %v1142
  %v1250 = vpop.f32.mrf.mxu0
  %v1251 = vadd.f32 %v794, %v1250
  %v1252 = vpop.f32.mrf.mxu0
  %v1253 = vadd.f32 %v796, %v1252
  %1254 = vmatmul.bf16.gmra.mxu0 %v1145
  %v1255 = vpop.f32.mrf.mxu0
  %v1256 = vadd.f32 %v799, %v1255
  %v1257 = vpop.f32.mrf.mxu0
  %v1258 = vadd.f32 %v801, %v1257
  %1259 = vmatmul.bf16.gmra.mxu0 %v1148
  %v1260 = vpop.f32.mrf.mxu0
  %v1261 = vadd.f32 %v804, %v1260
  %v1262 = vpop.f32.mrf.mxu0
  %v1263 = vadd.f32 %v806, %v1262
  %1264 = vmatmul.bf16.gmra.mxu0 %v1151
  %v1265 = vpop.f32.mrf.mxu0
  %v1266 = vadd.f32 %v809, %v1265
  %v1267 = vpop.f32.mrf.mxu0
  %v1268 = vadd.f32 %v811, %v1267
  %1269 = vmatmul.bf16.gmra.mxu0 %v1154
  %v1270 = vpop.f32.mrf.mxu0
  %v1271 = vadd.f32 %v814, %v1270
  %v1272 = vpop.f32.mrf.mxu0
  %v1273 = vadd.f32 %v816, %v1272
  %1274 = vmatmul.bf16.gmra.mxu0 %v1157
  %v1275 = vpop.f32.mrf.mxu0
  %v1276 = vadd.f32 %v819, %v1275
  %v1277 = vpop.f32.mrf.mxu0
  %v1278 = vadd.f32 %v821, %v1277
  %1279 = vmatmul.bf16.gmra.mxu0 %v1160
  %v1280 = vpop.f32.mrf.mxu0
  %v1281 = vadd.f32 %v824, %v1280
  %v1282 = vpop.f32.mrf.mxu0
  %v1283 = vadd.f32 %v826, %v1282
  %1284 = vmatmul.bf16.gmra.mxu0 %v1163
  %v1285 = vpop.f32.mrf.mxu0
  %v1286 = vadd.f32 %v829, %v1285
  %v1287 = vpop.f32.mrf.mxu0
  %v1288 = vadd.f32 %v831, %v1287
  %1289 = vmatmul.bf16.gmra.mxu0 %v1166
  %v1290 = vpop.f32.mrf.mxu0
  %v1291 = vadd.f32 %v834, %v1290
  %v1292 = vpop.f32.mrf.mxu0
  %v1293 = vadd.f32 %v836, %v1292
  %1294 = vmatmul.bf16.gmra.mxu0 %v1169
  %v1295 = vpop.f32.mrf.mxu0
  %v1296 = vadd.f32 %v839, %v1295
  %v1297 = vpop.f32.mrf.mxu0
  %v1298 = vadd.f32 %v841, %v1297
  %1299 = vmatmul.bf16.gmra.mxu0 %v1172
  %v1300 = vpop.f32.mrf.mxu0
  %v1301 = vadd.f32 %v844, %v1300
  %v1302 = vpop.f32.mrf.mxu0
  %v1303 = vadd.f32 %v846, %v1302
  %1304 = vmatmul.bf16.gmra.mxu0 %v1175
  %v1305 = vpop.f32.mrf.mxu0
  %v1306 = vadd.f32 %v849, %v1305
  %v1307 = vpop.f32.mrf.mxu0
  %v1308 = vadd.f32 %v851, %v1307
  %1309 = vmatmul.bf16.gmra.mxu0 %v1178
  %v1310 = vpop.f32.mrf.mxu0
  %v1311 = vadd.f32 %v854, %v1310
  %v1312 = vpop.f32.mrf.mxu0
  %v1313 = vadd.f32 %v856, %v1312
  %1314 = vmatmul.bf16.gmra.mxu0 %v1181
  %v1315 = vpop.f32.mrf.mxu0
  %v1316 = vadd.f32 %v859, %v1315
  %v1317 = vpop.f32.mrf.mxu0
  %v1318 = vadd.f32 %v861, %v1317
  %1319 = vmatmul.bf16.gmra.mxu0 %v1184
  %v1320 = vpop.f32.mrf.mxu0
  %v1321 = vadd.f32 %v864, %v1320
  %v1322 = vpop.f32.mrf.mxu0
  %v1323 = vadd.f32 %v866, %v1322
  %1324 = vmatmul.bf16.gmra.mxu0 %v1187
  %v1325 = vpop.f32.mrf.mxu0
  %v1326 = vadd.f32 %v869, %v1325
  %v1327 = vpop.f32.mrf.mxu0
  %v1328 = vadd.f32 %v871, %v1327
  %1329 = vmatmul.bf16.gmra.mxu0 %v1190
  %v1330 = vpop.f32.mrf.mxu0
  %v1331 = vadd.f32 %v874, %v1330
  %v1332 = vpop.f32.mrf.mxu0
  %v1333 = vadd.f32 %v876, %v1332
  %1334 = vmatmul.bf16.gmra.mxu0 %v1193
  %v1335 = vpop.f32.mrf.mxu0
  %v1336 = vadd.f32 %v879, %v1335
  %v1337 = vpop.f32.mrf.mxu0
  %v1338 = vadd.f32 %v881, %v1337
  %1339 = vmatmul.bf16.gmra.mxu0 %v1196
  %v1340 = vpop.f32.mrf.mxu0
  %v1341 = vadd.f32 %v884, %v1340
  %v1342 = vpop.f32.mrf.mxu0
  %v1343 = vadd.f32 %v886, %v1342
  %1344 = vmatmul.bf16.gmra.mxu0 %v1199
  %v1345 = vpop.f32.mrf.mxu0
  %v1346 = vadd.f32 %v889, %v1345
  %v1347 = vpop.f32.mrf.mxu0
  %v1348 = vadd.f32 %v891, %v1347
  %1349 = vmatmul.bf16.gmra.mxu0 %v1202
  %v1350 = vpop.f32.mrf.mxu0
  %v1351 = vadd.f32 %v894, %v1350
  %v1352 = vpop.f32.mrf.mxu0
  %v1353 = vadd.f32 %v896, %v1352
  %1354 = vmatmul.bf16.gmra.mxu0 %v1205
  %v1355 = vpop.f32.mrf.mxu0
  %v1356 = vadd.f32 %v899, %v1355
  %v1357 = vpop.f32.mrf.mxu0
  %v1358 = vadd.f32 %v901, %v1357
  %1359 = vmatmul.bf16.gmra.mxu0 %v1208
  %v1360 = vpop.f32.mrf.mxu0
  %v1361 = vadd.f32 %v904, %v1360
  %v1362 = vpop.f32.mrf.mxu0
  %v1363 = vadd.f32 %v906, %v1362
  %1364 = vmatmul.bf16.gmra.mxu0 %v1211
  %v1365 = vpop.f32.mrf.mxu0
  %v1366 = vadd.f32 %v909, %v1365
  %v1367 = vpop.f32.mrf.mxu0
  %v1368 = vadd.f32 %v911, %v1367
  %1369 = vmatmul.bf16.gmra.mxu0 %v1214
  %v1370 = vpop.f32.mrf.mxu0
  %v1371 = vadd.f32 %v914, %v1370
  %v1372 = vpop.f32.mrf.mxu0
  %v1373 = vadd.f32 %v916, %v1372
  %1374 = vmatmul.bf16.gmra.mxu0 %v1217
  %v1375 = vpop.f32.mrf.mxu0
  %v1376 = vadd.f32 %v919, %v1375
  %v1377 = vpop.f32.mrf.mxu0
  %v1378 = vadd.f32 %v921, %v1377
  %1379 = vmatmul.bf16.gmra.mxu0 %v1220
  %v1380 = vpop.f32.mrf.mxu0
  %v1381 = vadd.f32 %v924, %v1380
  %v1382 = vpop.f32.mrf.mxu0
  %v1383 = vadd.f32 %v926, %v1382
  %1384 = vmatmul.bf16.gmra.mxu0 %v1223
  %v1385 = vpop.f32.mrf.mxu0
  %v1386 = vadd.f32 %v929, %v1385
  %v1387 = vpop.f32.mrf.mxu0
  %v1388 = vadd.f32 %v931, %v1387
  %1389 = vmatmul.bf16.gmra.mxu0 %v1226
  %v1390 = vpop.f32.mrf.mxu0
  %v1391 = vadd.f32 %v934, %v1390
  %v1392 = vpop.f32.mrf.mxu0
  %v1393 = vadd.f32 %v936, %v1392
  %1394 = vmatmul.bf16.gmra.mxu0 %v1229
  %v1395 = vpop.f32.mrf.mxu0
  %v1396 = vadd.f32 %v939, %v1395
  %v1397 = vpop.f32.mrf.mxu0
  %v1398 = vadd.f32 %v941, %v1397
  %1399 = vmatmul.bf16.gmra.mxu0 %v1232
  %v1400 = vpop.f32.mrf.mxu0
  %v1401 = vadd.f32 %v944, %v1400
  %v1402 = vpop.f32.mrf.mxu0
  %v1403 = vadd.f32 %v946, %v1402
  %1404 = vmatmul.bf16.gmra.mxu0 %v1235
  %v1405 = vpop.f32.mrf.mxu0
  %v1406 = vadd.f32 %v949, %v1405
  %v1407 = vpop.f32.mrf.mxu0
  %v1408 = vadd.f32 %v951, %v1407
  %1409 = vdwg.mxu0
  %v1410 = vld [vmem:[%s4] sm:$0x1]
  %v1412 = vperm.slane %v1410, 0
  %v1414 = vadd.f32 %v1251, %v1412
  %v1415 = vadd.f32 %v1253, %v1412
  %v1416 = vadd.f32 %v1256, %v1412
  %v1417 = vadd.f32 %v1258, %v1412
  %v1418 = vadd.f32 %v1261, %v1412
  %v1419 = vadd.f32 %v1263, %v1412
  %v1420 = vadd.f32 %v1266, %v1412
  %v1421 = vadd.f32 %v1268, %v1412
  %v1422 = vadd.f32 %v1271, %v1412
  %v1423 = vadd.f32 %v1273, %v1412
  %v1424 = vadd.f32 %v1276, %v1412
  %v1425 = vadd.f32 %v1278, %v1412
  %v1426 = vadd.f32 %v1281, %v1412
  %v1427 = vadd.f32 %v1283, %v1412
  %v1428 = vadd.f32 %v1286, %v1412
  %v1429 = vadd.f32 %v1288, %v1412
  %v1430 = vadd.f32 %v1291, %v1412
  %v1431 = vadd.f32 %v1293, %v1412
  %v1432 = vadd.f32 %v1296, %v1412
  %v1433 = vadd.f32 %v1298, %v1412
  %v1434 = vadd.f32 %v1301, %v1412
  %v1435 = vadd.f32 %v1303, %v1412
  %v1436 = vadd.f32 %v1306, %v1412
  %v1437 = vadd.f32 %v1308, %v1412
  %v1438 = vadd.f32 %v1311, %v1412
  %v1439 = vadd.f32 %v1313, %v1412
  %v1440 = vadd.f32 %v1316, %v1412
  %v1441 = vadd.f32 %v1318, %v1412
  %v1442 = vadd.f32 %v1321, %v1412
  %v1443 = vadd.f32 %v1323, %v1412
  %v1444 = vadd.f32 %v1326, %v1412
  %v1445 = vadd.f32 %v1328, %v1412
  %v1446 = vadd.f32 %v1331, %v1412
  %v1447 = vadd.f32 %v1333, %v1412
  %v1448 = vadd.f32 %v1336, %v1412
  %v1449 = vadd.f32 %v1338, %v1412
  %v1450 = vadd.f32 %v1341, %v1412
  %v1451 = vadd.f32 %v1343, %v1412
  %v1452 = vadd.f32 %v1346, %v1412
  %v1453 = vadd.f32 %v1348, %v1412
  %v1454 = vadd.f32 %v1351, %v1412
  %v1455 = vadd.f32 %v1353, %v1412
  %v1456 = vadd.f32 %v1356, %v1412
  %v1457 = vadd.f32 %v1358, %v1412
  %v1458 = vadd.f32 %v1361, %v1412
  %v1459 = vadd.f32 %v1363, %v1412
  %v1460 = vadd.f32 %v1366, %v1412
  %v1461 = vadd.f32 %v1368, %v1412
  %v1462 = vadd.f32 %v1371, %v1412
  %v1463 = vadd.f32 %v1373, %v1412
  %v1464 = vadd.f32 %v1376, %v1412
  %v1465 = vadd.f32 %v1378, %v1412
  %v1466 = vadd.f32 %v1381, %v1412
  %v1467 = vadd.f32 %v1383, %v1412
  %v1468 = vadd.f32 %v1386, %v1412
  %v1469 = vadd.f32 %v1388, %v1412
  %v1470 = vadd.f32 %v1391, %v1412
  %v1471 = vadd.f32 %v1393, %v1412
  %v1472 = vadd.f32 %v1396, %v1412
  %v1473 = vadd.f32 %v1398, %v1412
  %v1474 = vadd.f32 %v1401, %v1412
  %v1475 = vadd.f32 %v1403, %v1412
  %v1476 = vadd.f32 %v1406, %v1412
  %v1477 = vadd.f32 %v1408, %v1412
  %vm1478 = vcmask 64512
  %1479 = vst.msk [vmem:[%s5] sm:$0xff] %vm1478, %v1414
  %1480 = vst.msk [vmem:[%s5 + $0x8] sm:$0xff] %vm1478, %v1415
  %1481 = vst.msk [vmem:[%s5 + $0x10] sm:$0xff] %vm1478, %v1416
  %1482 = vst.msk [vmem:[%s5 + $0x18] sm:$0xff] %vm1478, %v1417
  %1483 = vst.msk [vmem:[%s5 + $0x20] sm:$0xff] %vm1478, %v1418
  %1484 = vst.msk [vmem:[%s5 + $0x28] sm:$0xff] %vm1478, %v1419
  %1485 = vst.msk [vmem:[%s5 + $0x30] sm:$0xff] %vm1478, %v1420
  %1486 = vst.msk [vmem:[%s5 + $0x38] sm:$0xff] %vm1478, %v1421
  %1487 = vst.msk [vmem:[%s5 + $0x40] sm:$0xff] %vm1478, %v1422
  %1488 = vst.msk [vmem:[%s5 + $0x48] sm:$0xff] %vm1478, %v1423
  %1489 = vst.msk [vmem:[%s5 + $0x50] sm:$0xff] %vm1478, %v1424
  %1490 = vst.msk [vmem:[%s5 + $0x58] sm:$0xff] %vm1478, %v1425
  %1491 = vst.msk [vmem:[%s5 + $0x60] sm:$0xff] %vm1478, %v1426
  %1492 = vst.msk [vmem:[%s5 + $0x68] sm:$0xff] %vm1478, %v1427
  %1493 = vst.msk [vmem:[%s5 + $0x70] sm:$0xff] %vm1478, %v1428
  %1494 = vst.msk [vmem:[%s5 + $0x78] sm:$0xff] %vm1478, %v1429
  %1495 = vst.msk [vmem:[%s5 + $0x80] sm:$0xff] %vm1478, %v1430
  %1496 = vst.msk [vmem:[%s5 + $0x88] sm:$0xff] %vm1478, %v1431
  %1497 = vst.msk [vmem:[%s5 + $0x90] sm:$0xff] %vm1478, %v1432
  %1498 = vst.msk [vmem:[%s5 + $0x98] sm:$0xff] %vm1478, %v1433
  %1499 = vst.msk [vmem:[%s5 + $0xa0] sm:$0xff] %vm1478, %v1434
  %1500 = vst.msk [vmem:[%s5 + $0xa8] sm:$0xff] %vm1478, %v1435
  %1501 = vst.msk [vmem:[%s5 + $0xb0] sm:$0xff] %vm1478, %v1436
  %1502 = vst.msk [vmem:[%s5 + $0xb8] sm:$0xff] %vm1478, %v1437
  %1503 = vst.msk [vmem:[%s5 + $0xc0] sm:$0xff] %vm1478, %v1438
  %1504 = vst.msk [vmem:[%s5 + $0xc8] sm:$0xff] %vm1478, %v1439
  %1505 = vst.msk [vmem:[%s5 + $0xd0] sm:$0xff] %vm1478, %v1440
  %1506 = vst.msk [vmem:[%s5 + $0xd8] sm:$0xff] %vm1478, %v1441
  %1507 = vst.msk [vmem:[%s5 + $0xe0] sm:$0xff] %vm1478, %v1442
  %1508 = vst.msk [vmem:[%s5 + $0xe8] sm:$0xff] %vm1478, %v1443
  %1509 = vst.msk [vmem:[%s5 + $0xf0] sm:$0xff] %vm1478, %v1444
  %1510 = vst.msk [vmem:[%s5 + $0xf8] sm:$0xff] %vm1478, %v1445
  %1511 = vst.msk [vmem:[%s5 + $0x100] sm:$0xff] %vm1478, %v1446
  %1512 = vst.msk [vmem:[%s5 + $0x108] sm:$0xff] %vm1478, %v1447
  %1513 = vst.msk [vmem:[%s5 + $0x110] sm:$0xff] %vm1478, %v1448
  %1514 = vst.msk [vmem:[%s5 + $0x118] sm:$0xff] %vm1478, %v1449
  %1515 = vst.msk [vmem:[%s5 + $0x120] sm:$0xff] %vm1478, %v1450
  %1516 = vst.msk [vmem:[%s5 + $0x128] sm:$0xff] %vm1478, %v1451
  %1517 = vst.msk [vmem:[%s5 + $0x130] sm:$0xff] %vm1478, %v1452
  %1518 = vst.msk [vmem:[%s5 + $0x138] sm:$0xff] %vm1478, %v1453
  %1519 = vst.msk [vmem:[%s5 + $0x140] sm:$0xff] %vm1478, %v1454
  %1520 = vst.msk [vmem:[%s5 + $0x148] sm:$0xff] %vm1478, %v1455
  %1521 = vst.msk [vmem:[%s5 + $0x150] sm:$0xff] %vm1478, %v1456
  %1522 = vst.msk [vmem:[%s5 + $0x158] sm:$0xff] %vm1478, %v1457
  %1523 = vst.msk [vmem:[%s5 + $0x160] sm:$0xff] %vm1478, %v1458
  %1524 = vst.msk [vmem:[%s5 + $0x168] sm:$0xff] %vm1478, %v1459
  %1525 = vst.msk [vmem:[%s5 + $0x170] sm:$0xff] %vm1478, %v1460
  %1526 = vst.msk [vmem:[%s5 + $0x178] sm:$0xff] %vm1478, %v1461
  %1527 = vst.msk [vmem:[%s5 + $0x180] sm:$0xff] %vm1478, %v1462
  %1528 = vst.msk [vmem:[%s5 + $0x188] sm:$0xff] %vm1478, %v1463
  %1529 = vst.msk [vmem:[%s5 + $0x190] sm:$0xff] %vm1478, %v1464
  %1530 = vst.msk [vmem:[%s5 + $0x198] sm:$0xff] %vm1478, %v1465
  %1531 = vst.msk [vmem:[%s5 + $0x1a0] sm:$0xff] %vm1478, %v1466
  %1532 = vst.msk [vmem:[%s5 + $0x1a8] sm:$0xff] %vm1478, %v1467
  %1533 = vst.msk [vmem:[%s5 + $0x1b0] sm:$0xff] %vm1478, %v1468
  %1534 = vst.msk [vmem:[%s5 + $0x1b8] sm:$0xff] %vm1478, %v1469
  %1535 = vst.msk [vmem:[%s5 + $0x1c0] sm:$0xff] %vm1478, %v1470
  %1536 = vst.msk [vmem:[%s5 + $0x1c8] sm:$0xff] %vm1478, %v1471
  %1537 = vst.msk [vmem:[%s5 + $0x1d0] sm:$0xff] %vm1478, %v1472
  %1538 = vst.msk [vmem:[%s5 + $0x1d8] sm:$0xff] %vm1478, %v1473
  %1539 = vst.msk [vmem:[%s5 + $0x1e0] sm:$0xff] %vm1478, %v1474
  %1540 = vst.msk [vmem:[%s5 + $0x1e8] sm:$0xff] %vm1478, %v1475
  %1541 = vst.msk [vmem:[%s5 + $0x1f0] sm:$0xff] %vm1478, %v1476
  %1542 = vst.msk [vmem:[%s5 + $0x1f8] sm:$0xff] %vm1478, %v1477
  // Predicated region
  $region22: #{de_conv_forward.5} parent=0 // pred_check
    _
  $region23: #{de_conv_forward.5} parent=0 // pred_check_branch
    %1544 = sbr.rel (0) target = $region25
  $region24: #{de_conv_forward.5} parent=0 // pred_region
    _
  $region25: #{de_conv_forward.5} parent=0 // pred_fallthru
    _
  // Predicated region
  $region26: #{de_conv_forward.5} parent=0 // pred_check
    _
  $region27: #{de_conv_forward.5} parent=0 // pred_check_branch
    %1546 = sbr.rel (0) target = $region29
  $region28: #{de_conv_forward.5} parent=0 // pred_region
    _
  $region29: #{de_conv_forward.5} parent=0 // pred_fallthru
    _

</llo_original>
